<compile_context>
chip_gen: v7x
topology: tpu7x:2x2x1
jax: 0.10.0
libtpu: 0.0.40
codegen_flags: <defaults>
</compile_context>

<pallas_src>
import math
import functools

import jax
import jax.numpy as jnp
import numpy as np
from jax import lax
from jax.experimental import pallas as pl
from jax.experimental.pallas import tpu as pltpu

LN_EPS = 1e-5
NEG_INF = -1e30   # finite "minus infinity" (avoids -inf - -inf = NaN in online softmax)


# ---------------------------------------------------------------------------
# small shared helpers
# ---------------------------------------------------------------------------
def _layernorm(x, g, b):
    mean = jnp.mean(x, axis=-1, keepdims=True)
    var = jnp.mean(jnp.square(x - mean), axis=-1, keepdims=True)     # biased var (PyTorch LN)
    return (x - mean) * lax.rsqrt(var + LN_EPS) * g + b


def _gelu_tanh(x):
    # exact PyTorch F.gelu(approximate='tanh') formula (computed in f32)
    c = math.sqrt(2.0 / math.pi)
    return 0.5 * x * (1.0 + jnp.tanh(c * (x + 0.044715 * x * x * x)))


def _row_tile(n, target=512):
    """Row tiles may be ragged (grid uses cdiv); keep a multiple of 8 when tiling."""
    return n if n <= target else target


def _pick_div_tile(full, target, align):
    """Largest tile <= target that divides `full` and is a multiple of `align`
    (falls back to `full` -- e.g. tiny demo shapes)."""
    if full <= target:
        return full
    t = (target // align) * align
    while t >= align:
        if full % t == 0:
            return t
        t -= align
    return full


def _vmem_budget():
    """Generation-aware usable-VMEM budget (leave headroom below physical capacity)."""
    try:
        cap = int(pltpu.get_tpu_info().vmem_capacity_bytes)
    except Exception:
        cap = 64 << 20            # conservative fallback (v7x-sized)
    return max(min(cap - (8 << 20), 110 << 20), 16 << 20)


def _cparams(dims, block_bytes, scratch_bytes=0):
    """dimension_semantics for every grid axis + a VMEM limit sized from the
    double-buffered block bytes, capped by the generation-aware budget."""
    need = 2 * block_bytes + scratch_bytes + (2 << 20)
    return pltpu.CompilerParams(
        dimension_semantics=dims,
        vmem_limit_bytes=int(min(max(need, 8 << 20), _vmem_budget())),
    )


# ---------------------------------------------------------------------------
# Kernel 1: fused (residual add) + LayerNorm1 + QKV projection
#   grid = (B, row_tiles, 3, H); weight stored as (3, H, D, hd) bf16 so each step
#   streams only a (D, hd) block; LN output cached (bf16) in VMEM scratch across the
#   3*H column steps; QKV emitted head-major as (3, B, H, S, hd).
# ---------------------------------------------------------------------------
def _preattn_kernel(hs_ref, res_ref, g_ref, b_ref, w_ref, bq_ref,
                    qkv_ref, resout_ref, y_scr):
    c = pl.program_id(2)
    h = pl.program_id(3)

    @pl.when((c == 0) & (h == 0))
    def _():
        x = hs_ref[0].astype(jnp.float32) + res_ref[0].astype(jnp.float32)
        resout_ref[0] = x.astype(resout_ref.dtype)
        y_scr[...] = _layernorm(x, g_ref[...].astype(jnp.float32),
                                b_ref[...].astype(jnp.float32)).astype(y_scr.dtype)

    out = jnp.dot(y_scr[...], w_ref[0, 0],
                  preferred_element_type=jnp.float32) + bq_ref[0, 0].astype(jnp.float32)
    qkv_ref[0, 0, 0] = out.astype(qkv_ref.dtype)


def _preattn_first_kernel(hs_ref, g_ref, b_ref, w_ref, bq_ref,
                          qkv_ref, resout_ref, y_scr):
    # layer 0: residual is None -> residual = hidden (skip the pointless add)
    c = pl.program_id(2)
    h = pl.program_id(3)

    @pl.when((c == 0) & (h == 0))
    def _():
        x = hs_ref[0].astype(jnp.float32)
        resout_ref[0] = x.astype(resout_ref.dtype)
        y_scr[...] = _layernorm(x, g_ref[...].astype(jnp.float32),
                                b_ref[...].astype(jnp.float32)).astype(y_scr.dtype)

    out = jnp.dot(y_scr[...], w_ref[0, 0],
                  preferred_element_type=jnp.float32) + bq_ref[0, 0].astype(jnp.float32)
    qkv_ref[0, 0, 0] = out.astype(qkv_ref.dtype)


def pre_attention(hidden, residual, ln_g, ln_b, wqkv, bqkv):
    """hidden/residual: (B, S, D) f32; wqkv: (3, H, D, hd) bf16; bqkv: (3, H, 1, hd) f32.
    Returns (qkv (3, B, H, S, hd) bf16, new_residual (B, S, D) f32)."""
    B, S, D = hidden.shape
    _, H, _, hd = wqkv.shape
    tq = _pick_div_tile(S, 256, 8)
    grid = (B, S // tq, 3, H)

    row_spec = pl.BlockSpec((1, tq, D), lambda b, i, c, h: (b, i, 0))
    vec_spec = pl.BlockSpec((1, D), lambda b, i, c, h: (0, 0))
    w_spec = pl.BlockSpec((1, 1, D, hd), lambda b, i, c, h: (c, h, 0, 0))
    bq_spec = pl.BlockSpec((1, 1, 1, hd), lambda b, i, c, h: (c, h, 0, 0))
    qkv_spec = pl.BlockSpec((1, 1, 1, tq, hd), lambda b, i, c, h: (c, b, h, i, 0))

    out_shape = (jax.ShapeDtypeStruct((3, B, H, S, hd), jnp.bfloat16),
                 jax.ShapeDtypeStruct((B, S, D), jnp.float32))
    scratch = [pltpu.VMEM((tq, D), jnp.bfloat16)]
    block_bytes = (4 * 2 * tq * D            # hidden + residual blocks (f32)
                   + 4 * 2 * D               # ln gamma/beta
                   + 2 * (D * hd + hd)       # weight + bias block (bf16-ish)
                   + 2 * tq * hd             # qkv out block
                   + 4 * tq * D)             # residual out block
    cparams = _cparams(("parallel", "parallel", "arbitrary", "arbitrary"),
                       block_bytes, 2 * tq * D)

    g2, b2 = ln_g.reshape(1, D), ln_b.reshape(1, D)

    if residual is None:
        return pl.pallas_call(
            _preattn_first_kernel,
            grid=grid,
            in_specs=[row_spec, vec_spec, vec_spec, w_spec, bq_spec],
            out_specs=(qkv_spec, row_spec),
            out_shape=out_shape,
            scratch_shapes=scratch,
            compiler_params=cparams,
        )(hidden, g2, b2, wqkv, bqkv)

    return pl.pallas_call(
        _preattn_kernel,
        grid=grid,
        in_specs=[row_spec, row_spec, vec_spec, vec_spec, w_spec, bq_spec],
        out_specs=(qkv_spec, row_spec),
        out_shape=out_shape,
        scratch_shapes=scratch,
        input_output_aliases={1: 1},      # residual-in buffer reused for residual-out
        compiler_params=cparams,
    )(hidden, residual, g2, b2, wqkv, bqkv)


# ---------------------------------------------------------------------------
# Kernel 2: flash-style causal MHA (head as grid axis) + per-head output projection
#            accumulation + residual add + LayerNorm2 (fused epilogue)
#   grid = (B, q_tiles, H, kv_tiles); kv+head innermost "arbitrary"; m/l/ctx per head
#   and the (tq, D) projection accumulator live in VMEM scratch.  KV index_maps are
#   clamped so causally-skipped tiles cost no DMA.
# ---------------------------------------------------------------------------
def _attn_kernel(q_ref, k_ref, v_ref, res_ref, wout_ref, bout_ref, g_ref, b_ref,
                 y_ref, res2_ref, m_scr, l_scr, ctx_scr, out_scr,
                 *, sm_scale, tq, tk):
    qi = pl.program_id(1)
    h = pl.program_id(2)
    ki = pl.program_id(3)
    nh = pl.num_programs(2)
    nk = pl.num_programs(3)

    @pl.when((h == 0) & (ki == 0))
    def _():
        out_scr[...] = jnp.zeros_like(out_scr)

    @pl.when(ki == 0)
    def _():
        m_scr[...] = jnp.full_like(m_scr, NEG_INF)
        l_scr[...] = jnp.zeros_like(l_scr)
        ctx_scr[...] = jnp.zeros_like(ctx_scr)

    # causal block skip: kv tiles entirely above the diagonal contribute nothing.
    @pl.when(ki * tk <= qi * tq + (tq - 1))
    def _():
        q = q_ref[0, 0, 0]                           # (tq, hd) bf16
        k = k_ref[0, 0, 0]                           # (tk, hd) bf16
        v = v_ref[0, 0, 0]                           # (tk, hd) bf16
        # scores via dot_general contracting head dims directly (no k.T relayout)
        s = lax.dot_general(q, k, (((1,), (1,)), ((), ())),
                            preferred_element_type=jnp.float32) * sm_scale
        q_pos = qi * tq + lax.broadcasted_iota(jnp.int32, (tq, tk), 0)
        k_pos = ki * tk + lax.broadcasted_iota(jnp.int32, (tq, tk), 1)
        s = jnp.where(k_pos <= q_pos, s, NEG_INF)
        m_prev = m_scr[...]
        m_new = jnp.maximum(m_prev, jnp.max(s, axis=-1, keepdims=True))
        alpha = jnp.exp(m_prev - m_new)
        p = jnp.exp(s - m_new)
        l_scr[...] = alpha * l_scr[...] + jnp.sum(p, axis=-1, keepdims=True)
        ctx_scr[...] = alpha * ctx_scr[...] + jnp.dot(
            p.astype(v.dtype), v, preferred_element_type=jnp.float32)
        m_scr[...] = m_new

    @pl.when(ki == nk - 1)
    def _():
        # per-head normalize (EUP reciprocal) + (tq, hd) @ (hd, D) output-proj accumulate
        inv_l = pl.reciprocal(l_scr[...], approx=True)
        ctx = (ctx_scr[...] * inv_l).astype(wout_ref.dtype)
        out_scr[...] += jnp.dot(ctx, wout_ref[0], preferred_element_type=jnp.float32)

    @pl.when((h == nh - 1) & (ki == nk - 1))
    def _():
        o = out_scr[...] + bout_ref[...].astype(jnp.float32) \
            + res_ref[0].astype(jnp.float32)                       # fused residual add
        res2_ref[0] = o.astype(res2_ref.dtype)
        y_ref[0] = _layernorm(o, g_ref[...].astype(jnp.float32),   # fused LN2
                              b_ref[...].astype(jnp.float32)).astype(y_ref.dtype)


def attention_block(qkv, res1, wout, bout, ln2_g, ln2_b):
    """qkv: (3, B, H, S, hd) bf16; res1: (B, S, D) f32; wout: (H, hd, D) bf16.
    Returns (LN2(attn_out + res1) bf16, attn_out + res1 f32), both (B, S, D)."""
    _, B, H, S, hd = qkv.shape
    D = H * hd
    # tiles that divide S exactly (so no garbage kv padding ever enters the softmax)
    tq = _pick_div_tile(S, 128, 8)
    tk = tq
    nq, nk = S // tq, S // tk

    kernel = functools.partial(_attn_kernel, sm_scale=1.0 / math.sqrt(hd), tq=tq, tk=tk)

    qspec = pl.BlockSpec((1, 1, 1, tq, hd), lambda b, qi, h, ki: (0, b, h, qi, 0))
    # clamp kv index: causally-skipped tiles alias the already-resident diagonal block
    kspec = pl.BlockSpec((1, 1, 1, tk, hd),
                         lambda b, qi, h, ki: (1, b, h, jnp.minimum(ki, qi), 0))
    vspec = pl.BlockSpec((1, 1, 1, tk, hd),
                         lambda b, qi, h, ki: (2, b, h, jnp.minimum(ki, qi), 0))
    rspec = pl.BlockSpec((1, tq, D), lambda b, qi, h, ki: (b, qi, 0))
    wspec = pl.BlockSpec((1, hd, D), lambda b, qi, h, ki: (h, 0, 0))
    vecspec = pl.BlockSpec((1, D), lambda b, qi, h, ki: (0, 0))
    ospec = pl.BlockSpec((1, tq, D), lambda b, qi, h, ki: (b, qi, 0))

    block_bytes = (2 * 3 * tq * hd + 4 * tq * D + 2 * hd * D + 4 * 3 * D
                   + 2 * tq * D + 4 * tq * D)
    scratch_bytes = 4 * tq * (2 + hd + D)

    y, res2 = pl.pallas_call(
        kernel,
        grid=(B, nq, H, nk),
        in_specs=[qspec, kspec, vspec, rspec, wspec, vecspec, vecspec, vecspec],
        out_specs=(ospec, ospec),
        out_shape=(jax.ShapeDtypeStruct((B, S, D), jnp.bfloat16),   # LN2 output
                   jax.ShapeDtypeStruct((B, S, D), jnp.float32)),   # new residual
        scratch_shapes=[pltpu.VMEM((tq, 1), jnp.float32),    # m
                        pltpu.VMEM((tq, 1), jnp.float32),    # l
                        pltpu.VMEM((tq, hd), jnp.float32),   # per-head ctx accumulator
                        pltpu.VMEM((tq, D), jnp.float32)],   # output-proj accumulator
        input_output_aliases={3: 1},   # res1 buffer reused for res2
        compiler_params=_cparams(("parallel", "parallel", "arbitrary", "arbitrary"),
                                 block_bytes, scratch_bytes),
    )(qkv, qkv, qkv, res1, wout, bout.reshape(1, D),
      ln2_g.reshape(1, D), ln2_b.reshape(1, D))
    return y, res2


# ---------------------------------------------------------------------------
# Kernel 3: MLP = fc2(gelu_tanh(fc1(x))), tiled over rows and over d_inner (H)
#   bf16 matmul operands, f32 accumulator in VMEM.
# ---------------------------------------------------------------------------
def _mlp_kernel(x_ref, w1_ref, b1_ref, w2_ref, b2_ref, o_ref, acc_ref):
    hstep = pl.program_id(1)

    @pl.when(hstep == 0)
    def _():
        acc_ref[...] = jnp.zeros_like(acc_ref)

    t = jnp.dot(x_ref[...], w1_ref[...],
                preferred_element_type=jnp.float32) + b1_ref[...].astype(jnp.float32)
    t = _gelu_tanh(t).astype(w2_ref.dtype)     # GELU in f32, bf16 operand for fc2
    acc_ref[...] += jnp.dot(t, w2_ref[...], preferred_element_type=jnp.float32)

    @pl.when(hstep == pl.num_programs(1) - 1)
    def _():
        o_ref[...] = (acc_ref[...] + b2_ref[...].astype(jnp.float32)).astype(o_ref.dtype)


def mlp(x, w1, b1, w2, b2):
    """x: (N, D) bf16; w1: (D, Hi) bf16; w2: (Hi, D) bf16.  Returns (N, D) f32."""
    N, D = x.shape
    Hi = w1.shape[1]
    tn = _row_tile(N, 512)
    th = _pick_div_tile(Hi, 512, 128)
    grid = (pl.cdiv(N, tn), Hi // th)

    block_bytes = 2 * tn * D + 2 * D * th + 4 * th + 2 * th * D + 4 * D + 4 * tn * D
    return pl.pallas_call(
        _mlp_kernel,
        grid=grid,
        in_specs=[
            pl.BlockSpec((tn, D), lambda i, h: (i, 0)),
            pl.BlockSpec((D, th), lambda i, h: (0, h)),
            pl.BlockSpec((1, th), lambda i, h: (0, h)),
            pl.BlockSpec((th, D), lambda i, h: (h, 0)),
            pl.BlockSpec((1, D), lambda i, h: (0, 0)),
        ],
        out_specs=pl.BlockSpec((tn, D), lambda i, h: (i, 0)),
        out_shape=jax.ShapeDtypeStruct((N, D), jnp.float32),
        scratch_shapes=[pltpu.VMEM((tn, D), jnp.float32)],
        compiler_params=_cparams(("parallel", "arbitrary"), block_bytes, 4 * tn * D),
    )(x, w1, b1.reshape(1, Hi), w2, b2.reshape(1, D))


# ---------------------------------------------------------------------------
# Kernel 4: final residual add + ln_f (row-tiled, f32)
# ---------------------------------------------------------------------------
def _add_ln_kernel(hs_ref, res_ref, g_ref, b_ref, out_ref):
    x = hs_ref[...].astype(jnp.float32) + res_ref[...].astype(jnp.float32)
    out_ref[...] = _layernorm(x, g_ref[...].astype(jnp.float32),
                              b_ref[...].astype(jnp.float32)).astype(out_ref.dtype)


def add_layernorm(hs, res, gamma, beta):
    N, D = hs.shape
    tn = _row_tile(N, 512)
    block_bytes = 4 * (3 * tn * D + 2 * D)
    return pl.pallas_call(
        _add_ln_kernel,
        grid=(pl.cdiv(N, tn),),
        in_specs=[
            pl.BlockSpec((tn, D), lambda i: (i, 0)),
            pl.BlockSpec((tn, D), lambda i: (i, 0)),
            pl.BlockSpec((1, D), lambda i: (0, 0)),
            pl.BlockSpec((1, D), lambda i: (0, 0)),
        ],
        out_specs=pl.BlockSpec((tn, D), lambda i: (i, 0)),
        out_shape=jax.ShapeDtypeStruct((N, D), jnp.float32),
        compiler_params=_cparams(("parallel",), block_bytes),
    )(hs, res, gamma.reshape(1, D), beta.reshape(1, D))


# ---------------------------------------------------------------------------
# Parameter init (mirrors _init_weights: Linear/Embedding ~ N(0, 0.02), biases 0,
# out_proj.weight / fc2.weight ~ N(0, 0.02/sqrt(2*n_layer)), LayerNorm = (1, 0)).
# Matmul weights are stored bf16 in kernel-friendly layouts:
#   wqkv (3, H, D, hd)  [head-major output dim]   wout (H, hd, D)   w1 (D, Hi)   w2 (Hi, D)
# ---------------------------------------------------------------------------
def init_params(key, d_model, n_layer, d_inner, vocab_size, num_heads):
    std = 0.02
    out_std = std / math.sqrt(2 * n_layer)
    hd = d_model // num_heads
    keys = jax.random.split(key, 1 + n_layer)
    params = {
        "wte": jax.random.normal(keys[0], (vocab_size, d_model), jnp.float32) * std,
        "lnf_g": jnp.ones((d_model,), jnp.float32),
        "lnf_b": jnp.zeros((d_model,), jnp.float32),
        "layers": [],
    }
    for i in range(n_layer):
        lk = jax.random.split(keys[1 + i], 4)
        wqkv = jax.random.normal(lk[0], (3, d_model, d_model), jnp.float32) * std
        wout = jax.random.normal(lk[1], (d_model, d_model), jnp.float32) * out_std
        w1 = jax.random.normal(lk[2], (d_model, d_inner), jnp.float32) * std
        w2 = jax.random.normal(lk[3], (d_inner, d_model), jnp.float32) * out_std
        params["layers"].append(dict(
            ln1_g=jnp.ones((d_model,), jnp.float32), ln1_b=jnp.zeros((d_model,), jnp.float32),
            ln2_g=jnp.ones((d_model,), jnp.float32), ln2_b=jnp.zeros((d_model,), jnp.float32),
            wqkv=wqkv.reshape(3, d_model, num_heads, hd)
                     .transpose(0, 2, 1, 3).astype(jnp.bfloat16),       # (3, H, D, hd)
            bqkv=jnp.zeros((3, num_heads, 1, hd), jnp.float32),
            wout=wout.reshape(num_heads, hd, d_model).astype(jnp.bfloat16),  # (H, hd, D)
            bout=jnp.zeros((d_model,), jnp.float32),
            w1=w1.astype(jnp.bfloat16), b1=jnp.zeros((d_inner,), jnp.float32),
            w2=w2.astype(jnp.bfloat16), b2=jnp.zeros((d_model,), jnp.float32),
        ))
    return params


# ---------------------------------------------------------------------------
# LMBackbone forward (Pallas version)
# ---------------------------------------------------------------------------
def lm_backbone_forward(params, input_ids):
    B, S = input_ids.shape
    D = params["wte"].shape[1]
    # embedding gather is glue (data-dependent gather); done in plain JAX
    hidden = params["wte"][input_ids]                       # (B, S, D) f32
    residual = None
    # TODO(synk): dropout layers (embed_dropout / resid_dropout / drop_f) are identity (eval mode).
    for lyr in params["layers"]:
        qkv, residual = pre_attention(hidden, residual,
                                      lyr["ln1_g"], lyr["ln1_b"],
                                      lyr["wqkv"], lyr["bqkv"])
        y, residual = attention_block(qkv, residual, lyr["wout"], lyr["bout"],
                                      lyr["ln2_g"], lyr["ln2_b"])
        hidden = mlp(y.reshape(B * S, D),
                     lyr["w1"], lyr["b1"], lyr["w2"], lyr["b2"]).reshape(B, S, D)
    out = add_layernorm(hidden.reshape(B * S, D), residual.reshape(B * S, D),
                        params["lnf_g"], params["lnf_b"])
    return out.reshape(B, S, D)


# ---------------------------------------------------------------------------
# Pure-JAX reference (same math, f32 everywhere with the same bf16-rounded weights)
# ---------------------------------------------------------------------------
def _ref_ln(x, g, b):
    m = jnp.mean(x, axis=-1, keepdims=True)
    v = jnp.mean((x - m) ** 2, axis=-1, keepdims=True)
    return (x - m) / jnp.sqrt(v + LN_EPS) * g + b


def _ref_mha(x, wqkv, bqkv, wout, bout, num_heads):
    B, S, D = x.shape
    hd = D // num_heads
    q = (x @ wqkv[0] + bqkv[0]).reshape(B, S, num_heads, hd)
    k = (x @ wqkv[1] + bqkv[1]).reshape(B, S, num_heads, hd)
    v = (x @ wqkv[2] + bqkv[2]).reshape(B, S, num_heads, hd)
    s = jnp.einsum("bqhd,bkhd->bhqk", q, k) / math.sqrt(hd)
    mask = jnp.tril(jnp.ones((S, S), bool))
    s = jnp.where(mask, s, -jnp.inf)
    p = jax.nn.softmax(s, axis=-1)
    ctx = jnp.einsum("bhqk,bkhd->bqhd", p, v).reshape(B, S, D)
    return ctx @ wout + bout


def reference_forward(params, input_ids, num_heads):
    hidden = params["wte"][input_ids]
    residual = None
    for lyr in params["layers"]:
        _, H, D, hd = lyr["wqkv"].shape
        wqkv = lyr["wqkv"].astype(jnp.float32).transpose(0, 2, 1, 3).reshape(3, D, H * hd)
        bqkv = lyr["bqkv"].astype(jnp.float32).reshape(3, H * hd)
        wout = lyr["wout"].astype(jnp.float32).reshape(H * hd, D)
        w1 = lyr["w1"].astype(jnp.float32)
        w2 = lyr["w2"].astype(jnp.float32)
        residual = hidden if residual is None else hidden + residual
        x = _ref_ln(residual, lyr["ln1_g"], lyr["ln1_b"])
        attn = _ref_mha(x, wqkv, bqkv, wout, lyr["bout"], num_heads)
        residual = attn + residual
        x = _ref_ln(residual, lyr["ln2_g"], lyr["ln2_b"])
        h = _gelu_tanh(x @ w1 + lyr["b1"])
        hidden = h @ w2 + lyr["b2"]
    residual = hidden + residual
    return _ref_ln(residual, params["lnf_g"], params["lnf_b"])


if __name__ == "__main__":
    d_model, n_layer, d_inner, vocab_size, num_heads = 32, 2, 64, 64, 4
    B, S = 2, 8

    key = jax.random.PRNGKey(0)
    pkey, ikey = jax.random.split(key)
    params = init_params(pkey, d_model, n_layer, d_inner, vocab_size, num_heads)
    input_ids = jax.random.randint(ikey, (B, S), 0, vocab_size, dtype=jnp.int32)

    fwd = jax.jit(lm_backbone_forward)
    out = jax.block_until_ready(fwd(params, input_ids))

    ref = reference_forward(params, input_ids, num_heads)
    assert out.shape == (B, S, d_model)
    # bf16 matmul operands (f32 accumulation) => compare with bf16-level tolerance
    assert np.allclose(np.asarray(out), np.asarray(ref), atol=3e-2, rtol=3e-2), \
        "Pallas output mismatch vs. reference"

    print("KERNEL_OK")
</pallas_src>

<mosaic_0001>
module attributes {stable_mosaic.version = 11 : i64} {
  func.func @_preattn_first_kernel(%arg0: i32, %arg1: i32, %arg2: i32, %arg3: i32, %arg4: memref<1x8x32xf32, #tpu.memory_space<vmem>>, %arg5: memref<1x32xf32, #tpu.memory_space<vmem>>, %arg6: memref<1x32xf32, #tpu.memory_space<vmem>>, %arg7: memref<1x1x32x8xbf16, #tpu.memory_space<vmem>>, %arg8: memref<1x1x1x8xf32, #tpu.memory_space<vmem>>, %arg9: memref<1x1x1x8x8xbf16, #tpu.memory_space<vmem>>, %arg10: memref<1x8x32xf32, #tpu.memory_space<vmem>>, %arg11: memref<8x32xbf16, #tpu.memory_space<vmem>>) attributes {dimension_semantics = [#tpu.dimension_semantics<parallel>, #tpu.dimension_semantics<parallel>, #tpu.dimension_semantics<arbitrary>, #tpu.dimension_semantics<arbitrary>], iteration_bounds = array<i64: 2, 1, 3, 4>, scalar_prefetch = 0 : i64, scratch_operands = 1 : i64, tpu.core_type = #tpu.core_type<tc>, window_params = [{transform_indices = @transform_0, window_bounds = array<i64: 1, 8, 32>}, {pipeline_mode = #tpu.pipeline_mode<synchronous>, transform_indices = @transform_1, window_bounds = array<i64: 1, 32>}, {pipeline_mode = #tpu.pipeline_mode<synchronous>, transform_indices = @transform_2, window_bounds = array<i64: 1, 32>}, {transform_indices = @transform_3, window_bounds = array<i64: 1, 1, 32, 8>}, {transform_indices = @transform_4, window_bounds = array<i64: 1, 1, 1, 8>}, {transform_indices = @transform_5, window_bounds = array<i64: 1, 1, 1, 8, 8>}, {transform_indices = @transform_6, window_bounds = array<i64: 1, 8, 32>}]} {
    %c0_i32 = arith.constant 0 : i32
    %0 = arith.cmpi eq, %arg2, %c0_i32 : i32
    %c0_i32_0 = arith.constant 0 : i32
    %1 = arith.cmpi eq, %arg3, %c0_i32_0 : i32
    %2 = arith.andi %0, %1 : i1
    %3 = arith.extui %2 : i1 to i32
    %c0_i32_1 = arith.constant 0 : i32
    %4 = arith.cmpi ne, %3, %c0_i32_1 : i32
    scf.if %4 {
      %c0_16 = arith.constant 0 : index
      %c0_17 = arith.constant 0 : index
      %c0_18 = arith.constant 0 : index
      %17 = vector.load %arg4[%c0_16, %c0_17, %c0_18] : memref<1x8x32xf32, #tpu.memory_space<vmem>>, vector<1x8x32xf32>
      %18 = vector.shape_cast %17 : vector<1x8x32xf32> to vector<8x32xf32>
      %c0_19 = arith.constant 0 : index
      %c0_20 = arith.constant 0 : index
      %c0_21 = arith.constant 0 : index
      %19 = vector.load %arg10[%c0_19, %c0_20, %c0_21] : memref<1x8x32xf32, #tpu.memory_space<vmem>>, vector<1x8x32xf32>
      %20 = vector.shape_cast %19 : vector<1x8x32xf32> to vector<8x32xf32>
      %21 = vector.shape_cast %18 : vector<8x32xf32> to vector<1x8x32xf32>
      tpu.vector_store %arg10[%c0_19, %c0_20, %c0_21], %21 {strides = array<i32>} : memref<1x8x32xf32, #tpu.memory_space<vmem>>, vector<1x8x32xf32>,
      %c0_22 = arith.constant 0 : index
      %c0_23 = arith.constant 0 : index
      %22 = vector.load %arg5[%c0_22, %c0_23] : memref<1x32xf32, #tpu.memory_space<vmem>>, vector<1x32xf32>
      %c0_24 = arith.constant 0 : index
      %c0_25 = arith.constant 0 : index
      %23 = vector.load %arg6[%c0_24, %c0_25] : memref<1x32xf32, #tpu.memory_space<vmem>>, vector<1x32xf32>
      %cst_26 = arith.constant dense<0.000000e+00> : vector<8xf32>
      %24 = vector.multi_reduction <add>, %18, %cst_26 [1] : vector<8x32xf32> to vector<8xf32>
      %25 = vector.shape_cast %24 : vector<8xf32> to vector<8x1xf32>
      %cst_27 = arith.constant 3.200000e+01 : f32
      %26 = vector.broadcast %cst_27 : f32 to vector<8x1xf32>
      %27 = arith.divf %25, %26 : vector<8x1xf32>
      %28 = vector.broadcast %27 : vector<8x1xf32> to vector<8x32xf32>
      %29 = arith.subf %18, %28 : vector<8x32xf32>
      %30 = arith.mulf %29, %29 : vector<8x32xf32>
      %cst_28 = arith.constant dense<0.000000e+00> : vector<8xf32>
      %31 = vector.multi_reduction <add>, %30, %cst_28 [1] : vector<8x32xf32> to vector<8xf32>
      %32 = vector.shape_cast %31 : vector<8xf32> to vector<8x1xf32>
      %cst_29 = arith.constant 3.200000e+01 : f32
      %33 = vector.broadcast %cst_29 : f32 to vector<8x1xf32>
      %34 = arith.divf %32, %33 : vector<8x1xf32>
      %35 = vector.broadcast %27 : vector<8x1xf32> to vector<8x32xf32>
      %36 = arith.subf %18, %35 : vector<8x32xf32>
      %cst_30 = arith.constant 9.99999974E-6 : f32
      %37 = vector.broadcast %cst_30 : f32 to vector<8x1xf32>
      %38 = arith.addf %34, %37 : vector<8x1xf32>
      %39 = math.rsqrt %38 : vector<8x1xf32>
      %40 = vector.broadcast %39 : vector<8x1xf32> to vector<8x32xf32>
      %41 = arith.mulf %36, %40 : vector<8x32xf32>
      %42 = vector.broadcast %22 : vector<1x32xf32> to vector<8x32xf32>
      %43 = arith.mulf %41, %42 : vector<8x32xf32>
      %44 = vector.broadcast %23 : vector<1x32xf32> to vector<8x32xf32>
      %45 = arith.addf %43, %44 : vector<8x32xf32>
      %46 = arith.truncf %45 : vector<8x32xf32> to vector<8x32xbf16>
      %c0_31 = arith.constant 0 : index
      %c0_32 = arith.constant 0 : index
      %47 = vector.load %arg11[%c0_31, %c0_32] : memref<8x32xbf16, #tpu.memory_space<vmem>>, vector<8x32xbf16>
      tpu.vector_store %arg11[%c0_31, %c0_32], %46 {strides = array<i32>} : memref<8x32xbf16, #tpu.memory_space<vmem>>, vector<8x32xbf16>,
    } else {
    }
    %c0 = arith.constant 0 : index
    %c0_2 = arith.constant 0 : index
    %5 = vector.load %arg11[%c0, %c0_2] : memref<8x32xbf16, #tpu.memory_space<vmem>>, vector<8x32xbf16>
    %c0_3 = arith.constant 0 : index
    %c0_4 = arith.constant 0 : index
    %c0_5 = arith.constant 0 : index
    %c0_6 = arith.constant 0 : index
    %6 = vector.load %arg7[%c0_3, %c0_4, %c0_5, %c0_6] : memref<1x1x32x8xbf16, #tpu.memory_space<vmem>>, vector<1x1x32x8xbf16>
    %7 = vector.shape_cast %6 : vector<1x1x32x8xbf16> to vector<32x8xbf16>
    %cst = arith.constant dense<0.000000e+00> : vector<8x8xf32>
    %8 = tpu.matmul %5, %7, %cst {dimension_numbers = #tpu.dot_dimension_numbers<[1], [0], [0], [1], [0, 0, 1, 1], [], []>} : vector<8x32xbf16>, vector<32x8xbf16>, vector<8x8xf32> -> vector<8x8xf32>
    %c0_7 = arith.constant 0 : index
    %c0_8 = arith.constant 0 : index
    %c0_9 = arith.constant 0 : index
    %c0_10 = arith.constant 0 : index
    %9 = vector.load %arg8[%c0_7, %c0_8, %c0_9, %c0_10] : memref<1x1x1x8xf32, #tpu.memory_space<vmem>>, vector<1x1x1x8xf32>
    %10 = vector.shape_cast %9 : vector<1x1x1x8xf32> to vector<1x8xf32>
    %11 = vector.broadcast %10 : vector<1x8xf32> to vector<8x8xf32>
    %12 = arith.addf %8, %11 : vector<8x8xf32>
    %13 = arith.truncf %12 : vector<8x8xf32> to vector<8x8xbf16>
    %c0_11 = arith.constant 0 : index
    %c0_12 = arith.constant 0 : index
    %c0_13 = arith.constant 0 : index
    %c0_14 = arith.constant 0 : index
    %c0_15 = arith.constant 0 : index
    %14 = vector.load %arg9[%c0_11, %c0_12, %c0_13, %c0_14, %c0_15] : memref<1x1x1x8x8xbf16, #tpu.memory_space<vmem>>, vector<1x1x1x8x8xbf16>
    %15 = vector.shape_cast %14 : vector<1x1x1x8x8xbf16> to vector<8x8xbf16>
    %16 = vector.shape_cast %13 : vector<8x8xbf16> to vector<1x1x1x8x8xbf16>
    tpu.vector_store %arg9[%c0_11, %c0_12, %c0_13, %c0_14, %c0_15], %16 {strides = array<i32>} : memref<1x1x1x8x8xbf16, #tpu.memory_space<vmem>>, vector<1x1x1x8x8xbf16>,
    return
  }
  func.func @transform_0(%arg0: i32, %arg1: i32, %arg2: i32, %arg3: i32) -> (i32, i32, i32) {
    %c0_i32 = arith.constant 0 : i32
    %c0_i32_0 = arith.constant 0 : i32
    return %arg0, %arg1, %c0_i32 : i32, i32, i32
  }
  func.func @transform_1(%arg0: i32, %arg1: i32, %arg2: i32, %arg3: i32) -> (i32, i32) {
    %c0_i32 = arith.constant 0 : i32
    %c0_i32_0 = arith.constant 0 : i32
    %c0_i32_1 = arith.constant 0 : i32
    return %c0_i32, %c0_i32_0 : i32, i32
  }
  func.func @transform_2(%arg0: i32, %arg1: i32, %arg2: i32, %arg3: i32) -> (i32, i32) {
    %c0_i32 = arith.constant 0 : i32
    %c0_i32_0 = arith.constant 0 : i32
    %c0_i32_1 = arith.constant 0 : i32
    return %c0_i32, %c0_i32_0 : i32, i32
  }
  func.func @transform_3(%arg0: i32, %arg1: i32, %arg2: i32, %arg3: i32) -> (i32, i32, i32, i32) {
    %c0_i32 = arith.constant 0 : i32
    %c0_i32_0 = arith.constant 0 : i32
    %c0_i32_1 = arith.constant 0 : i32
    return %arg2, %arg3, %c0_i32, %c0_i32_0 : i32, i32, i32, i32
  }
  func.func @transform_4(%arg0: i32, %arg1: i32, %arg2: i32, %arg3: i32) -> (i32, i32, i32, i32) {
    %c0_i32 = arith.constant 0 : i32
    %c0_i32_0 = arith.constant 0 : i32
    %c0_i32_1 = arith.constant 0 : i32
    return %arg2, %arg3, %c0_i32, %c0_i32_0 : i32, i32, i32, i32
  }
  func.func @transform_5(%arg0: i32, %arg1: i32, %arg2: i32, %arg3: i32) -> (i32, i32, i32, i32, i32) {
    %c0_i32 = arith.constant 0 : i32
    %c0_i32_0 = arith.constant 0 : i32
    return %arg2, %arg0, %arg3, %arg1, %c0_i32 : i32, i32, i32, i32, i32
  }
  func.func @transform_6(%arg0: i32, %arg1: i32, %arg2: i32, %arg3: i32) -> (i32, i32, i32) {
    %c0_i32 = arith.constant 0 : i32
    %c0_i32_0 = arith.constant 0 : i32
    return %arg0, %arg1, %c0_i32 : i32, i32, i32
  }
}

module attributes {stable_mosaic.version = 11 : i64} {
  func.func @_attn_kernel(%arg0: i32, %arg1: i32, %arg2: i32, %arg3: i32, %arg4: memref<1x1x1x8x8xbf16, #tpu.memory_space<vmem>>, %arg5: memref<1x1x1x8x8xbf16, #tpu.memory_space<vmem>>, %arg6: memref<1x1x1x8x8xbf16, #tpu.memory_space<vmem>>, %arg7: memref<1x8x32xf32, #tpu.memory_space<vmem>>, %arg8: memref<1x8x32xbf16, #tpu.memory_space<vmem>>, %arg9: memref<1x32xf32, #tpu.memory_space<vmem>>, %arg10: memref<1x32xf32, #tpu.memory_space<vmem>>, %arg11: memref<1x32xf32, #tpu.memory_space<vmem>>, %arg12: memref<1x8x32xbf16, #tpu.memory_space<vmem>>, %arg13: memref<1x8x32xf32, #tpu.memory_space<vmem>>, %arg14: memref<8x1xf32, #tpu.memory_space<vmem>>, %arg15: memref<8x1xf32, #tpu.memory_space<vmem>>, %arg16: memref<8x8xf32, #tpu.memory_space<vmem>>, %arg17: memref<8x32xf32, #tpu.memory_space<vmem>>) attributes {dimension_semantics = [#tpu.dimension_semantics<parallel>, #tpu.dimension_semantics<parallel>, #tpu.dimension_semantics<arbitrary>, #tpu.dimension_semantics<arbitrary>], iteration_bounds = array<i64: 2, 1, 4, 1>, scalar_prefetch = 0 : i64, scratch_operands = 4 : i64, tpu.core_type = #tpu.core_type<tc>, window_params = [{transform_indices = @transform_0, window_bounds = array<i64: 1, 1, 1, 8, 8>}, {transform_indices = @transform_1, window_bounds = array<i64: 1, 1, 1, 8, 8>}, {transform_indices = @transform_2, window_bounds = array<i64: 1, 1, 1, 8, 8>}, {transform_indices = @transform_3, window_bounds = array<i64: 1, 8, 32>}, {transform_indices = @transform_4, window_bounds = array<i64: 1, 8, 32>}, {pipeline_mode = #tpu.pipeline_mode<synchronous>, transform_indices = @transform_5, window_bounds = array<i64: 1, 32>}, {pipeline_mode = #tpu.pipeline_mode<synchronous>, transform_indices = @transform_6, window_bounds = array<i64: 1, 32>}, {pipeline_mode = #tpu.pipeline_mode<synchronous>, transform_indices = @transform_7, window_bounds = array<i64: 1, 32>}, {transform_indices = @transform_8, window_bounds = array<i64: 1, 8, 32>}, {transform_indices = @transform_9, window_bounds = array<i64: 1, 8, 32>}]} {
    %c0_i32 = arith.constant 0 : i32
    %0 = arith.cmpi eq, %arg2, %c0_i32 : i32
    %c0_i32_0 = arith.constant 0 : i32
    %1 = arith.cmpi eq, %arg3, %c0_i32_0 : i32
    %2 = arith.andi %0, %1 : i1
    %3 = arith.extui %2 : i1 to i32
    %c0_i32_1 = arith.constant 0 : i32
    %4 = arith.cmpi ne, %3, %c0_i32_1 : i32
    scf.if %4 {
      %cst = arith.constant 0.000000e+00 : f32
      %22 = vector.broadcast %cst : f32 to vector<8x32xf32>
      %c0 = arith.constant 0 : index
      %c0_10 = arith.constant 0 : index
      %23 = vector.load %arg17[%c0, %c0_10] : memref<8x32xf32, #tpu.memory_space<vmem>>, vector<8x32xf32>
      tpu.vector_store %arg17[%c0, %c0_10], %22 {strides = array<i32>} : memref<8x32xf32, #tpu.memory_space<vmem>>, vector<8x32xf32>,
    } else {
    }
    %c0_i32_2 = arith.constant 0 : i32
    %5 = arith.cmpi eq, %arg3, %c0_i32_2 : i32
    %6 = arith.extui %5 : i1 to i32
    %c0_i32_3 = arith.constant 0 : i32
    %7 = arith.cmpi ne, %6, %c0_i32_3 : i32
    scf.if %7 {
      %cst = arith.constant -1.000000e+30 : f32
      %22 = vector.broadcast %cst : f32 to vector<8x1xf32>
      %c0 = arith.constant 0 : index
      %c0_10 = arith.constant 0 : index
      %23 = vector.load %arg14[%c0, %c0_10] : memref<8x1xf32, #tpu.memory_space<vmem>>, vector<8x1xf32>
      tpu.vector_store %arg14[%c0, %c0_10], %22 {strides = array<i32>} : memref<8x1xf32, #tpu.memory_space<vmem>>, vector<8x1xf32>,
      %cst_11 = arith.constant 0.000000e+00 : f32
      %24 = vector.broadcast %cst_11 : f32 to vector<8x1xf32>
      %c0_12 = arith.constant 0 : index
      %c0_13 = arith.constant 0 : index
      %25 = vector.load %arg15[%c0_12, %c0_13] : memref<8x1xf32, #tpu.memory_space<vmem>>, vector<8x1xf32>
      tpu.vector_store %arg15[%c0_12, %c0_13], %24 {strides = array<i32>} : memref<8x1xf32, #tpu.memory_space<vmem>>, vector<8x1xf32>,
      %cst_14 = arith.constant 0.000000e+00 : f32
      %26 = vector.broadcast %cst_14 : f32 to vector<8x8xf32>
      %c0_15 = arith.constant 0 : index
      %c0_16 = arith.constant 0 : index
      %27 = vector.load %arg16[%c0_15, %c0_16] : memref<8x8xf32, #tpu.memory_space<vmem>>, vector<8x8xf32>
      tpu.vector_store %arg16[%c0_15, %c0_16], %26 {strides = array<i32>} : memref<8x8xf32, #tpu.memory_space<vmem>>, vector<8x8xf32>,
    } else {
    }
    %c8_i32 = arith.constant 8 : i32
    %8 = arith.muli %arg3, %c8_i32 : i32
    %c8_i32_4 = arith.constant 8 : i32
    %9 = arith.muli %arg1, %c8_i32_4 : i32
    %c7_i32 = arith.constant 7 : i32
    %10 = arith.addi %9, %c7_i32 : i32
    %11 = arith.cmpi sle, %8, %10 : i32
    %12 = arith.extui %11 : i1 to i32
    %c0_i32_5 = arith.constant 0 : i32
    %13 = arith.cmpi ne, %12, %c0_i32_5 : i32
    scf.if %13 {
      %c0 = arith.constant 0 : index
      %c0_10 = arith.constant 0 : index
      %c0_11 = arith.constant 0 : index
      %c0_12 = arith.constant 0 : index
      %c0_13 = arith.constant 0 : index
      %22 = vector.load %arg4[%c0, %c0_10, %c0_11, %c0_12, %c0_13] : memref<1x1x1x8x8xbf16, #tpu.memory_space<vmem>>, vector<1x1x1x8x8xbf16>
      %23 = vector.shape_cast %22 : vector<1x1x1x8x8xbf16> to vector<8x8xbf16>
      %c0_14 = arith.constant 0 : index
      %c0_15 = arith.constant 0 : index
      %c0_16 = arith.constant 0 : index
      %c0_17 = arith.constant 0 : index
      %c0_18 = arith.constant 0 : index
      %24 = vector.load %arg5[%c0_14, %c0_15, %c0_16, %c0_17, %c0_18] : memref<1x1x1x8x8xbf16, #tpu.memory_space<vmem>>, vector<1x1x1x8x8xbf16>
      %25 = vector.shape_cast %24 : vector<1x1x1x8x8xbf16> to vector<8x8xbf16>
      %c0_19 = arith.constant 0 : index
      %c0_20 = arith.constant 0 : index
      %c0_21 = arith.constant 0 : index
      %c0_22 = arith.constant 0 : index
      %c0_23 = arith.constant 0 : index
      %26 = vector.load %arg6[%c0_19, %c0_20, %c0_21, %c0_22, %c0_23] : memref<1x1x1x8x8xbf16, #tpu.memory_space<vmem>>, vector<1x1x1x8x8xbf16>
      %27 = vector.shape_cast %26 : vector<1x1x1x8x8xbf16> to vector<8x8xbf16>
      %cst = arith.constant dense<0.000000e+00> : vector<8x8xf32>
      %28 = tpu.matmul %23, %25, %cst {dimension_numbers = #tpu.dot_dimension_numbers<[1], [1], [0], [0], [0, 0, 1, 0], [], []>} : vector<8x8xbf16>, vector<8x8xbf16>, vector<8x8xf32> -> vector<8x8xf32>
      %cst_24 = arith.constant 0.353553385 : f32
      %29 = vector.broadcast %cst_24 : f32 to vector<8x8xf32>
      %30 = arith.mulf %28, %29 : vector<8x8xf32>
      %c8_i32_25 = arith.constant 8 : i32
      %31 = arith.muli %arg1, %c8_i32_25 : i32
      %32 = tpu.iota {dimensions = array<i32: 0>} : vector<8x8xi32>
      %33 = vector.broadcast %31 : i32 to vector<8x8xi32>
      %34 = arith.addi %33, %32 : vector<8x8xi32>
      %c8_i32_26 = arith.constant 8 : i32
      %35 = arith.muli %arg3, %c8_i32_26 : i32
      %36 = tpu.iota {dimensions = array<i32: 1>} : vector<8x8xi32>
      %37 = vector.broadcast %35 : i32 to vector<8x8xi32>
      %38 = arith.addi %37, %36 : vector<8x8xi32>
      %39 = arith.cmpi sle, %38, %34 : vector<8x8xi32>
      %cst_27 = arith.constant -1.000000e+30 : f32
      %40 = vector.broadcast %cst_27 : f32 to vector<8x8xf32>
      %41 = arith.select %39, %30, %40 : vector<8x8xi1>, vector<8x8xf32>
      %c0_28 = arith.constant 0 : index
      %c0_29 = arith.constant 0 : index
      %42 = vector.load %arg14[%c0_28, %c0_29] : memref<8x1xf32, #tpu.memory_space<vmem>>, vector<8x1xf32>
      %cst_30 = arith.constant dense<0xFF800000> : vector<8xf32>
      %43 = vector.multi_reduction <maximumf>, %41, %cst_30 [1] : vector<8x8xf32> to vector<8xf32>
      %44 = vector.shape_cast %43 : vector<8xf32> to vector<8x1xf32>
      %45 = arith.maximumf %42, %44 : vector<8x1xf32>
      %46 = arith.subf %42, %45 : vector<8x1xf32>
      %47 = math.exp %46 : vector<8x1xf32>
      %48 = vector.broadcast %45 : vector<8x1xf32> to vector<8x8xf32>
      %49 = arith.subf %41, %48 : vector<8x8xf32>
      %50 = math.exp %49 : vector<8x8xf32>
      %c0_31 = arith.constant 0 : index
      %c0_32 = arith.constant 0 : index
      %51 = vector.load %arg15[%c0_31, %c0_32] : memref<8x1xf32, #tpu.memory_space<vmem>>, vector<8x1xf32>
      %52 = arith.mulf %47, %51 : vector<8x1xf32>
      %cst_33 = arith.constant dense<0.000000e+00> : vector<8xf32>
      %53 = vector.multi_reduction <add>, %50, %cst_33 [1] : vector<8x8xf32> to vector<8xf32>
      %54 = vector.shape_cast %53 : vector<8xf32> to vector<8x1xf32>
      %55 = arith.addf %52, %54 : vector<8x1xf32>
      %c0_34 = arith.constant 0 : index
      %c0_35 = arith.constant 0 : index
      %56 = vector.load %arg15[%c0_34, %c0_35] : memref<8x1xf32, #tpu.memory_space<vmem>>, vector<8x1xf32>
      tpu.vector_store %arg15[%c0_34, %c0_35], %55 {strides = array<i32>} : memref<8x1xf32, #tpu.memory_space<vmem>>, vector<8x1xf32>,
      %c0_36 = arith.constant 0 : index
      %c0_37 = arith.constant 0 : index
      %57 = vector.load %arg16[%c0_36, %c0_37] : memref<8x8xf32, #tpu.memory_space<vmem>>, vector<8x8xf32>
      %58 = vector.broadcast %47 : vector<8x1xf32> to vector<8x8xf32>
      %59 = arith.mulf %58, %57 : vector<8x8xf32>
      %60 = arith.truncf %50 : vector<8x8xf32> to vector<8x8xbf16>
      %cst_38 = arith.constant dense<0.000000e+00> : vector<8x8xf32>
      %61 = tpu.matmul %60, %27, %cst_38 {dimension_numbers = #tpu.dot_dimension_numbers<[1], [0], [0], [1], [0, 0, 1, 1], [], []>} : vector<8x8xbf16>, vector<8x8xbf16>, vector<8x8xf32> -> vector<8x8xf32>
      %62 = arith.addf %59, %61 : vector<8x8xf32>
      %c0_39 = arith.constant 0 : index
      %c0_40 = arith.constant 0 : index
      %63 = vector.load %arg16[%c0_39, %c0_40] : memref<8x8xf32, #tpu.memory_space<vmem>>, vector<8x8xf32>
      tpu.vector_store %arg16[%c0_39, %c0_40], %62 {strides = array<i32>} : memref<8x8xf32, #tpu.memory_space<vmem>>, vector<8x8xf32>,
      %c0_41 = arith.constant 0 : index
      %c0_42 = arith.constant 0 : index
      %64 = vector.load %arg14[%c0_41, %c0_42] : memref<8x1xf32, #tpu.memory_space<vmem>>, vector<8x1xf32>
      tpu.vector_store %arg14[%c0_41, %c0_42], %45 {strides = array<i32>} : memref<8x1xf32, #tpu.memory_space<vmem>>, vector<8x1xf32>,
    } else {
    }
    %c0_i32_6 = arith.constant 0 : i32
    %14 = arith.cmpi eq, %arg3, %c0_i32_6 : i32
    %15 = arith.extui %14 : i1 to i32
    %c0_i32_7 = arith.constant 0 : i32
    %16 = arith.cmpi ne, %15, %c0_i32_7 : i32
    scf.if %16 {
      %c0 = arith.constant 0 : index
      %c0_10 = arith.constant 0 : index
      %22 = vector.load %arg15[%c0, %c0_10] : memref<8x1xf32, #tpu.memory_space<vmem>>, vector<8x1xf32>
      %23 = tpu.reciprocal %22 {approx = true} : vector<8x1xf32> -> vector<8x1xf32>
      %c0_11 = arith.constant 0 : index
      %c0_12 = arith.constant 0 : index
      %24 = vector.load %arg16[%c0_11, %c0_12] : memref<8x8xf32, #tpu.memory_space<vmem>>, vector<8x8xf32>
      %25 = vector.broadcast %23 : vector<8x1xf32> to vector<8x8xf32>
      %26 = arith.mulf %24, %25 : vector<8x8xf32>
      %27 = arith.truncf %26 : vector<8x8xf32> to vector<8x8xbf16>
      %c0_13 = arith.constant 0 : index
      %c0_14 = arith.constant 0 : index
      %28 = vector.load %arg17[%c0_13, %c0_14] : memref<8x32xf32, #tpu.memory_space<vmem>>, vector<8x32xf32>
      %c0_15 = arith.constant 0 : index
      %c0_16 = arith.constant 0 : index
      %c0_17 = arith.constant 0 : index
      %29 = vector.load %arg8[%c0_15, %c0_16, %c0_17] : memref<1x8x32xbf16, #tpu.memory_space<vmem>>, vector<1x8x32xbf16>
      %30 = vector.shape_cast %29 : vector<1x8x32xbf16> to vector<8x32xbf16>
      %cst = arith.constant dense<0.000000e+00> : vector<8x32xf32>
      %31 = tpu.matmul %27, %30, %cst {dimension_numbers = #tpu.dot_dimension_numbers<[1], [0], [0], [1], [0, 0, 1, 1], [], []>} : vector<8x8xbf16>, vector<8x32xbf16>, vector<8x32xf32> -> vector<8x32xf32>
      %32 = arith.addf %28, %31 : vector<8x32xf32>
      %c0_18 = arith.constant 0 : index
      %c0_19 = arith.constant 0 : index
      %33 = vector.load %arg17[%c0_18, %c0_19] : memref<8x32xf32, #tpu.memory_space<vmem>>, vector<8x32xf32>
      tpu.vector_store %arg17[%c0_18, %c0_19], %32 {strides = array<i32>} : memref<8x32xf32, #tpu.memory_space<vmem>>, vector<8x32xf32>,
    } else {
    }
    %c3_i32 = arith.constant 3 : i32
    %17 = arith.cmpi eq, %arg2, %c3_i32 : i32
    %c0_i32_8 = arith.constant 0 : i32
    %18 = arith.cmpi eq, %arg3, %c0_i32_8 : i32
    %19 = arith.andi %17, %18 : i1
    %20 = arith.extui %19 : i1 to i32
    %c0_i32_9 = arith.constant 0 : i32
    %21 = arith.cmpi ne, %20, %c0_i32_9 : i32
    scf.if %21 {
      %c0 = arith.constant 0 : index
      %c0_10 = arith.constant 0 : index
      %22 = vector.load %arg17[%c0, %c0_10] : memref<8x32xf32, #tpu.memory_space<vmem>>, vector<8x32xf32>
      %c0_11 = arith.constant 0 : index
      %c0_12 = arith.constant 0 : index
      %23 = vector.load %arg9[%c0_11, %c0_12] : memref<1x32xf32, #tpu.memory_space<vmem>>, vector<1x32xf32>
      %24 = vector.broadcast %23 : vector<1x32xf32> to vector<8x32xf32>
      %25 = arith.addf %22, %24 : vector<8x32xf32>
      %c0_13 = arith.constant 0 : index
      %c0_14 = arith.constant 0 : index
      %c0_15 = arith.constant 0 : index
      %26 = vector.load %arg7[%c0_13, %c0_14, %c0_15] : memref<1x8x32xf32, #tpu.memory_space<vmem>>, vector<1x8x32xf32>
      %27 = vector.shape_cast %26 : vector<1x8x32xf32> to vector<8x32xf32>
      %28 = arith.addf %25, %27 : vector<8x32xf32>
      %c0_16 = arith.constant 0 : index
      %c0_17 = arith.constant 0 : index
      %c0_18 = arith.constant 0 : index
      %29 = vector.load %arg13[%c0_16, %c0_17, %c0_18] : memref<1x8x32xf32, #tpu.memory_space<vmem>>, vector<1x8x32xf32>
      %30 = vector.shape_cast %29 : vector<1x8x32xf32> to vector<8x32xf32>
      %31 = vector.shape_cast %28 : vector<8x32xf32> to vector<1x8x32xf32>
      tpu.vector_store %arg13[%c0_16, %c0_17, %c0_18], %31 {strides = array<i32>} : memref<1x8x32xf32, #tpu.memory_space<vmem>>, vector<1x8x32xf32>,
      %c0_19 = arith.constant 0 : index
      %c0_20 = arith.constant 0 : index
      %32 = vector.load %arg10[%c0_19, %c0_20] : memref<1x32xf32, #tpu.memory_space<vmem>>, vector<1x32xf32>
      %c0_21 = arith.constant 0 : index
      %c0_22 = arith.constant 0 : index
      %33 = vector.load %arg11[%c0_21, %c0_22] : memref<1x32xf32, #tpu.memory_space<vmem>>, vector<1x32xf32>
      %cst = arith.constant dense<0.000000e+00> : vector<8xf32>
      %34 = vector.multi_reduction <add>, %28, %cst [1] : vector<8x32xf32> to vector<8xf32>
      %35 = vector.shape_cast %34 : vector<8xf32> to vector<8x1xf32>
      %cst_23 = arith.constant 3.200000e+01 : f32
      %36 = vector.broadcast %cst_23 : f32 to vector<8x1xf32>
      %37 = arith.divf %35, %36 : vector<8x1xf32>
      %38 = vector.broadcast %37 : vector<8x1xf32> to vector<8x32xf32>
      %39 = arith.subf %28, %38 : vector<8x32xf32>
      %40 = arith.mulf %39, %39 : vector<8x32xf32>
      %cst_24 = arith.constant dense<0.000000e+00> : vector<8xf32>
      %41 = vector.multi_reduction <add>, %40, %cst_24 [1] : vector<8x32xf32> to vector<8xf32>
      %42 = vector.shape_cast %41 : vector<8xf32> to vector<8x1xf32>
      %cst_25 = arith.constant 3.200000e+01 : f32
      %43 = vector.broadcast %cst_25 : f32 to vector<8x1xf32>
      %44 = arith.divf %42, %43 : vector<8x1xf32>
      %45 = vector.broadcast %37 : vector<8x1xf32> to vector<8x32xf32>
      %46 = arith.subf %28, %45 : vector<8x32xf32>
      %cst_26 = arith.constant 9.99999974E-6 : f32
      %47 = vector.broadcast %cst_26 : f32 to vector<8x1xf32>
      %48 = arith.addf %44, %47 : vector<8x1xf32>
      %49 = math.rsqrt %48 : vector<8x1xf32>
      %50 = vector.broadcast %49 : vector<8x1xf32> to vector<8x32xf32>
      %51 = arith.mulf %46, %50 : vector<8x32xf32>
      %52 = vector.broadcast %32 : vector<1x32xf32> to vector<8x32xf32>
      %53 = arith.mulf %51, %52 : vector<8x32xf32>
      %54 = vector.broadcast %33 : vector<1x32xf32> to vector<8x32xf32>
      %55 = arith.addf %53, %54 : vector<8x32xf32>
      %56 = arith.truncf %55 : vector<8x32xf32> to vector<8x32xbf16>
      %c0_27 = arith.constant 0 : index
      %c0_28 = arith.constant 0 : index
      %c0_29 = arith.constant 0 : index
      %57 = vector.load %arg12[%c0_27, %c0_28, %c0_29] : memref<1x8x32xbf16, #tpu.memory_space<vmem>>, vector<1x8x32xbf16>
      %58 = vector.shape_cast %57 : vector<1x8x32xbf16> to vector<8x32xbf16>
      %59 = vector.shape_cast %56 : vector<8x32xbf16> to vector<1x8x32xbf16>
      tpu.vector_store %arg12[%c0_27, %c0_28, %c0_29], %59 {strides = array<i32>} : memref<1x8x32xbf16, #tpu.memory_space<vmem>>, vector<1x8x32xbf16>,
    } else {
    }
    return
  }
  func.func @transform_0(%arg0: i32, %arg1: i32, %arg2: i32, %arg3: i32) -> (i32, i32, i32, i32, i32) {
    %c0_i32 = arith.constant 0 : i32
    %c0_i32_0 = arith.constant 0 : i32
    %c0_i32_1 = arith.constant 0 : i32
    return %c0_i32, %arg0, %arg2, %arg1, %c0_i32_0 : i32, i32, i32, i32, i32
  }
  func.func @transform_1(%arg0: i32, %arg1: i32, %arg2: i32, %arg3: i32) -> (i32, i32, i32, i32, i32) {
    %0 = arith.minsi %arg3, %arg1 : i32
    %c1_i32 = arith.constant 1 : i32
    %c0_i32 = arith.constant 0 : i32
    %c0_i32_0 = arith.constant 0 : i32
    return %c1_i32, %arg0, %arg2, %0, %c0_i32 : i32, i32, i32, i32, i32
  }
  func.func @transform_2(%arg0: i32, %arg1: i32, %arg2: i32, %arg3: i32) -> (i32, i32, i32, i32, i32) {
    %0 = arith.minsi %arg3, %arg1 : i32
    %c2_i32 = arith.constant 2 : i32
    %c0_i32 = arith.constant 0 : i32
    %c0_i32_0 = arith.constant 0 : i32
    return %c2_i32, %arg0, %arg2, %0, %c0_i32 : i32, i32, i32, i32, i32
  }
  func.func @transform_3(%arg0: i32, %arg1: i32, %arg2: i32, %arg3: i32) -> (i32, i32, i32) {
    %c0_i32 = arith.constant 0 : i32
    %c0_i32_0 = arith.constant 0 : i32
    return %arg0, %arg1, %c0_i32 : i32, i32, i32
  }
  func.func @transform_4(%arg0: i32, %arg1: i32, %arg2: i32, %arg3: i32) -> (i32, i32, i32) {
    %c0_i32 = arith.constant 0 : i32
    %c0_i32_0 = arith.constant 0 : i32
    %c0_i32_1 = arith.constant 0 : i32
    return %arg2, %c0_i32, %c0_i32_0 : i32, i32, i32
  }
  func.func @transform_5(%arg0: i32, %arg1: i32, %arg2: i32, %arg3: i32) -> (i32, i32) {
    %c0_i32 = arith.constant 0 : i32
    %c0_i32_0 = arith.constant 0 : i32
    %c0_i32_1 = arith.constant 0 : i32
    return %c0_i32, %c0_i32_0 : i32, i32
  }
  func.func @transform_6(%arg0: i32, %arg1: i32, %arg2: i32, %arg3: i32) -> (i32, i32) {
    %c0_i32 = arith.constant 0 : i32
    %c0_i32_0 = arith.constant 0 : i32
    %c0_i32_1 = arith.constant 0 : i32
    return %c0_i32, %c0_i32_0 : i32, i32
  }
  func.func @transform_7(%arg0: i32, %arg1: i32, %arg2: i32, %arg3: i32) -> (i32, i32) {
    %c0_i32 = arith.constant 0 : i32
    %c0_i32_0 = arith.constant 0 : i32
    %c0_i32_1 = arith.constant 0 : i32
    return %c0_i32, %c0_i32_0 : i32, i32
  }
  func.func @transform_8(%arg0: i32, %arg1: i32, %arg2: i32, %arg3: i32) -> (i32, i32, i32) {
    %c0_i32 = arith.constant 0 : i32
    %c0_i32_0 = arith.constant 0 : i32
    return %arg0, %arg1, %c0_i32 : i32, i32, i32
  }
  func.func @transform_9(%arg0: i32, %arg1: i32, %arg2: i32, %arg3: i32) -> (i32, i32, i32) {
    %c0_i32 = arith.constant 0 : i32
    %c0_i32_0 = arith.constant 0 : i32
    return %arg0, %arg1, %c0_i32 : i32, i32, i32
  }
}

module attributes {stable_mosaic.version = 11 : i64} {
  func.func @_preattn_kernel(%arg0: i32, %arg1: i32, %arg2: i32, %arg3: i32, %arg4: memref<1x8x32xf32, #tpu.memory_space<vmem>>, %arg5: memref<1x8x32xf32, #tpu.memory_space<vmem>>, %arg6: memref<1x32xf32, #tpu.memory_space<vmem>>, %arg7: memref<1x32xf32, #tpu.memory_space<vmem>>, %arg8: memref<1x1x32x8xbf16, #tpu.memory_space<vmem>>, %arg9: memref<1x1x1x8xf32, #tpu.memory_space<vmem>>, %arg10: memref<1x1x1x8x8xbf16, #tpu.memory_space<vmem>>, %arg11: memref<1x8x32xf32, #tpu.memory_space<vmem>>, %arg12: memref<8x32xbf16, #tpu.memory_space<vmem>>) attributes {dimension_semantics = [#tpu.dimension_semantics<parallel>, #tpu.dimension_semantics<parallel>, #tpu.dimension_semantics<arbitrary>, #tpu.dimension_semantics<arbitrary>], iteration_bounds = array<i64: 2, 1, 3, 4>, scalar_prefetch = 0 : i64, scratch_operands = 1 : i64, tpu.core_type = #tpu.core_type<tc>, window_params = [{transform_indices = @transform_0, window_bounds = array<i64: 1, 8, 32>}, {transform_indices = @transform_1, window_bounds = array<i64: 1, 8, 32>}, {pipeline_mode = #tpu.pipeline_mode<synchronous>, transform_indices = @transform_2, window_bounds = array<i64: 1, 32>}, {pipeline_mode = #tpu.pipeline_mode<synchronous>, transform_indices = @transform_3, window_bounds = array<i64: 1, 32>}, {transform_indices = @transform_4, window_bounds = array<i64: 1, 1, 32, 8>}, {transform_indices = @transform_5, window_bounds = array<i64: 1, 1, 1, 8>}, {transform_indices = @transform_6, window_bounds = array<i64: 1, 1, 1, 8, 8>}, {transform_indices = @transform_7, window_bounds = array<i64: 1, 8, 32>}]} {
    %c0_i32 = arith.constant 0 : i32
    %0 = arith.cmpi eq, %arg2, %c0_i32 : i32
    %c0_i32_0 = arith.constant 0 : i32
    %1 = arith.cmpi eq, %arg3, %c0_i32_0 : i32
    %2 = arith.andi %0, %1 : i1
    %3 = arith.extui %2 : i1 to i32
    %c0_i32_1 = arith.constant 0 : i32
    %4 = arith.cmpi ne, %3, %c0_i32_1 : i32
    scf.if %4 {
      %c0_16 = arith.constant 0 : index
      %c0_17 = arith.constant 0 : index
      %c0_18 = arith.constant 0 : index
      %17 = vector.load %arg4[%c0_16, %c0_17, %c0_18] : memref<1x8x32xf32, #tpu.memory_space<vmem>>, vector<1x8x32xf32>
      %18 = vector.shape_cast %17 : vector<1x8x32xf32> to vector<8x32xf32>
      %c0_19 = arith.constant 0 : index
      %c0_20 = arith.constant 0 : index
      %c0_21 = arith.constant 0 : index
      %19 = vector.load %arg5[%c0_19, %c0_20, %c0_21] : memref<1x8x32xf32, #tpu.memory_space<vmem>>, vector<1x8x32xf32>
      %20 = vector.shape_cast %19 : vector<1x8x32xf32> to vector<8x32xf32>
      %21 = arith.addf %18, %20 : vector<8x32xf32>
      %c0_22 = arith.constant 0 : index
      %c0_23 = arith.constant 0 : index
      %c0_24 = arith.constant 0 : index
      %22 = vector.load %arg11[%c0_22, %c0_23, %c0_24] : memref<1x8x32xf32, #tpu.memory_space<vmem>>, vector<1x8x32xf32>
      %23 = vector.shape_cast %22 : vector<1x8x32xf32> to vector<8x32xf32>
      %24 = vector.shape_cast %21 : vector<8x32xf32> to vector<1x8x32xf32>
      tpu.vector_store %arg11[%c0_22, %c0_23, %c0_24], %24 {strides = array<i32>} : memref<1x8x32xf32, #tpu.memory_space<vmem>>, vector<1x8x32xf32>,
      %c0_25 = arith.constant 0 : index
      %c0_26 = arith.constant 0 : index
      %25 = vector.load %arg6[%c0_25, %c0_26] : memref<1x32xf32, #tpu.memory_space<vmem>>, vector<1x32xf32>
      %c0_27 = arith.constant 0 : index
      %c0_28 = arith.constant 0 : index
      %26 = vector.load %arg7[%c0_27, %c0_28] : memref<1x32xf32, #tpu.memory_space<vmem>>, vector<1x32xf32>
      %cst_29 = arith.constant dense<0.000000e+00> : vector<8xf32>
      %27 = vector.multi_reduction <add>, %21, %cst_29 [1] : vector<8x32xf32> to vector<8xf32>
      %28 = vector.shape_cast %27 : vector<8xf32> to vector<8x1xf32>
      %cst_30 = arith.constant 3.200000e+01 : f32
      %29 = vector.broadcast %cst_30 : f32 to vector<8x1xf32>
      %30 = arith.divf %28, %29 : vector<8x1xf32>
      %31 = vector.broadcast %30 : vector<8x1xf32> to vector<8x32xf32>
      %32 = arith.subf %21, %31 : vector<8x32xf32>
      %33 = arith.mulf %32, %32 : vector<8x32xf32>
      %cst_31 = arith.constant dense<0.000000e+00> : vector<8xf32>
      %34 = vector.multi_reduction <add>, %33, %cst_31 [1] : vector<8x32xf32> to vector<8xf32>
      %35 = vector.shape_cast %34 : vector<8xf32> to vector<8x1xf32>
      %cst_32 = arith.constant 3.200000e+01 : f32
      %36 = vector.broadcast %cst_32 : f32 to vector<8x1xf32>
      %37 = arith.divf %35, %36 : vector<8x1xf32>
      %38 = vector.broadcast %30 : vector<8x1xf32> to vector<8x32xf32>
      %39 = arith.subf %21, %38 : vector<8x32xf32>
      %cst_33 = arith.constant 9.99999974E-6 : f32
      %40 = vector.broadcast %cst_33 : f32 to vector<8x1xf32>
      %41 = arith.addf %37, %40 : vector<8x1xf32>
      %42 = math.rsqrt %41 : vector<8x1xf32>
      %43 = vector.broadcast %42 : vector<8x1xf32> to vector<8x32xf32>
      %44 = arith.mulf %39, %43 : vector<8x32xf32>
      %45 = vector.broadcast %25 : vector<1x32xf32> to vector<8x32xf32>
      %46 = arith.mulf %44, %45 : vector<8x32xf32>
      %47 = vector.broadcast %26 : vector<1x32xf32> to vector<8x32xf32>
      %48 = arith.addf %46, %47 : vector<8x32xf32>
      %49 = arith.truncf %48 : vector<8x32xf32> to vector<8x32xbf16>
      %c0_34 = arith.constant 0 : index
      %c0_35 = arith.constant 0 : index
      %50 = vector.load %arg12[%c0_34, %c0_35] : memref<8x32xbf16, #tpu.memory_space<vmem>>, vector<8x32xbf16>
      tpu.vector_store %arg12[%c0_34, %c0_35], %49 {strides = array<i32>} : memref<8x32xbf16, #tpu.memory_space<vmem>>, vector<8x32xbf16>,
    } else {
    }
    %c0 = arith.constant 0 : index
    %c0_2 = arith.constant 0 : index
    %5 = vector.load %arg12[%c0, %c0_2] : memref<8x32xbf16, #tpu.memory_space<vmem>>, vector<8x32xbf16>
    %c0_3 = arith.constant 0 : index
    %c0_4 = arith.constant 0 : index
    %c0_5 = arith.constant 0 : index
    %c0_6 = arith.constant 0 : index
    %6 = vector.load %arg8[%c0_3, %c0_4, %c0_5, %c0_6] : memref<1x1x32x8xbf16, #tpu.memory_space<vmem>>, vector<1x1x32x8xbf16>
    %7 = vector.shape_cast %6 : vector<1x1x32x8xbf16> to vector<32x8xbf16>
    %cst = arith.constant dense<0.000000e+00> : vector<8x8xf32>
    %8 = tpu.matmul %5, %7, %cst {dimension_numbers = #tpu.dot_dimension_numbers<[1], [0], [0], [1], [0, 0, 1, 1], [], []>} : vector<8x32xbf16>, vector<32x8xbf16>, vector<8x8xf32> -> vector<8x8xf32>
    %c0_7 = arith.constant 0 : index
    %c0_8 = arith.constant 0 : index
    %c0_9 = arith.constant 0 : index
    %c0_10 = arith.constant 0 : index
    %9 = vector.load %arg9[%c0_7, %c0_8, %c0_9, %c0_10] : memref<1x1x1x8xf32, #tpu.memory_space<vmem>>, vector<1x1x1x8xf32>
    %10 = vector.shape_cast %9 : vector<1x1x1x8xf32> to vector<1x8xf32>
    %11 = vector.broadcast %10 : vector<1x8xf32> to vector<8x8xf32>
    %12 = arith.addf %8, %11 : vector<8x8xf32>
    %13 = arith.truncf %12 : vector<8x8xf32> to vector<8x8xbf16>
    %c0_11 = arith.constant 0 : index
    %c0_12 = arith.constant 0 : index
    %c0_13 = arith.constant 0 : index
    %c0_14 = arith.constant 0 : index
    %c0_15 = arith.constant 0 : index
    %14 = vector.load %arg10[%c0_11, %c0_12, %c0_13, %c0_14, %c0_15] : memref<1x1x1x8x8xbf16, #tpu.memory_space<vmem>>, vector<1x1x1x8x8xbf16>
    %15 = vector.shape_cast %14 : vector<1x1x1x8x8xbf16> to vector<8x8xbf16>
    %16 = vector.shape_cast %13 : vector<8x8xbf16> to vector<1x1x1x8x8xbf16>
    tpu.vector_store %arg10[%c0_11, %c0_12, %c0_13, %c0_14, %c0_15], %16 {strides = array<i32>} : memref<1x1x1x8x8xbf16, #tpu.memory_space<vmem>>, vector<1x1x1x8x8xbf16>,
    return
  }
  func.func @transform_0(%arg0: i32, %arg1: i32, %arg2: i32, %arg3: i32) -> (i32, i32, i32) {
    %c0_i32 = arith.constant 0 : i32
    %c0_i32_0 = arith.constant 0 : i32
    return %arg0, %arg1, %c0_i32 : i32, i32, i32
  }
  func.func @transform_1(%arg0: i32, %arg1: i32, %arg2: i32, %arg3: i32) -> (i32, i32, i32) {
    %c0_i32 = arith.constant 0 : i32
    %c0_i32_0 = arith.constant 0 : i32
    return %arg0, %arg1, %c0_i32 : i32, i32, i32
  }
  func.func @transform_2(%arg0: i32, %arg1: i32, %arg2: i32, %arg3: i32) -> (i32, i32) {
    %c0_i32 = arith.constant 0 : i32
    %c0_i32_0 = arith.constant 0 : i32
    %c0_i32_1 = arith.constant 0 : i32
    return %c0_i32, %c0_i32_0 : i32, i32
  }
  func.func @transform_3(%arg0: i32, %arg1: i32, %arg2: i32, %arg3: i32) -> (i32, i32) {
    %c0_i32 = arith.constant 0 : i32
    %c0_i32_0 = arith.constant 0 : i32
    %c0_i32_1 = arith.constant 0 : i32
    return %c0_i32, %c0_i32_0 : i32, i32
  }
  func.func @transform_4(%arg0: i32, %arg1: i32, %arg2: i32, %arg3: i32) -> (i32, i32, i32, i32) {
    %c0_i32 = arith.constant 0 : i32
    %c0_i32_0 = arith.constant 0 : i32
    %c0_i32_1 = arith.constant 0 : i32
    return %arg2, %arg3, %c0_i32, %c0_i32_0 : i32, i32, i32, i32
  }
  func.func @transform_5(%arg0: i32, %arg1: i32, %arg2: i32, %arg3: i32) -> (i32, i32, i32, i32) {
    %c0_i32 = arith.constant 0 : i32
    %c0_i32_0 = arith.constant 0 : i32
    %c0_i32_1 = arith.constant 0 : i32
    return %arg2, %arg3, %c0_i32, %c0_i32_0 : i32, i32, i32, i32
  }
  func.func @transform_6(%arg0: i32, %arg1: i32, %arg2: i32, %arg3: i32) -> (i32, i32, i32, i32, i32) {
    %c0_i32 = arith.constant 0 : i32
    %c0_i32_0 = arith.constant 0 : i32
    return %arg2, %arg0, %arg3, %arg1, %c0_i32 : i32, i32, i32, i32, i32
  }
  func.func @transform_7(%arg0: i32, %arg1: i32, %arg2: i32, %arg3: i32) -> (i32, i32, i32) {
    %c0_i32 = arith.constant 0 : i32
    %c0_i32_0 = arith.constant 0 : i32
    return %arg0, %arg1, %c0_i32 : i32, i32, i32
  }
}

module attributes {stable_mosaic.version = 11 : i64} {
  func.func @_mlp_kernel(%arg0: i32, %arg1: i32, %arg2: memref<16x32xbf16, #tpu.memory_space<vmem>>, %arg3: memref<32x64xbf16, #tpu.memory_space<vmem>>, %arg4: memref<1x64xf32, #tpu.memory_space<vmem>>, %arg5: memref<64x32xbf16, #tpu.memory_space<vmem>>, %arg6: memref<1x32xf32, #tpu.memory_space<vmem>>, %arg7: memref<16x32xf32, #tpu.memory_space<vmem>>, %arg8: memref<16x32xf32, #tpu.memory_space<vmem>>) attributes {dimension_semantics = [#tpu.dimension_semantics<parallel>, #tpu.dimension_semantics<arbitrary>], iteration_bounds = array<i64: 1, 1>, scalar_prefetch = 0 : i64, scratch_operands = 1 : i64, tpu.core_type = #tpu.core_type<tc>, window_params = [{transform_indices = @transform_0, window_bounds = array<i64: 16, 32>}, {transform_indices = @transform_1, window_bounds = array<i64: 32, 64>}, {transform_indices = @transform_2, window_bounds = array<i64: 1, 64>}, {transform_indices = @transform_3, window_bounds = array<i64: 64, 32>}, {pipeline_mode = #tpu.pipeline_mode<synchronous>, transform_indices = @transform_4, window_bounds = array<i64: 1, 32>}, {transform_indices = @transform_5, window_bounds = array<i64: 16, 32>}]} {
    %c0_i32 = arith.constant 0 : i32
    %0 = arith.cmpi eq, %arg1, %c0_i32 : i32
    %1 = arith.extui %0 : i1 to i32
    %c0_i32_0 = arith.constant 0 : i32
    %2 = arith.cmpi ne, %1, %c0_i32_0 : i32
    scf.if %2 {
      %cst_19 = arith.constant 0.000000e+00 : f32
      %31 = vector.broadcast %cst_19 : f32 to vector<16x32xf32>
      %c0_20 = arith.constant 0 : index
      %c0_21 = arith.constant 0 : index
      %32 = vector.load %arg8[%c0_20, %c0_21] : memref<16x32xf32, #tpu.memory_space<vmem>>, vector<16x32xf32>
      tpu.vector_store %arg8[%c0_20, %c0_21], %31 {strides = array<i32>} : memref<16x32xf32, #tpu.memory_space<vmem>>, vector<16x32xf32>,
    } else {
    }
    %c0 = arith.constant 0 : index
    %c0_1 = arith.constant 0 : index
    %3 = vector.load %arg2[%c0, %c0_1] : memref<16x32xbf16, #tpu.memory_space<vmem>>, vector<16x32xbf16>
    %c0_2 = arith.constant 0 : index
    %c0_3 = arith.constant 0 : index
    %4 = vector.load %arg3[%c0_2, %c0_3] : memref<32x64xbf16, #tpu.memory_space<vmem>>, vector<32x64xbf16>
    %cst = arith.constant dense<0.000000e+00> : vector<16x64xf32>
    %5 = tpu.matmul %3, %4, %cst {dimension_numbers = #tpu.dot_dimension_numbers<[1], [0], [0], [1], [0, 0, 1, 1], [], []>} : vector<16x32xbf16>, vector<32x64xbf16>, vector<16x64xf32> -> vector<16x64xf32>
    %c0_4 = arith.constant 0 : index
    %c0_5 = arith.constant 0 : index
    %6 = vector.load %arg4[%c0_4, %c0_5] : memref<1x64xf32, #tpu.memory_space<vmem>>, vector<1x64xf32>
    %7 = vector.broadcast %6 : vector<1x64xf32> to vector<16x64xf32>
    %8 = arith.addf %5, %7 : vector<16x64xf32>
    %cst_6 = arith.constant 5.000000e-01 : f32
    %9 = vector.broadcast %cst_6 : f32 to vector<16x64xf32>
    %10 = arith.mulf %9, %8 : vector<16x64xf32>
    %cst_7 = arith.constant 4.471500e-02 : f32
    %11 = vector.broadcast %cst_7 : f32 to vector<16x64xf32>
    %12 = arith.mulf %11, %8 : vector<16x64xf32>
    %13 = arith.mulf %12, %8 : vector<16x64xf32>
    %14 = arith.mulf %13, %8 : vector<16x64xf32>
    %15 = arith.addf %8, %14 : vector<16x64xf32>
    %cst_8 = arith.constant 0.797884583 : f32
    %16 = vector.broadcast %cst_8 : f32 to vector<16x64xf32>
    %17 = arith.mulf %16, %15 : vector<16x64xf32>
    %18 = math.tanh %17 : vector<16x64xf32>
    %cst_9 = arith.constant 1.000000e+00 : f32
    %19 = vector.broadcast %cst_9 : f32 to vector<16x64xf32>
    %20 = arith.addf %19, %18 : vector<16x64xf32>
    %21 = arith.mulf %10, %20 : vector<16x64xf32>
    %22 = arith.truncf %21 : vector<16x64xf32> to vector<16x64xbf16>
    %c0_10 = arith.constant 0 : index
    %c0_11 = arith.constant 0 : index
    %23 = vector.load %arg8[%c0_10, %c0_11] : memref<16x32xf32, #tpu.memory_space<vmem>>, vector<16x32xf32>
    %c0_12 = arith.constant 0 : index
    %c0_13 = arith.constant 0 : index
    %24 = vector.load %arg5[%c0_12, %c0_13] : memref<64x32xbf16, #tpu.memory_space<vmem>>, vector<64x32xbf16>
    %cst_14 = arith.constant dense<0.000000e+00> : vector<16x32xf32>
    %25 = tpu.matmul %22, %24, %cst_14 {dimension_numbers = #tpu.dot_dimension_numbers<[1], [0], [0], [1], [0, 0, 1, 1], [], []>} : vector<16x64xbf16>, vector<64x32xbf16>, vector<16x32xf32> -> vector<16x32xf32>
    %26 = arith.addf %23, %25 : vector<16x32xf32>
    %c0_15 = arith.constant 0 : index
    %c0_16 = arith.constant 0 : index
    %27 = vector.load %arg8[%c0_15, %c0_16] : memref<16x32xf32, #tpu.memory_space<vmem>>, vector<16x32xf32>
    tpu.vector_store %arg8[%c0_15, %c0_16], %26 {strides = array<i32>} : memref<16x32xf32, #tpu.memory_space<vmem>>, vector<16x32xf32>,
    %c0_i32_17 = arith.constant 0 : i32
    %28 = arith.cmpi eq, %arg1, %c0_i32_17 : i32
    %29 = arith.extui %28 : i1 to i32
    %c0_i32_18 = arith.constant 0 : i32
    %30 = arith.cmpi ne, %29, %c0_i32_18 : i32
    scf.if %30 {
      %c0_19 = arith.constant 0 : index
      %c0_20 = arith.constant 0 : index
      %31 = vector.load %arg8[%c0_19, %c0_20] : memref<16x32xf32, #tpu.memory_space<vmem>>, vector<16x32xf32>
      %c0_21 = arith.constant 0 : index
      %c0_22 = arith.constant 0 : index
      %32 = vector.load %arg6[%c0_21, %c0_22] : memref<1x32xf32, #tpu.memory_space<vmem>>, vector<1x32xf32>
      %33 = vector.broadcast %32 : vector<1x32xf32> to vector<16x32xf32>
      %34 = arith.addf %31, %33 : vector<16x32xf32>
      %c0_23 = arith.constant 0 : index
      %c0_24 = arith.constant 0 : index
      %35 = vector.load %arg7[%c0_23, %c0_24] : memref<16x32xf32, #tpu.memory_space<vmem>>, vector<16x32xf32>
      tpu.vector_store %arg7[%c0_23, %c0_24], %34 {strides = array<i32>} : memref<16x32xf32, #tpu.memory_space<vmem>>, vector<16x32xf32>,
    } else {
    }
    return
  }
  func.func @transform_0(%arg0: i32, %arg1: i32) -> (i32, i32) {
    %c0_i32 = arith.constant 0 : i32
    %c0_i32_0 = arith.constant 0 : i32
    return %arg0, %c0_i32 : i32, i32
  }
  func.func @transform_1(%arg0: i32, %arg1: i32) -> (i32, i32) {
    %c0_i32 = arith.constant 0 : i32
    %c0_i32_0 = arith.constant 0 : i32
    return %c0_i32, %arg1 : i32, i32
  }
  func.func @transform_2(%arg0: i32, %arg1: i32) -> (i32, i32) {
    %c0_i32 = arith.constant 0 : i32
    %c0_i32_0 = arith.constant 0 : i32
    return %c0_i32, %arg1 : i32, i32
  }
  func.func @transform_3(%arg0: i32, %arg1: i32) -> (i32, i32) {
    %c0_i32 = arith.constant 0 : i32
    %c0_i32_0 = arith.constant 0 : i32
    return %arg1, %c0_i32 : i32, i32
  }
  func.func @transform_4(%arg0: i32, %arg1: i32) -> (i32, i32) {
    %c0_i32 = arith.constant 0 : i32
    %c0_i32_0 = arith.constant 0 : i32
    %c0_i32_1 = arith.constant 0 : i32
    return %c0_i32, %c0_i32_0 : i32, i32
  }
  func.func @transform_5(%arg0: i32, %arg1: i32) -> (i32, i32) {
    %c0_i32 = arith.constant 0 : i32
    %c0_i32_0 = arith.constant 0 : i32
    return %arg0, %c0_i32 : i32, i32
  }
}

module attributes {stable_mosaic.version = 11 : i64} {
  func.func @_add_ln_kernel(%arg0: i32, %arg1: memref<16x32xf32, #tpu.memory_space<vmem>>, %arg2: memref<16x32xf32, #tpu.memory_space<vmem>>, %arg3: memref<1x32xf32, #tpu.memory_space<vmem>>, %arg4: memref<1x32xf32, #tpu.memory_space<vmem>>, %arg5: memref<16x32xf32, #tpu.memory_space<vmem>>) attributes {dimension_semantics = [#tpu.dimension_semantics<parallel>], iteration_bounds = array<i64: 1>, scalar_prefetch = 0 : i64, scratch_operands = 0 : i64, tpu.core_type = #tpu.core_type<tc>, window_params = [{transform_indices = @transform_0, window_bounds = array<i64: 16, 32>}, {transform_indices = @transform_1, window_bounds = array<i64: 16, 32>}, {pipeline_mode = #tpu.pipeline_mode<synchronous>, transform_indices = @transform_2, window_bounds = array<i64: 1, 32>}, {pipeline_mode = #tpu.pipeline_mode<synchronous>, transform_indices = @transform_3, window_bounds = array<i64: 1, 32>}, {transform_indices = @transform_4, window_bounds = array<i64: 16, 32>}]} {
    %c0 = arith.constant 0 : index
    %c0_0 = arith.constant 0 : index
    %0 = vector.load %arg1[%c0, %c0_0] : memref<16x32xf32, #tpu.memory_space<vmem>>, vector<16x32xf32>
    %c0_1 = arith.constant 0 : index
    %c0_2 = arith.constant 0 : index
    %1 = vector.load %arg2[%c0_1, %c0_2] : memref<16x32xf32, #tpu.memory_space<vmem>>, vector<16x32xf32>
    %2 = arith.addf %0, %1 : vector<16x32xf32>
    %c0_3 = arith.constant 0 : index
    %c0_4 = arith.constant 0 : index
    %3 = vector.load %arg3[%c0_3, %c0_4] : memref<1x32xf32, #tpu.memory_space<vmem>>, vector<1x32xf32>
    %c0_5 = arith.constant 0 : index
    %c0_6 = arith.constant 0 : index
    %4 = vector.load %arg4[%c0_5, %c0_6] : memref<1x32xf32, #tpu.memory_space<vmem>>, vector<1x32xf32>
    %cst = arith.constant dense<0.000000e+00> : vector<16xf32>
    %5 = vector.multi_reduction <add>, %2, %cst [1] : vector<16x32xf32> to vector<16xf32>
    %6 = vector.shape_cast %5 : vector<16xf32> to vector<16x1xf32>
    %cst_7 = arith.constant 3.200000e+01 : f32
    %7 = vector.broadcast %cst_7 : f32 to vector<16x1xf32>
    %8 = arith.divf %6, %7 : vector<16x1xf32>
    %9 = vector.broadcast %8 : vector<16x1xf32> to vector<16x32xf32>
    %10 = arith.subf %2, %9 : vector<16x32xf32>
    %11 = arith.mulf %10, %10 : vector<16x32xf32>
    %cst_8 = arith.constant dense<0.000000e+00> : vector<16xf32>
    %12 = vector.multi_reduction <add>, %11, %cst_8 [1] : vector<16x32xf32> to vector<16xf32>
    %13 = vector.shape_cast %12 : vector<16xf32> to vector<16x1xf32>
    %cst_9 = arith.constant 3.200000e+01 : f32
    %14 = vector.broadcast %cst_9 : f32 to vector<16x1xf32>
    %15 = arith.divf %13, %14 : vector<16x1xf32>
    %16 = vector.broadcast %8 : vector<16x1xf32> to vector<16x32xf32>
    %17 = arith.subf %2, %16 : vector<16x32xf32>
    %cst_10 = arith.constant 9.99999974E-6 : f32
    %18 = vector.broadcast %cst_10 : f32 to vector<16x1xf32>
    %19 = arith.addf %15, %18 : vector<16x1xf32>
    %20 = math.rsqrt %19 : vector<16x1xf32>
    %21 = vector.broadcast %20 : vector<16x1xf32> to vector<16x32xf32>
    %22 = arith.mulf %17, %21 : vector<16x32xf32>
    %23 = vector.broadcast %3 : vector<1x32xf32> to vector<16x32xf32>
    %24 = arith.mulf %22, %23 : vector<16x32xf32>
    %25 = vector.broadcast %4 : vector<1x32xf32> to vector<16x32xf32>
    %26 = arith.addf %24, %25 : vector<16x32xf32>
    %c0_11 = arith.constant 0 : index
    %c0_12 = arith.constant 0 : index
    %27 = vector.load %arg5[%c0_11, %c0_12] : memref<16x32xf32, #tpu.memory_space<vmem>>, vector<16x32xf32>
    tpu.vector_store %arg5[%c0_11, %c0_12], %26 {strides = array<i32>} : memref<16x32xf32, #tpu.memory_space<vmem>>, vector<16x32xf32>,
    return
  }
  func.func @transform_0(%arg0: i32) -> (i32, i32) {
    %c0_i32 = arith.constant 0 : i32
    %c0_i32_0 = arith.constant 0 : i32
    return %arg0, %c0_i32 : i32, i32
  }
  func.func @transform_1(%arg0: i32) -> (i32, i32) {
    %c0_i32 = arith.constant 0 : i32
    %c0_i32_0 = arith.constant 0 : i32
    return %arg0, %c0_i32 : i32, i32
  }
  func.func @transform_2(%arg0: i32) -> (i32, i32) {
    %c0_i32 = arith.constant 0 : i32
    %c0_i32_0 = arith.constant 0 : i32
    %c0_i32_1 = arith.constant 0 : i32
    return %c0_i32, %c0_i32_0 : i32, i32
  }
  func.func @transform_3(%arg0: i32) -> (i32, i32) {
    %c0_i32 = arith.constant 0 : i32
    %c0_i32_0 = arith.constant 0 : i32
    %c0_i32_1 = arith.constant 0 : i32
    return %c0_i32, %c0_i32_0 : i32, i32
  }
  func.func @transform_4(%arg0: i32) -> (i32, i32) {
    %c0_i32 = arith.constant 0 : i32
    %c0_i32_0 = arith.constant 0 : i32
    return %arg0, %c0_i32 : i32, i32
  }
}

</mosaic_0001>

<llo_original>
// kernel: lm_backbone_forward.7
$region0: #{lm_backbone_forward.7}
  #allocation0 [shape = 'u32[]', space=smem, size = 0x4, offset = 0x4, fixed_abs, tag = 'smem constant byte address 0x4 - core index']
  #allocation1 [shape = 'u32[144,128]{1,0:T(1,128)}', space=vmem, size = 0x12000, scoped, tag = 'internal scratch']
  #allocation2 [shape = 'bf16[8,32]{1,0:T(8,128)(2,1)}', space=vmem, size = 0x800, scoped, tag = 'scratch operand']
  %s0 = inlined_call_operand.vmem [shape: f32[2,8,32], index: 0, kind: input, shape index: {}]
  %s1 = inlined_call_operand.vmem [shape: f32[1,32], index: 1, kind: input, shape index: {}]
  %s2 = inlined_call_operand.vmem [shape: f32[1,32], index: 2, kind: input, shape index: {}]
  %s3 = inlined_call_operand.vmem [shape: bf16[3,4,32,8], index: 3, kind: input, shape index: {}]
  %s4 = inlined_call_operand.vmem [shape: f32[3,4,1,8], index: 4, kind: input, shape index: {}]
  %s5 = inlined_call_operand.vmem [shape: bf16[3,2,4,8,8], index: 5, kind: output, shape index: {0}]
  %s6 = inlined_call_operand.vmem [shape: f32[2,8,32], index: 6, kind: output, shape index: {1}]
  %7 = xla_tuple %s5, %s6
  %s8 = sld [smem:[#allocation0]]
  $region65: #{lm_backbone_forward.7} parent=0
    _
  %s10 = ssub.s32 1, %s8
  %s11 = scalar_select 0, %s10, %s8
  loop: start=0, step=1, limit=26
  $region2: #{lm_backbone_forward.7} parent=0 // loop_pre_header
    _
  $region3: #{lm_backbone_forward.7} parent=0 // loop_header
    %s13 = sphi 0, %s17
    %p14 = scmp.ge.s32.totalorder %s13, 26
    %s20 = sphi 0, %s46
    %s21 = sphi 0, %s42
    %s22 = sphi 0, %s38
    %s23 = sphi 0, %s34
    %s24 = sphi 0, %s20
    %s25 = sphi 0, %s21
    %s26 = sphi 0, %s22
    %s27 = sphi 0, %s23
    %s28 = sphi 0, %s24
    %s29 = sphi 0, %s25
    %s30 = sphi 0, %s26
    %s31 = sphi 0, %s27
    %s51 = sphi 0, %s53
    %s54 = sphi 0, %s51
    %s55 = sphi 0, %s54
    %s71 = sphi 0, %s55
    %s75 = sphi 0, %s75
    %s77 = sphi 0, %s75
    %s78 = sphi 0, %s77
    %s92 = sphi 0, %s78
    %s96 = sphi 0, %s96
    %s98 = sphi 0, %s96
    %s99 = sphi 0, %s98
    %s113 = sphi 0, %s99
    %s121 = sphi 0, %s123
    %s124 = sphi 0, %s121
    %s125 = sphi 0, %s124
    %s141 = sphi 0, %s125
    %s149 = sphi 0, %s151
    %s152 = sphi 0, %s149
    %s153 = sphi 0, %s152
    %s169 = sphi 0, %s153
    %s181 = sphi 0, %s183
    %s184 = sphi 0, %s181
    %s185 = sphi 0, %s184
    %s201 = sphi 0, %s185
    %s209 = sphi 0, %s211
    %s212 = sphi 0, %s209
    %s213 = sphi 0, %s212
    %s229 = sphi 0, %s213
  $region4: #{lm_backbone_forward.7} parent=0 // loop_header_branch
    %16 = sbr.rel (%p14) target = $region8
  $region5: #{lm_backbone_forward.7} parent=0 // loop_body
    %s18 = ssub.s32 %s13, 1
    %s19 = ssub.s32 %s13, 2
    %s32 = sadd.s32 1, %s23
    %p33 = scmp.ge.s32.totalorder %s32, 4
    %s34 = scalar_select %p33, 0, %s32
    %s35 = sadd.s32 1, %s22
    %s36 = scalar_select %p33, %s35, %s22
    %p37 = scmp.ge.s32.totalorder %s36, 3
    %s38 = scalar_select %p37, 0, %s36
    %s39 = sadd.s32 1, %s21
    %s40 = scalar_select %p37, %s39, %s21
    %p41 = scmp.ge.s32.totalorder %s40, 1
    %s42 = scalar_select %p41, 0, %s40
    %s43 = sadd.s32 1, %s20
    %s44 = scalar_select %p41, %s43, %s20
    %p45 = scmp.ge.s32.totalorder %s44, 2
    %s46 = scalar_select %p45, 0, %s44
    %s47 = ssub.s32 %s20, %s46
    %s48 = ssub.s32 %s21, %s42
    %s49 = sor.u32 %s47, %s48
    %p50 = scmp.eq.s32.totalorder %s49, 0
    %s52 = sadd.s32 %s51, 1
    %s53 = scalar_select %p50, %s51, %s52
    %p56 = pneg %p50
    %p57 = scmp.eq.s32.totalorder %s13, 23
    %p58 = por %p56, %p57
    %p59 = scmp.ne.s32.totalorder %s51, %s54
    %p60 = scmp.eq.s32.totalorder %s13, 0
    %p61 = por %p59, %p60
    %p62 = scmp.ne.s32.totalorder %s51, %s54
    %p63 = scmp.eq.s32.totalorder %s18, 23
    %p64 = por %p62, %p63
    %p65 = scmp.ne.s32.totalorder %s54, %s55
    %p66 = scmp.eq.s32.totalorder %s18, 0
    %p67 = por %p65, %p66
    %p68 = scmp.ne.s32.totalorder %s54, %s55
    %p69 = scmp.eq.s32.totalorder %s19, 23
    %p70 = por %p68, %p69
    %p72 = scmp.ne.s32.totalorder %s55, %s71
    %p73 = scmp.eq.s32.totalorder %s19, 0
    %p74 = por %p72, %p73
    %s76 = sadd.s32 %s75, 1
    %p79 = scmp.eq.s32.totalorder %s13, 23
    %p80 = scmp.ne.s32.totalorder %s75, %s77
    %p81 = scmp.eq.s32.totalorder %s13, 0
    %p82 = por %p80, %p81
    %p83 = scmp.ne.s32.totalorder %s75, %s77
    %p84 = scmp.eq.s32.totalorder %s18, 23
    %p85 = por %p83, %p84
    %p86 = scmp.ne.s32.totalorder %s77, %s78
    %p87 = scmp.eq.s32.totalorder %s18, 0
    %p88 = por %p86, %p87
    %p89 = scmp.ne.s32.totalorder %s77, %s78
    %p90 = scmp.eq.s32.totalorder %s19, 23
    %p91 = por %p89, %p90
    %p93 = scmp.ne.s32.totalorder %s78, %s92
    %p94 = scmp.eq.s32.totalorder %s19, 0
    %p95 = por %p93, %p94
    %s97 = sadd.s32 %s96, 1
    %p100 = scmp.eq.s32.totalorder %s13, 23
    %p101 = scmp.ne.s32.totalorder %s96, %s98
    %p102 = scmp.eq.s32.totalorder %s13, 0
    %p103 = por %p101, %p102
    %p104 = scmp.ne.s32.totalorder %s96, %s98
    %p105 = scmp.eq.s32.totalorder %s18, 23
    %p106 = por %p104, %p105
    %p107 = scmp.ne.s32.totalorder %s98, %s99
    %p108 = scmp.eq.s32.totalorder %s18, 0
    %p109 = por %p107, %p108
    %p110 = scmp.ne.s32.totalorder %s98, %s99
    %p111 = scmp.eq.s32.totalorder %s19, 23
    %p112 = por %p110, %p111
    %p114 = scmp.ne.s32.totalorder %s99, %s113
    %p115 = scmp.eq.s32.totalorder %s19, 0
    %p116 = por %p114, %p115
    %s117 = ssub.s32 %s22, %s38
    %s118 = ssub.s32 %s23, %s34
    %s119 = sor.u32 %s117, %s118
    %p120 = scmp.eq.s32.totalorder %s119, 0
    %s122 = sadd.s32 %s121, 1
    %s123 = scalar_select %p120, %s121, %s122
    %p126 = pneg %p120
    %p127 = scmp.eq.s32.totalorder %s13, 23
    %p128 = por %p126, %p127
    %p129 = scmp.ne.s32.totalorder %s121, %s124
    %p130 = scmp.eq.s32.totalorder %s13, 0
    %p131 = por %p129, %p130
    %p132 = scmp.ne.s32.totalorder %s121, %s124
    %p133 = scmp.eq.s32.totalorder %s18, 23
    %p134 = por %p132, %p133
    %p135 = scmp.ne.s32.totalorder %s124, %s125
    %p136 = scmp.eq.s32.totalorder %s18, 0
    %p137 = por %p135, %p136
    %p138 = scmp.ne.s32.totalorder %s124, %s125
    %p139 = scmp.eq.s32.totalorder %s19, 23
    %p140 = por %p138, %p139
    %p142 = scmp.ne.s32.totalorder %s125, %s141
    %p143 = scmp.eq.s32.totalorder %s19, 0
    %p144 = por %p142, %p143
    %s145 = ssub.s32 %s22, %s38
    %s146 = ssub.s32 %s23, %s34
    %s147 = sor.u32 %s145, %s146
    %p148 = scmp.eq.s32.totalorder %s147, 0
    %s150 = sadd.s32 %s149, 1
    %s151 = scalar_select %p148, %s149, %s150
    %p154 = pneg %p148
    %p155 = scmp.eq.s32.totalorder %s13, 23
    %p156 = por %p154, %p155
    %p157 = scmp.ne.s32.totalorder %s149, %s152
    %p158 = scmp.eq.s32.totalorder %s13, 0
    %p159 = por %p157, %p158
    %p160 = scmp.ne.s32.totalorder %s149, %s152
    %p161 = scmp.eq.s32.totalorder %s18, 23
    %p162 = por %p160, %p161
    %p163 = scmp.ne.s32.totalorder %s152, %s153
    %p164 = scmp.eq.s32.totalorder %s18, 0
    %p165 = por %p163, %p164
    %p166 = scmp.ne.s32.totalorder %s152, %s153
    %p167 = scmp.eq.s32.totalorder %s19, 23
    %p168 = por %p166, %p167
    %p170 = scmp.ne.s32.totalorder %s153, %s169
    %p171 = scmp.eq.s32.totalorder %s19, 0
    %p172 = por %p170, %p171
    %s173 = ssub.s32 %s22, %s38
    %s174 = ssub.s32 %s20, %s46
    %s175 = sor.u32 %s173, %s174
    %s176 = ssub.s32 %s23, %s34
    %s177 = sor.u32 %s175, %s176
    %s178 = ssub.s32 %s21, %s42
    %s179 = sor.u32 %s177, %s178
    %p180 = scmp.eq.s32.totalorder %s179, 0
    %s182 = sadd.s32 %s181, 1
    %s183 = scalar_select %p180, %s181, %s182
    %p186 = pneg %p180
    %p187 = scmp.eq.s32.totalorder %s13, 23
    %p188 = por %p186, %p187
    %p189 = scmp.ne.s32.totalorder %s181, %s184
    %p190 = scmp.eq.s32.totalorder %s13, 0
    %p191 = por %p189, %p190
    %p192 = scmp.ne.s32.totalorder %s181, %s184
    %p193 = scmp.eq.s32.totalorder %s18, 23
    %p194 = por %p192, %p193
    %p195 = scmp.ne.s32.totalorder %s184, %s185
    %p196 = scmp.eq.s32.totalorder %s18, 0
    %p197 = por %p195, %p196
    %p198 = scmp.ne.s32.totalorder %s184, %s185
    %p199 = scmp.eq.s32.totalorder %s19, 23
    %p200 = por %p198, %p199
    %p202 = scmp.ne.s32.totalorder %s185, %s201
    %p203 = scmp.eq.s32.totalorder %s19, 0
    %p204 = por %p202, %p203
    %s205 = ssub.s32 %s20, %s46
    %s206 = ssub.s32 %s21, %s42
    %s207 = sor.u32 %s205, %s206
    %p208 = scmp.eq.s32.totalorder %s207, 0
    %s210 = sadd.s32 %s209, 1
    %s211 = scalar_select %p208, %s209, %s210
    %p214 = pneg %p208
    %p215 = scmp.eq.s32.totalorder %s13, 23
    %p216 = por %p214, %p215
    %p217 = scmp.ne.s32.totalorder %s209, %s212
    %p218 = scmp.eq.s32.totalorder %s13, 0
    %p219 = por %p217, %p218
    %p220 = scmp.ne.s32.totalorder %s209, %s212
    %p221 = scmp.eq.s32.totalorder %s18, 23
    %p222 = por %p220, %p221
    %p223 = scmp.ne.s32.totalorder %s212, %s213
    %p224 = scmp.eq.s32.totalorder %s18, 0
    %p225 = por %p223, %p224
    %p226 = scmp.ne.s32.totalorder %s212, %s213
    %p227 = scmp.eq.s32.totalorder %s19, 23
    %p228 = por %p226, %p227
    %p230 = scmp.ne.s32.totalorder %s213, %s229
    %p231 = scmp.eq.s32.totalorder %s19, 0
    %p232 = por %p230, %p231
    %p233 = scmp.le.s32.totalorder 1, %s13
    %p234 = scmp.lt.s32.totalorder %s13, 25
    %p235 = pnand %p233, %p234
    %p236 = pneg %p235
    // Predicated region
    $region9: #{lm_backbone_forward.7} parent=5 // pred_check
      _
    $region10: #{lm_backbone_forward.7} parent=5 // pred_check_branch
      %238 = sbr.rel (%p235) target = $region12
    $region11: #{lm_backbone_forward.7} parent=5 // pred_region
      %s239 = ssub.s32 %s13, 1
      // Predicated region
      $region13: #{lm_backbone_forward.7} parent=11 // pred_check
        %p240 = pneg %p88
      $region14: #{lm_backbone_forward.7} parent=11 // pred_check_branch
        %242 = sbr.rel (%p240) target = $region16
      $region15: #{lm_backbone_forward.7} parent=11 // pred_region
        _
      $region16: #{lm_backbone_forward.7} parent=11 // pred_fallthru
        _
      // Predicated region
      $region17: #{lm_backbone_forward.7} parent=11 // pred_check
        %p243 = pneg %p109
      $region18: #{lm_backbone_forward.7} parent=11 // pred_check_branch
        %245 = sbr.rel (%p243) target = $region20
      $region19: #{lm_backbone_forward.7} parent=11 // pred_region
        _
      $region20: #{lm_backbone_forward.7} parent=11 // pred_fallthru
        _
    $region12: #{lm_backbone_forward.7} parent=5 // pred_fallthru
      _
    %p246 = scmp.lt.s32.totalorder %s13, 24
    // Predicated region
    $region21: #{lm_backbone_forward.7} parent=5 // pred_check
      %p247 = pneg %p246
    $region22: #{lm_backbone_forward.7} parent=5 // pred_check_branch
      %249 = sbr.rel (%p247) target = $region24
    $region23: #{lm_backbone_forward.7} parent=5 // pred_region
      // Predicated region
      $region25: #{lm_backbone_forward.7} parent=23 // pred_check
        %p250 = pneg %p61
      $region26: #{lm_backbone_forward.7} parent=23 // pred_check_branch
        %252 = sbr.rel (%p250) target = $region28
      $region27: #{lm_backbone_forward.7} parent=23 // pred_region
        %p253 = scmp.lt.s32.totalorder %s20, 1
        %s254 = scalar_select %p253, %s20, 1
        %p255 = scmp.lt.s32.totalorder %s21, 0
        %s256 = scalar_select %p255, %s21, 0
        %s257 = sadd.s32 %s256, %s254
        %s258 = smul.addr %s257, 8
        %s259 = scalar_lea.vmem %s0, %s258
      $region28: #{lm_backbone_forward.7} parent=23 // pred_fallthru
        _
      // Predicated region
      $region29: #{lm_backbone_forward.7} parent=23 // pred_check
        %p260 = pneg %p131
      $region30: #{lm_backbone_forward.7} parent=23 // pred_check_branch
        %262 = sbr.rel (%p260) target = $region32
      $region31: #{lm_backbone_forward.7} parent=23 // pred_region
        %p263 = scmp.lt.s32.totalorder %s22, 2
        %s264 = scalar_select %p263, %s22, 2
        %p265 = scmp.lt.s32.totalorder %s23, 3
        %s266 = scalar_select %p265, %s23, 3
        %s267 = smul.addr %s266, 4
        %s268 = smul.addr %s264, 16
        %s269 = sadd.s32 %s267, %s268
        %s270 = smul.addr %s269, 4
        %s271 = scalar_lea.vmem %s3, %s270
      $region32: #{lm_backbone_forward.7} parent=23 // pred_fallthru
        _
      // Predicated region
      $region33: #{lm_backbone_forward.7} parent=23 // pred_check
        %p272 = pneg %p159
      $region34: #{lm_backbone_forward.7} parent=23 // pred_check_branch
        %274 = sbr.rel (%p272) target = $region36
      $region35: #{lm_backbone_forward.7} parent=23 // pred_region
        %p275 = scmp.lt.s32.totalorder %s22, 2
        %s276 = scalar_select %p275, %s22, 2
        %p277 = scmp.lt.s32.totalorder %s23, 3
        %s278 = scalar_select %p277, %s23, 3
        %s279 = smul.addr %s276, 4
        %s280 = sadd.s32 %s278, %s279
        %s281 = scalar_lea.vmem %s4, %s280
      $region36: #{lm_backbone_forward.7} parent=23 // pred_fallthru
        _
    $region24: #{lm_backbone_forward.7} parent=5 // pred_fallthru
      _
    %p282 = scmp.le.s32.totalorder 1, %s13
    %p283 = scmp.lt.s32.totalorder %s13, 25
    %p284 = pnand %p282, %p283
    %p285 = pneg %p284
    // Predicated region
    $region37: #{lm_backbone_forward.7} parent=5 // pred_check
      _
    $region38: #{lm_backbone_forward.7} parent=5 // pred_check_branch
      %287 = sbr.rel (%p284) target = $region40
    $region39: #{lm_backbone_forward.7} parent=5 // pred_region
      %s288 = ssub.s32 %s13, 1
      %p289 = scmp.lt.s32.totalorder %s24, 1
      %s290 = scalar_select %p289, %s24, 1
      %p291 = scmp.lt.s32.totalorder %s25, 0
      %s292 = scalar_select %p291, %s25, 0
      %s293 = sadd.s32 %s292, %s290
      %s294 = smul.addr %s293, 8
      %s295 = scalar_lea.vmem %s0, %s294
      %p296 = pneg %p67
      %p297 = pneg %p64
      %p298 = pneg %p88
      %p299 = pneg %p85
      %p300 = pneg %p109
      %p301 = pneg %p106
      %p302 = scmp.lt.s32.totalorder %s26, 2
      %s303 = scalar_select %p302, %s26, 2
      %p304 = scmp.lt.s32.totalorder %s27, 3
      %s305 = scalar_select %p304, %s27, 3
      %s306 = smul.addr %s305, 4
      %s307 = smul.addr %s303, 16
      %s308 = sadd.s32 %s306, %s307
      %s309 = smul.addr %s308, 4
      %s310 = scalar_lea.vmem %s3, %s309
      %p311 = pneg %p137
      %p312 = pneg %p134
      %p313 = scmp.lt.s32.totalorder %s26, 2
      %s314 = scalar_select %p313, %s26, 2
      %p315 = scmp.lt.s32.totalorder %s27, 3
      %s316 = scalar_select %p315, %s27, 3
      %s317 = smul.addr %s314, 4
      %s318 = sadd.s32 %s316, %s317
      %s319 = scalar_lea.vmem %s4, %s318
      %p320 = pneg %p165
      %p321 = pneg %p162
      %p322 = pneg %p197
      %p323 = pneg %p194
      %p324 = scmp.lt.s32.totalorder %s26, 2
      %s325 = scalar_select %p324, %s26, 2
      %p326 = scmp.lt.s32.totalorder %s24, 1
      %s327 = scalar_select %p326, %s24, 1
      %p328 = scmp.lt.s32.totalorder %s27, 3
      %s329 = scalar_select %p328, %s27, 3
      %p330 = scmp.lt.s32.totalorder %s25, 0
      %s331 = scalar_select %p330, %s25, 0
      %s332 = sadd.s32 %s331, %s329
      %s333 = smul.addr %s327, 4
      %s334 = sadd.s32 %s332, %s333
      %s335 = smul.addr %s325, 8
      %s336 = sadd.s32 %s334, %s335
      %s337 = smul.addr %s336, 4
      %s338 = scalar_lea.vmem %s5, %s337
      %p339 = pneg %p225
      %p340 = pneg %p222
      %p341 = scmp.lt.s32.totalorder %s24, 1
      %s342 = scalar_select %p341, %s24, 1
      %p343 = scmp.lt.s32.totalorder %s25, 0
      %s344 = scalar_select %p343, %s25, 0
      %s345 = sadd.s32 %s344, %s342
      %s346 = smul.addr %s345, 8
      %s347 = scalar_lea.vmem %s6, %s346
      %p348 = scmp.lt.s32.totalorder %s24, 1
      %s349 = scalar_select %p348, %s24, 1
      %p350 = scmp.lt.s32.totalorder %s25, 0
      %s351 = scalar_select %p350, %s25, 0
      %s352 = sadd.s32 %s351, %s349
      %s353 = smul.addr %s352, 8
      %s354 = scalar_lea.vmem %s0, %s353
      %p355 = scmp.lt.s32.totalorder %s26, 2
      %s356 = scalar_select %p355, %s26, 2
      %p357 = scmp.lt.s32.totalorder %s27, 3
      %s358 = scalar_select %p357, %s27, 3
      %s359 = smul.addr %s358, 4
      %s360 = smul.addr %s356, 16
      %s361 = sadd.s32 %s359, %s360
      %s362 = smul.addr %s361, 4
      %s363 = scalar_lea.vmem %s3, %s362
      %p364 = scmp.lt.s32.totalorder %s26, 2
      %s365 = scalar_select %p364, %s26, 2
      %p366 = scmp.lt.s32.totalorder %s27, 3
      %s367 = scalar_select %p366, %s27, 3
      %s368 = smul.addr %s365, 4
      %s369 = sadd.s32 %s367, %s368
      %s370 = scalar_lea.vmem %s4, %s369
      %p371 = scmp.lt.s32.totalorder %s26, 2
      %s372 = scalar_select %p371, %s26, 2
      %p373 = scmp.lt.s32.totalorder %s24, 1
      %s374 = scalar_select %p373, %s24, 1
      %p375 = scmp.lt.s32.totalorder %s27, 3
      %s376 = scalar_select %p375, %s27, 3
      %p377 = scmp.lt.s32.totalorder %s25, 0
      %s378 = scalar_select %p377, %s25, 0
      %s379 = sadd.s32 %s378, %s376
      %s380 = smul.addr %s374, 4
      %s381 = sadd.s32 %s379, %s380
      %s382 = smul.addr %s372, 8
      %s383 = sadd.s32 %s381, %s382
      %s384 = smul.addr %s383, 4
      %s385 = scalar_lea.vmem %s5, %s384
      %p386 = scmp.lt.s32.totalorder %s24, 1
      %s387 = scalar_select %p386, %s24, 1
      %p388 = scmp.lt.s32.totalorder %s25, 0
      %s389 = scalar_select %p388, %s25, 0
      %s390 = sadd.s32 %s389, %s387
      %s391 = smul.addr %s390, 8
      %s392 = scalar_lea.vmem %s6, %s391
      %p394 = scmp.eq.s32.totalorder %s26, 0
      %p395 = scmp.eq.s32.totalorder %s27, 0
      %p396 = pnand %p394, %p395
      %p397 = pneg %p396
      // Predicated region
      $region41: #{lm_backbone_forward.7} parent=39 // pred_check
        _
      $region42: #{lm_backbone_forward.7} parent=39 // pred_check_branch
        %399 = sbr.rel (%p396) target = $region44
      $region43: #{lm_backbone_forward.7} parent=39 // pred_region
        %v400 = vld [vmem:[%s354] sm:$0xff]
        %vm401 = vcmask 261120
        %402 = vst.msk [vmem:[%s392] sm:$0xff] %vm401, %v400
        %v403 = vld [vmem:[%s1] sm:$0x1]
        %v404 = vld [vmem:[%s2] sm:$0x1]
        %v405 = vsel %vm401, %v400, 0.0
        %406 = vadd.xlane.f32.xlu0 %v405
        %v407 = vpop.xlane.xlu0 %406
        %v408 = vrcp.pop 32.0
        %v409 = vmul.f32 %v407, %v408
        %v410 = vsub.f32 %v400, %v409
        %v411 = vmul.f32 %v410, %v410
        %v412 = vsel %vm401, %v411, 0.0
        %413 = vadd.xlane.f32.xlu0 %v412
        %v414 = vpop.xlane.xlu0 %413
        %v415 = vmul.f32 %v414, %v408
        %v416 = vadd.f32 %v415, 1e-05
        %v417 = vrsqrt.pop %v416
        %v418 = vmul.f32 %v410, %v417
        %v420 = vlaneseq
        %v421 = vshrl.u32 %v420, 7
        %v422 = vsub.s32 0, %v421
        %v423 = vrot.slane %v403, %v422
        %v425 = vmul.f32 %v418, %v423
        %v427 = vlaneseq
        %v428 = vshrl.u32 %v427, 7
        %v429 = vsub.s32 0, %v428
        %v430 = vrot.slane %v404, %v429
        %v432 = vadd.f32 %v425, %v430
        %v433 = vpack.c.bf16 %v432, %v432
        %vm434 = vcmask 257024
        %435 = vst.msk [vmem:[#allocation2] sm:$0xf] %vm434, %v433
      $region44: #{lm_backbone_forward.7} parent=39 // pred_fallthru
        _
      %v436 = vld [vmem:[#allocation2] sm:$0xf]
      %v437 = vld [vmem:[%s363] sm:$0xf]
      %v438 = vld [vmem:[%s363 + $0x4] sm:$0xf]
      %v439 = vld [vmem:[%s363 + $0x8] sm:$0xf]
      %v440 = vld [vmem:[%s363 + $0xc] sm:$0xf]
      %v441 = vld [vmem:[%s370] sm:$0x1]
      %v443 = vlaneseq
      %v444 = vshrl.u32 %v443, 7
      %v445 = vsub.s32 0, %v444
      %v446 = vrot.slane %v441, %v445
      %v452 = vunpack.c.l.b16 %v437
      %v453 = vunpack.c.l.b16 %v438
      %v454 = vunpack.c.l.b16 %v439
      %v455 = vunpack.c.l.b16 %v440
      %v456 = vpack.c.b16 %v453, %v452
      %v457 = vpack.c.b16 %v455, %v454
      %vm460 = vcmask 261120
      %v462 = vsel %vm460, %v436, 0
      %464 = vmatprep.subr.bf16.mxu0 0
      %465 = vmatpush1.bf16.msra.mxu0 %v456
      %466 = vmatprep.subr.bf16.mxu0 0
      %467 = vmatpush1.bf16.msra.mxu0 %v457
      %468 = vmatprep.subr.bf16.mxu0 0
      %469 = vmatpush1.bf16.msra.mxu0 0
      %470 = vmatprep.subr.bf16.mxu0 0
      %471 = vmatpush1.bf16.msra.mxu0 0
      %472 = vmatprep.subr.bf16.mxu0 0
      %473 = vmatpush1.bf16.msra.mxu0 0
      %474 = vmatprep.subr.bf16.mxu0 0
      %475 = vmatpush1.bf16.msra.mxu0 0
      %476 = vmatprep.subr.bf16.mxu0 0
      %477 = vmatpush1.bf16.msra.mxu0 0
      %478 = vmatprep.subr.bf16.mxu0 0
      %479 = vmatpush1.bf16.msra.mxu0 0
      %480 = vmatprep.subr.bf16.mxu0 0
      %481 = vmatpush1.bf16.msra.mxu0 0
      %482 = vmatprep.subr.bf16.mxu0 0
      %483 = vmatpush1.bf16.msra.mxu0 0
      %484 = vmatprep.subr.bf16.mxu0 0
      %485 = vmatpush1.bf16.msra.mxu0 0
      %486 = vmatprep.subr.bf16.mxu0 0
      %487 = vmatpush1.bf16.msra.mxu0 0
      %488 = vmatprep.subr.bf16.mxu0 0
      %489 = vmatpush1.bf16.msra.mxu0 0
      %490 = vmatprep.subr.bf16.mxu0 0
      %491 = vmatpush1.bf16.msra.mxu0 0
      %492 = vmatprep.subr.bf16.mxu0 0
      %493 = vmatpush1.bf16.msra.mxu0 0
      %494 = vmatprep.subr.bf16.mxu0 0
      %495 = vmatpush1.bf16.msra.mxu0 0
      %496 = vmatprep.mubr.bf16.mxu0 0
      %497 = vmatmul.mubr.bf16.gmra.mrb[0].mxu0 %v462
      %v498 = vpop.f32.mrb[0].mxu0
      %v499 = vadd.f32 %v446, %v498
      %v500 = vpop.f32.mrb[0].mxu0
      %v501 = vpop.f32.mrb[0].mxu0
      %v502 = vpop.f32.mrb[0].mxu0
      %503 = vdwg.mxu0
      %v504 = vpack.c.bf16 %v499, %v499
      %vm505 = vcmask 60416
      %506 = vst.msk [vmem:[%s385] sm:$0xf] %vm505, %v504
      %p507 = scmp.lt.s32.totalorder %s26, 2
      %s508 = scalar_select %p507, %s26, 2
      %p509 = scmp.lt.s32.totalorder %s24, 1
      %s510 = scalar_select %p509, %s24, 1
      %p511 = scmp.lt.s32.totalorder %s27, 3
      %s512 = scalar_select %p511, %s27, 3
      %p513 = scmp.lt.s32.totalorder %s25, 0
      %s514 = scalar_select %p513, %s25, 0
      %s515 = sadd.s32 %s514, %s512
      %s516 = smul.addr %s510, 4
      %s517 = sadd.s32 %s515, %s516
      %s518 = smul.addr %s508, 8
      %s519 = sadd.s32 %s517, %s518
      %s520 = smul.addr %s519, 4
      %s521 = scalar_lea.vmem %s5, %s520
      %p522 = scmp.lt.s32.totalorder %s24, 1
      %s523 = scalar_select %p522, %s24, 1
      %p524 = scmp.lt.s32.totalorder %s25, 0
      %s525 = scalar_select %p524, %s25, 0
      %s526 = sadd.s32 %s525, %s523
      %s527 = smul.addr %s526, 8
      %s528 = scalar_lea.vmem %s6, %s527
      // Predicated region
      $region45: #{lm_backbone_forward.7} parent=39 // pred_check
        %p529 = pneg %p194
      $region46: #{lm_backbone_forward.7} parent=39 // pred_check_branch
        %531 = sbr.rel (%p529) target = $region48
      $region47: #{lm_backbone_forward.7} parent=39 // pred_region
        _
      $region48: #{lm_backbone_forward.7} parent=39 // pred_fallthru
        _
      // Predicated region
      $region49: #{lm_backbone_forward.7} parent=39 // pred_check
        %p532 = pneg %p222
      $region50: #{lm_backbone_forward.7} parent=39 // pred_check_branch
        %534 = sbr.rel (%p532) target = $region52
      $region51: #{lm_backbone_forward.7} parent=39 // pred_region
        _
      $region52: #{lm_backbone_forward.7} parent=39 // pred_fallthru
        _
    $region40: #{lm_backbone_forward.7} parent=5 // pred_fallthru
      _
    %p535 = scmp.le.s32.totalorder 2, %s13
    // Predicated region
    $region53: #{lm_backbone_forward.7} parent=5 // pred_check
      %p536 = pneg %p535
    $region54: #{lm_backbone_forward.7} parent=5 // pred_check_branch
      %538 = sbr.rel (%p536) target = $region56
    $region55: #{lm_backbone_forward.7} parent=5 // pred_region
      %s539 = ssub.s32 %s13, 2
      // Predicated region
      $region57: #{lm_backbone_forward.7} parent=55 // pred_check
        %p540 = pneg %p200
      $region58: #{lm_backbone_forward.7} parent=55 // pred_check_branch
        %542 = sbr.rel (%p540) target = $region60
      $region59: #{lm_backbone_forward.7} parent=55 // pred_region
        %p543 = scmp.lt.s32.totalorder %s30, 2
        %s544 = scalar_select %p543, %s30, 2
        %p545 = scmp.lt.s32.totalorder %s28, 1
        %s546 = scalar_select %p545, %s28, 1
        %p547 = scmp.lt.s32.totalorder %s31, 3
        %s548 = scalar_select %p547, %s31, 3
        %p549 = scmp.lt.s32.totalorder %s29, 0
        %s550 = scalar_select %p549, %s29, 0
        %s551 = sadd.s32 %s550, %s548
        %s552 = smul.addr %s546, 4
        %s553 = sadd.s32 %s551, %s552
        %s554 = smul.addr %s544, 8
        %s555 = sadd.s32 %s553, %s554
        %s556 = smul.addr %s555, 4
        %s557 = scalar_lea.vmem %s5, %s556
      $region60: #{lm_backbone_forward.7} parent=55 // pred_fallthru
        _
      // Predicated region
      $region61: #{lm_backbone_forward.7} parent=55 // pred_check
        %p558 = pneg %p228
      $region62: #{lm_backbone_forward.7} parent=55 // pred_check_branch
        %560 = sbr.rel (%p558) target = $region64
      $region63: #{lm_backbone_forward.7} parent=55 // pred_region
        %p561 = scmp.lt.s32.totalorder %s28, 1
        %s562 = scalar_select %p561, %s28, 1
        %p563 = scmp.lt.s32.totalorder %s29, 0
        %s564 = scalar_select %p563, %s29, 0
        %s565 = sadd.s32 %s564, %s562
        %s566 = smul.addr %s565, 8
        %s567 = scalar_lea.vmem %s6, %s566
      $region64: #{lm_backbone_forward.7} parent=55 // pred_fallthru
        _
    $region56: #{lm_backbone_forward.7} parent=5 // pred_fallthru
      _
  $region6: #{lm_backbone_forward.7} parent=0 // loop_footer
    %s17 = sadd.s32 1, %s13
  $region7: #{lm_backbone_forward.7} parent=0 // loop_footer_branch
    %12 = sbr.rel target = $region3
  $region8: #{lm_backbone_forward.7} parent=0 // loop_exit
    _

// kernel: lm_backbone_forward.10
$region0: #{lm_backbone_forward.10}
  #allocation0 [shape = 'u32[]', space=smem, size = 0x4, offset = 0x4, fixed_abs, tag = 'smem constant byte address 0x4 - core index']
  #allocation1 [shape = 'u32[144,128]{1,0:T(1,128)}', space=vmem, size = 0x12000, scoped, tag = 'internal scratch']
  #allocation2 [shape = 'bf16[8,32]{1,0:T(8,128)(2,1)}', space=vmem, size = 0x800, scoped, tag = 'scratch operand']
  %s0 = inlined_call_operand.vmem [shape: f32[2,8,32], index: 0, kind: input, shape index: {}]
  %s1 = inlined_call_operand.vmem [shape: f32[2,8,32], index: 1, kind: input, shape index: {}, may-alias: {1,7}]
  %s2 = inlined_call_operand.vmem [shape: f32[1,32], index: 2, kind: input, shape index: {}]
  %s3 = inlined_call_operand.vmem [shape: f32[1,32], index: 3, kind: input, shape index: {}]
  %s4 = inlined_call_operand.vmem [shape: bf16[3,4,32,8], index: 4, kind: input, shape index: {}]
  %s5 = inlined_call_operand.vmem [shape: f32[3,4,1,8], index: 5, kind: input, shape index: {}]
  %s6 = inlined_call_operand.vmem [shape: bf16[3,2,4,8,8], index: 6, kind: output, shape index: {0}]
  %s7 = inlined_call_operand.vmem [shape: f32[2,8,32], index: 7, kind: output, shape index: {1}, may-alias: {1,7}]
  %8 = xla_tuple %s6, %s7
  %s9 = sld [smem:[#allocation0]]
  $region69: #{lm_backbone_forward.10} parent=0
    _
  %s11 = ssub.s32 1, %s9
  %s12 = scalar_select 0, %s11, %s9
  loop: start=0, step=1, limit=26
  $region2: #{lm_backbone_forward.10} parent=0 // loop_pre_header
    _
  $region3: #{lm_backbone_forward.10} parent=0 // loop_header
    %s14 = sphi 0, %s18
    %p15 = scmp.ge.s32.totalorder %s14, 26
    %s21 = sphi 0, %s47
    %s22 = sphi 0, %s43
    %s23 = sphi 0, %s39
    %s24 = sphi 0, %s35
    %s25 = sphi 0, %s21
    %s26 = sphi 0, %s22
    %s27 = sphi 0, %s23
    %s28 = sphi 0, %s24
    %s29 = sphi 0, %s25
    %s30 = sphi 0, %s26
    %s31 = sphi 0, %s27
    %s32 = sphi 0, %s28
    %s52 = sphi 0, %s54
    %s55 = sphi 0, %s52
    %s56 = sphi 0, %s55
    %s72 = sphi 0, %s56
    %s80 = sphi 0, %s82
    %s83 = sphi 0, %s80
    %s84 = sphi 0, %s83
    %s100 = sphi 0, %s84
    %s104 = sphi 0, %s104
    %s106 = sphi 0, %s104
    %s107 = sphi 0, %s106
    %s121 = sphi 0, %s107
    %s125 = sphi 0, %s125
    %s127 = sphi 0, %s125
    %s128 = sphi 0, %s127
    %s142 = sphi 0, %s128
    %s150 = sphi 0, %s152
    %s153 = sphi 0, %s150
    %s154 = sphi 0, %s153
    %s170 = sphi 0, %s154
    %s178 = sphi 0, %s180
    %s181 = sphi 0, %s178
    %s182 = sphi 0, %s181
    %s198 = sphi 0, %s182
    %s210 = sphi 0, %s212
    %s213 = sphi 0, %s210
    %s214 = sphi 0, %s213
    %s230 = sphi 0, %s214
    %s238 = sphi 0, %s240
    %s241 = sphi 0, %s238
    %s242 = sphi 0, %s241
    %s258 = sphi 0, %s242
  $region4: #{lm_backbone_forward.10} parent=0 // loop_header_branch
    %17 = sbr.rel (%p15) target = $region8
  $region5: #{lm_backbone_forward.10} parent=0 // loop_body
    %s19 = ssub.s32 %s14, 1
    %s20 = ssub.s32 %s14, 2
    %s33 = sadd.s32 1, %s24
    %p34 = scmp.ge.s32.totalorder %s33, 4
    %s35 = scalar_select %p34, 0, %s33
    %s36 = sadd.s32 1, %s23
    %s37 = scalar_select %p34, %s36, %s23
    %p38 = scmp.ge.s32.totalorder %s37, 3
    %s39 = scalar_select %p38, 0, %s37
    %s40 = sadd.s32 1, %s22
    %s41 = scalar_select %p38, %s40, %s22
    %p42 = scmp.ge.s32.totalorder %s41, 1
    %s43 = scalar_select %p42, 0, %s41
    %s44 = sadd.s32 1, %s21
    %s45 = scalar_select %p42, %s44, %s21
    %p46 = scmp.ge.s32.totalorder %s45, 2
    %s47 = scalar_select %p46, 0, %s45
    %s48 = ssub.s32 %s21, %s47
    %s49 = ssub.s32 %s22, %s43
    %s50 = sor.u32 %s48, %s49
    %p51 = scmp.eq.s32.totalorder %s50, 0
    %s53 = sadd.s32 %s52, 1
    %s54 = scalar_select %p51, %s52, %s53
    %p57 = pneg %p51
    %p58 = scmp.eq.s32.totalorder %s14, 23
    %p59 = por %p57, %p58
    %p60 = scmp.ne.s32.totalorder %s52, %s55
    %p61 = scmp.eq.s32.totalorder %s14, 0
    %p62 = por %p60, %p61
    %p63 = scmp.ne.s32.totalorder %s52, %s55
    %p64 = scmp.eq.s32.totalorder %s19, 23
    %p65 = por %p63, %p64
    %p66 = scmp.ne.s32.totalorder %s55, %s56
    %p67 = scmp.eq.s32.totalorder %s19, 0
    %p68 = por %p66, %p67
    %p69 = scmp.ne.s32.totalorder %s55, %s56
    %p70 = scmp.eq.s32.totalorder %s20, 23
    %p71 = por %p69, %p70
    %p73 = scmp.ne.s32.totalorder %s56, %s72
    %p74 = scmp.eq.s32.totalorder %s20, 0
    %p75 = por %p73, %p74
    %s76 = ssub.s32 %s21, %s47
    %s77 = ssub.s32 %s22, %s43
    %s78 = sor.u32 %s76, %s77
    %p79 = scmp.eq.s32.totalorder %s78, 0
    %s81 = sadd.s32 %s80, 1
    %s82 = scalar_select %p79, %s80, %s81
    %p85 = pneg %p79
    %p86 = scmp.eq.s32.totalorder %s14, 23
    %p87 = por %p85, %p86
    %p88 = scmp.ne.s32.totalorder %s80, %s83
    %p89 = scmp.eq.s32.totalorder %s14, 0
    %p90 = por %p88, %p89
    %p91 = scmp.ne.s32.totalorder %s80, %s83
    %p92 = scmp.eq.s32.totalorder %s19, 23
    %p93 = por %p91, %p92
    %p94 = scmp.ne.s32.totalorder %s83, %s84
    %p95 = scmp.eq.s32.totalorder %s19, 0
    %p96 = por %p94, %p95
    %p97 = scmp.ne.s32.totalorder %s83, %s84
    %p98 = scmp.eq.s32.totalorder %s20, 23
    %p99 = por %p97, %p98
    %p101 = scmp.ne.s32.totalorder %s84, %s100
    %p102 = scmp.eq.s32.totalorder %s20, 0
    %p103 = por %p101, %p102
    %s105 = sadd.s32 %s104, 1
    %p108 = scmp.eq.s32.totalorder %s14, 23
    %p109 = scmp.ne.s32.totalorder %s104, %s106
    %p110 = scmp.eq.s32.totalorder %s14, 0
    %p111 = por %p109, %p110
    %p112 = scmp.ne.s32.totalorder %s104, %s106
    %p113 = scmp.eq.s32.totalorder %s19, 23
    %p114 = por %p112, %p113
    %p115 = scmp.ne.s32.totalorder %s106, %s107
    %p116 = scmp.eq.s32.totalorder %s19, 0
    %p117 = por %p115, %p116
    %p118 = scmp.ne.s32.totalorder %s106, %s107
    %p119 = scmp.eq.s32.totalorder %s20, 23
    %p120 = por %p118, %p119
    %p122 = scmp.ne.s32.totalorder %s107, %s121
    %p123 = scmp.eq.s32.totalorder %s20, 0
    %p124 = por %p122, %p123
    %s126 = sadd.s32 %s125, 1
    %p129 = scmp.eq.s32.totalorder %s14, 23
    %p130 = scmp.ne.s32.totalorder %s125, %s127
    %p131 = scmp.eq.s32.totalorder %s14, 0
    %p132 = por %p130, %p131
    %p133 = scmp.ne.s32.totalorder %s125, %s127
    %p134 = scmp.eq.s32.totalorder %s19, 23
    %p135 = por %p133, %p134
    %p136 = scmp.ne.s32.totalorder %s127, %s128
    %p137 = scmp.eq.s32.totalorder %s19, 0
    %p138 = por %p136, %p137
    %p139 = scmp.ne.s32.totalorder %s127, %s128
    %p140 = scmp.eq.s32.totalorder %s20, 23
    %p141 = por %p139, %p140
    %p143 = scmp.ne.s32.totalorder %s128, %s142
    %p144 = scmp.eq.s32.totalorder %s20, 0
    %p145 = por %p143, %p144
    %s146 = ssub.s32 %s23, %s39
    %s147 = ssub.s32 %s24, %s35
    %s148 = sor.u32 %s146, %s147
    %p149 = scmp.eq.s32.totalorder %s148, 0
    %s151 = sadd.s32 %s150, 1
    %s152 = scalar_select %p149, %s150, %s151
    %p155 = pneg %p149
    %p156 = scmp.eq.s32.totalorder %s14, 23
    %p157 = por %p155, %p156
    %p158 = scmp.ne.s32.totalorder %s150, %s153
    %p159 = scmp.eq.s32.totalorder %s14, 0
    %p160 = por %p158, %p159
    %p161 = scmp.ne.s32.totalorder %s150, %s153
    %p162 = scmp.eq.s32.totalorder %s19, 23
    %p163 = por %p161, %p162
    %p164 = scmp.ne.s32.totalorder %s153, %s154
    %p165 = scmp.eq.s32.totalorder %s19, 0
    %p166 = por %p164, %p165
    %p167 = scmp.ne.s32.totalorder %s153, %s154
    %p168 = scmp.eq.s32.totalorder %s20, 23
    %p169 = por %p167, %p168
    %p171 = scmp.ne.s32.totalorder %s154, %s170
    %p172 = scmp.eq.s32.totalorder %s20, 0
    %p173 = por %p171, %p172
    %s174 = ssub.s32 %s23, %s39
    %s175 = ssub.s32 %s24, %s35
    %s176 = sor.u32 %s174, %s175
    %p177 = scmp.eq.s32.totalorder %s176, 0
    %s179 = sadd.s32 %s178, 1
    %s180 = scalar_select %p177, %s178, %s179
    %p183 = pneg %p177
    %p184 = scmp.eq.s32.totalorder %s14, 23
    %p185 = por %p183, %p184
    %p186 = scmp.ne.s32.totalorder %s178, %s181
    %p187 = scmp.eq.s32.totalorder %s14, 0
    %p188 = por %p186, %p187
    %p189 = scmp.ne.s32.totalorder %s178, %s181
    %p190 = scmp.eq.s32.totalorder %s19, 23
    %p191 = por %p189, %p190
    %p192 = scmp.ne.s32.totalorder %s181, %s182
    %p193 = scmp.eq.s32.totalorder %s19, 0
    %p194 = por %p192, %p193
    %p195 = scmp.ne.s32.totalorder %s181, %s182
    %p196 = scmp.eq.s32.totalorder %s20, 23
    %p197 = por %p195, %p196
    %p199 = scmp.ne.s32.totalorder %s182, %s198
    %p200 = scmp.eq.s32.totalorder %s20, 0
    %p201 = por %p199, %p200
    %s202 = ssub.s32 %s23, %s39
    %s203 = ssub.s32 %s21, %s47
    %s204 = sor.u32 %s202, %s203
    %s205 = ssub.s32 %s24, %s35
    %s206 = sor.u32 %s204, %s205
    %s207 = ssub.s32 %s22, %s43
    %s208 = sor.u32 %s206, %s207
    %p209 = scmp.eq.s32.totalorder %s208, 0
    %s211 = sadd.s32 %s210, 1
    %s212 = scalar_select %p209, %s210, %s211
    %p215 = pneg %p209
    %p216 = scmp.eq.s32.totalorder %s14, 23
    %p217 = por %p215, %p216
    %p218 = scmp.ne.s32.totalorder %s210, %s213
    %p219 = scmp.eq.s32.totalorder %s14, 0
    %p220 = por %p218, %p219
    %p221 = scmp.ne.s32.totalorder %s210, %s213
    %p222 = scmp.eq.s32.totalorder %s19, 23
    %p223 = por %p221, %p222
    %p224 = scmp.ne.s32.totalorder %s213, %s214
    %p225 = scmp.eq.s32.totalorder %s19, 0
    %p226 = por %p224, %p225
    %p227 = scmp.ne.s32.totalorder %s213, %s214
    %p228 = scmp.eq.s32.totalorder %s20, 23
    %p229 = por %p227, %p228
    %p231 = scmp.ne.s32.totalorder %s214, %s230
    %p232 = scmp.eq.s32.totalorder %s20, 0
    %p233 = por %p231, %p232
    %s234 = ssub.s32 %s21, %s47
    %s235 = ssub.s32 %s22, %s43
    %s236 = sor.u32 %s234, %s235
    %p237 = scmp.eq.s32.totalorder %s236, 0
    %s239 = sadd.s32 %s238, 1
    %s240 = scalar_select %p237, %s238, %s239
    %p243 = pneg %p237
    %p244 = scmp.eq.s32.totalorder %s14, 23
    %p245 = por %p243, %p244
    %p246 = scmp.ne.s32.totalorder %s238, %s241
    %p247 = scmp.eq.s32.totalorder %s14, 0
    %p248 = por %p246, %p247
    %p249 = scmp.ne.s32.totalorder %s238, %s241
    %p250 = scmp.eq.s32.totalorder %s19, 23
    %p251 = por %p249, %p250
    %p252 = scmp.ne.s32.totalorder %s241, %s242
    %p253 = scmp.eq.s32.totalorder %s19, 0
    %p254 = por %p252, %p253
    %p255 = scmp.ne.s32.totalorder %s241, %s242
    %p256 = scmp.eq.s32.totalorder %s20, 23
    %p257 = por %p255, %p256
    %p259 = scmp.ne.s32.totalorder %s242, %s258
    %p260 = scmp.eq.s32.totalorder %s20, 0
    %p261 = por %p259, %p260
    %p262 = scmp.le.s32.totalorder 1, %s14
    %p263 = scmp.lt.s32.totalorder %s14, 25
    %p264 = pnand %p262, %p263
    %p265 = pneg %p264
    // Predicated region
    $region9: #{lm_backbone_forward.10} parent=5 // pred_check
      _
    $region10: #{lm_backbone_forward.10} parent=5 // pred_check_branch
      %267 = sbr.rel (%p264) target = $region12
    $region11: #{lm_backbone_forward.10} parent=5 // pred_region
      %s268 = ssub.s32 %s14, 1
      // Predicated region
      $region13: #{lm_backbone_forward.10} parent=11 // pred_check
        %p269 = pneg %p117
      $region14: #{lm_backbone_forward.10} parent=11 // pred_check_branch
        %271 = sbr.rel (%p269) target = $region16
      $region15: #{lm_backbone_forward.10} parent=11 // pred_region
        _
      $region16: #{lm_backbone_forward.10} parent=11 // pred_fallthru
        _
      // Predicated region
      $region17: #{lm_backbone_forward.10} parent=11 // pred_check
        %p272 = pneg %p138
      $region18: #{lm_backbone_forward.10} parent=11 // pred_check_branch
        %274 = sbr.rel (%p272) target = $region20
      $region19: #{lm_backbone_forward.10} parent=11 // pred_region
        _
      $region20: #{lm_backbone_forward.10} parent=11 // pred_fallthru
        _
    $region12: #{lm_backbone_forward.10} parent=5 // pred_fallthru
      _
    %p275 = scmp.lt.s32.totalorder %s14, 24
    // Predicated region
    $region21: #{lm_backbone_forward.10} parent=5 // pred_check
      %p276 = pneg %p275
    $region22: #{lm_backbone_forward.10} parent=5 // pred_check_branch
      %278 = sbr.rel (%p276) target = $region24
    $region23: #{lm_backbone_forward.10} parent=5 // pred_region
      // Predicated region
      $region25: #{lm_backbone_forward.10} parent=23 // pred_check
        %p279 = pneg %p62
      $region26: #{lm_backbone_forward.10} parent=23 // pred_check_branch
        %281 = sbr.rel (%p279) target = $region28
      $region27: #{lm_backbone_forward.10} parent=23 // pred_region
        %p282 = scmp.lt.s32.totalorder %s21, 1
        %s283 = scalar_select %p282, %s21, 1
        %p284 = scmp.lt.s32.totalorder %s22, 0
        %s285 = scalar_select %p284, %s22, 0
        %s286 = sadd.s32 %s285, %s283
        %s287 = smul.addr %s286, 8
        %s288 = scalar_lea.vmem %s0, %s287
      $region28: #{lm_backbone_forward.10} parent=23 // pred_fallthru
        _
      // Predicated region
      $region29: #{lm_backbone_forward.10} parent=23 // pred_check
        %p289 = pneg %p90
      $region30: #{lm_backbone_forward.10} parent=23 // pred_check_branch
        %291 = sbr.rel (%p289) target = $region32
      $region31: #{lm_backbone_forward.10} parent=23 // pred_region
        %p292 = scmp.lt.s32.totalorder %s21, 1
        %s293 = scalar_select %p292, %s21, 1
        %p294 = scmp.lt.s32.totalorder %s22, 0
        %s295 = scalar_select %p294, %s22, 0
        %s296 = sadd.s32 %s295, %s293
        %s297 = smul.addr %s296, 8
        %s298 = scalar_lea.vmem %s1, %s297
      $region32: #{lm_backbone_forward.10} parent=23 // pred_fallthru
        _
      // Predicated region
      $region33: #{lm_backbone_forward.10} parent=23 // pred_check
        %p299 = pneg %p160
      $region34: #{lm_backbone_forward.10} parent=23 // pred_check_branch
        %301 = sbr.rel (%p299) target = $region36
      $region35: #{lm_backbone_forward.10} parent=23 // pred_region
        %p302 = scmp.lt.s32.totalorder %s23, 2
        %s303 = scalar_select %p302, %s23, 2
        %p304 = scmp.lt.s32.totalorder %s24, 3
        %s305 = scalar_select %p304, %s24, 3
        %s306 = smul.addr %s305, 4
        %s307 = smul.addr %s303, 16
        %s308 = sadd.s32 %s306, %s307
        %s309 = smul.addr %s308, 4
        %s310 = scalar_lea.vmem %s4, %s309
      $region36: #{lm_backbone_forward.10} parent=23 // pred_fallthru
        _
      // Predicated region
      $region37: #{lm_backbone_forward.10} parent=23 // pred_check
        %p311 = pneg %p188
      $region38: #{lm_backbone_forward.10} parent=23 // pred_check_branch
        %313 = sbr.rel (%p311) target = $region40
      $region39: #{lm_backbone_forward.10} parent=23 // pred_region
        %p314 = scmp.lt.s32.totalorder %s23, 2
        %s315 = scalar_select %p314, %s23, 2
        %p316 = scmp.lt.s32.totalorder %s24, 3
        %s317 = scalar_select %p316, %s24, 3
        %s318 = smul.addr %s315, 4
        %s319 = sadd.s32 %s317, %s318
        %s320 = scalar_lea.vmem %s5, %s319
      $region40: #{lm_backbone_forward.10} parent=23 // pred_fallthru
        _
    $region24: #{lm_backbone_forward.10} parent=5 // pred_fallthru
      _
    %p321 = scmp.le.s32.totalorder 1, %s14
    %p322 = scmp.lt.s32.totalorder %s14, 25
    %p323 = pnand %p321, %p322
    %p324 = pneg %p323
    // Predicated region
    $region41: #{lm_backbone_forward.10} parent=5 // pred_check
      _
    $region42: #{lm_backbone_forward.10} parent=5 // pred_check_branch
      %326 = sbr.rel (%p323) target = $region44
    $region43: #{lm_backbone_forward.10} parent=5 // pred_region
      %s327 = ssub.s32 %s14, 1
      %p328 = scmp.lt.s32.totalorder %s25, 1
      %s329 = scalar_select %p328, %s25, 1
      %p330 = scmp.lt.s32.totalorder %s26, 0
      %s331 = scalar_select %p330, %s26, 0
      %s332 = sadd.s32 %s331, %s329
      %s333 = smul.addr %s332, 8
      %s334 = scalar_lea.vmem %s0, %s333
      %p335 = pneg %p68
      %p336 = pneg %p65
      %p337 = scmp.lt.s32.totalorder %s25, 1
      %s338 = scalar_select %p337, %s25, 1
      %p339 = scmp.lt.s32.totalorder %s26, 0
      %s340 = scalar_select %p339, %s26, 0
      %s341 = sadd.s32 %s340, %s338
      %s342 = smul.addr %s341, 8
      %s343 = scalar_lea.vmem %s1, %s342
      %p344 = pneg %p96
      %p345 = pneg %p93
      %p346 = pneg %p117
      %p347 = pneg %p114
      %p348 = pneg %p138
      %p349 = pneg %p135
      %p350 = scmp.lt.s32.totalorder %s27, 2
      %s351 = scalar_select %p350, %s27, 2
      %p352 = scmp.lt.s32.totalorder %s28, 3
      %s353 = scalar_select %p352, %s28, 3
      %s354 = smul.addr %s353, 4
      %s355 = smul.addr %s351, 16
      %s356 = sadd.s32 %s354, %s355
      %s357 = smul.addr %s356, 4
      %s358 = scalar_lea.vmem %s4, %s357
      %p359 = pneg %p166
      %p360 = pneg %p163
      %p361 = scmp.lt.s32.totalorder %s27, 2
      %s362 = scalar_select %p361, %s27, 2
      %p363 = scmp.lt.s32.totalorder %s28, 3
      %s364 = scalar_select %p363, %s28, 3
      %s365 = smul.addr %s362, 4
      %s366 = sadd.s32 %s364, %s365
      %s367 = scalar_lea.vmem %s5, %s366
      %p368 = pneg %p194
      %p369 = pneg %p191
      %p370 = pneg %p226
      %p371 = pneg %p223
      %p372 = scmp.lt.s32.totalorder %s27, 2
      %s373 = scalar_select %p372, %s27, 2
      %p374 = scmp.lt.s32.totalorder %s25, 1
      %s375 = scalar_select %p374, %s25, 1
      %p376 = scmp.lt.s32.totalorder %s28, 3
      %s377 = scalar_select %p376, %s28, 3
      %p378 = scmp.lt.s32.totalorder %s26, 0
      %s379 = scalar_select %p378, %s26, 0
      %s380 = sadd.s32 %s379, %s377
      %s381 = smul.addr %s375, 4
      %s382 = sadd.s32 %s380, %s381
      %s383 = smul.addr %s373, 8
      %s384 = sadd.s32 %s382, %s383
      %s385 = smul.addr %s384, 4
      %s386 = scalar_lea.vmem %s6, %s385
      %p387 = pneg %p254
      %p388 = pneg %p251
      %p389 = scmp.lt.s32.totalorder %s25, 1
      %s390 = scalar_select %p389, %s25, 1
      %p391 = scmp.lt.s32.totalorder %s26, 0
      %s392 = scalar_select %p391, %s26, 0
      %s393 = sadd.s32 %s392, %s390
      %s394 = smul.addr %s393, 8
      %s395 = scalar_lea.vmem %s7, %s394
      %p396 = scmp.lt.s32.totalorder %s25, 1
      %s397 = scalar_select %p396, %s25, 1
      %p398 = scmp.lt.s32.totalorder %s26, 0
      %s399 = scalar_select %p398, %s26, 0
      %s400 = sadd.s32 %s399, %s397
      %s401 = smul.addr %s400, 8
      %s402 = scalar_lea.vmem %s0, %s401
      %p403 = scmp.lt.s32.totalorder %s25, 1
      %s404 = scalar_select %p403, %s25, 1
      %p405 = scmp.lt.s32.totalorder %s26, 0
      %s406 = scalar_select %p405, %s26, 0
      %s407 = sadd.s32 %s406, %s404
      %s408 = smul.addr %s407, 8
      %s409 = scalar_lea.vmem %s1, %s408
      %p410 = scmp.lt.s32.totalorder %s27, 2
      %s411 = scalar_select %p410, %s27, 2
      %p412 = scmp.lt.s32.totalorder %s28, 3
      %s413 = scalar_select %p412, %s28, 3
      %s414 = smul.addr %s413, 4
      %s415 = smul.addr %s411, 16
      %s416 = sadd.s32 %s414, %s415
      %s417 = smul.addr %s416, 4
      %s418 = scalar_lea.vmem %s4, %s417
      %p419 = scmp.lt.s32.totalorder %s27, 2
      %s420 = scalar_select %p419, %s27, 2
      %p421 = scmp.lt.s32.totalorder %s28, 3
      %s422 = scalar_select %p421, %s28, 3
      %s423 = smul.addr %s420, 4
      %s424 = sadd.s32 %s422, %s423
      %s425 = scalar_lea.vmem %s5, %s424
      %p426 = scmp.lt.s32.totalorder %s27, 2
      %s427 = scalar_select %p426, %s27, 2
      %p428 = scmp.lt.s32.totalorder %s25, 1
      %s429 = scalar_select %p428, %s25, 1
      %p430 = scmp.lt.s32.totalorder %s28, 3
      %s431 = scalar_select %p430, %s28, 3
      %p432 = scmp.lt.s32.totalorder %s26, 0
      %s433 = scalar_select %p432, %s26, 0
      %s434 = sadd.s32 %s433, %s431
      %s435 = smul.addr %s429, 4
      %s436 = sadd.s32 %s434, %s435
      %s437 = smul.addr %s427, 8
      %s438 = sadd.s32 %s436, %s437
      %s439 = smul.addr %s438, 4
      %s440 = scalar_lea.vmem %s6, %s439
      %p441 = scmp.lt.s32.totalorder %s25, 1
      %s442 = scalar_select %p441, %s25, 1
      %p443 = scmp.lt.s32.totalorder %s26, 0
      %s444 = scalar_select %p443, %s26, 0
      %s445 = sadd.s32 %s444, %s442
      %s446 = smul.addr %s445, 8
      %s447 = scalar_lea.vmem %s7, %s446
      %p449 = scmp.eq.s32.totalorder %s27, 0
      %p450 = scmp.eq.s32.totalorder %s28, 0
      %p451 = pnand %p449, %p450
      %p452 = pneg %p451
      // Predicated region
      $region45: #{lm_backbone_forward.10} parent=43 // pred_check
        _
      $region46: #{lm_backbone_forward.10} parent=43 // pred_check_branch
        %454 = sbr.rel (%p451) target = $region48
      $region47: #{lm_backbone_forward.10} parent=43 // pred_region
        %v455 = vld [vmem:[%s402] sm:$0xff]
        %v456 = vld [vmem:[%s409] sm:$0xff]
        %v457 = vadd.f32 %v455, %v456
        %vm458 = vcmask 261120
        %459 = vst.msk [vmem:[%s447] sm:$0xff] %vm458, %v457
        %v460 = vld [vmem:[%s2] sm:$0x1]
        %v461 = vld [vmem:[%s3] sm:$0x1]
        %v462 = vsel %vm458, %v457, 0.0
        %463 = vadd.xlane.f32.xlu0 %v462
        %v464 = vpop.xlane.xlu0 %463
        %v465 = vrcp.pop 32.0
        %v466 = vmul.f32 %v464, %v465
        %v467 = vsub.f32 %v457, %v466
        %v468 = vmul.f32 %v467, %v467
        %v469 = vsel %vm458, %v468, 0.0
        %470 = vadd.xlane.f32.xlu0 %v469
        %v471 = vpop.xlane.xlu0 %470
        %v472 = vmul.f32 %v471, %v465
        %v473 = vadd.f32 %v472, 1e-05
        %v474 = vrsqrt.pop %v473
        %v475 = vmul.f32 %v467, %v474
        %v477 = vlaneseq
        %v478 = vshrl.u32 %v477, 7
        %v479 = vsub.s32 0, %v478
        %v480 = vrot.slane %v460, %v479
        %v482 = vmul.f32 %v475, %v480
        %v484 = vlaneseq
        %v485 = vshrl.u32 %v484, 7
        %v486 = vsub.s32 0, %v485
        %v487 = vrot.slane %v461, %v486
        %v489 = vadd.f32 %v482, %v487
        %v490 = vpack.c.bf16 %v489, %v489
        %vm491 = vcmask 257024
        %492 = vst.msk [vmem:[#allocation2] sm:$0xf] %vm491, %v490
      $region48: #{lm_backbone_forward.10} parent=43 // pred_fallthru
        _
      %v493 = vld [vmem:[#allocation2] sm:$0xf]
      %v494 = vld [vmem:[%s418] sm:$0xf]
      %v495 = vld [vmem:[%s418 + $0x4] sm:$0xf]
      %v496 = vld [vmem:[%s418 + $0x8] sm:$0xf]
      %v497 = vld [vmem:[%s418 + $0xc] sm:$0xf]
      %v498 = vld [vmem:[%s425] sm:$0x1]
      %v500 = vlaneseq
      %v501 = vshrl.u32 %v500, 7
      %v502 = vsub.s32 0, %v501
      %v503 = vrot.slane %v498, %v502
      %v509 = vunpack.c.l.b16 %v494
      %v510 = vunpack.c.l.b16 %v495
      %v511 = vunpack.c.l.b16 %v496
      %v512 = vunpack.c.l.b16 %v497
      %v513 = vpack.c.b16 %v510, %v509
      %v514 = vpack.c.b16 %v512, %v511
      %vm517 = vcmask 261120
      %v519 = vsel %vm517, %v493, 0
      %521 = vmatprep.subr.bf16.mxu0 0
      %522 = vmatpush1.bf16.msra.mxu0 %v513
      %523 = vmatprep.subr.bf16.mxu0 0
      %524 = vmatpush1.bf16.msra.mxu0 %v514
      %525 = vmatprep.subr.bf16.mxu0 0
      %526 = vmatpush1.bf16.msra.mxu0 0
      %527 = vmatprep.subr.bf16.mxu0 0
      %528 = vmatpush1.bf16.msra.mxu0 0
      %529 = vmatprep.subr.bf16.mxu0 0
      %530 = vmatpush1.bf16.msra.mxu0 0
      %531 = vmatprep.subr.bf16.mxu0 0
      %532 = vmatpush1.bf16.msra.mxu0 0
      %533 = vmatprep.subr.bf16.mxu0 0
      %534 = vmatpush1.bf16.msra.mxu0 0
      %535 = vmatprep.subr.bf16.mxu0 0
      %536 = vmatpush1.bf16.msra.mxu0 0
      %537 = vmatprep.subr.bf16.mxu0 0
      %538 = vmatpush1.bf16.msra.mxu0 0
      %539 = vmatprep.subr.bf16.mxu0 0
      %540 = vmatpush1.bf16.msra.mxu0 0
      %541 = vmatprep.subr.bf16.mxu0 0
      %542 = vmatpush1.bf16.msra.mxu0 0
      %543 = vmatprep.subr.bf16.mxu0 0
      %544 = vmatpush1.bf16.msra.mxu0 0
      %545 = vmatprep.subr.bf16.mxu0 0
      %546 = vmatpush1.bf16.msra.mxu0 0
      %547 = vmatprep.subr.bf16.mxu0 0
      %548 = vmatpush1.bf16.msra.mxu0 0
      %549 = vmatprep.subr.bf16.mxu0 0
      %550 = vmatpush1.bf16.msra.mxu0 0
      %551 = vmatprep.subr.bf16.mxu0 0
      %552 = vmatpush1.bf16.msra.mxu0 0
      %553 = vmatprep.mubr.bf16.mxu0 0
      %554 = vmatmul.mubr.bf16.gmra.mrb[0].mxu0 %v519
      %v555 = vpop.f32.mrb[0].mxu0
      %v556 = vadd.f32 %v503, %v555
      %v557 = vpop.f32.mrb[0].mxu0
      %v558 = vpop.f32.mrb[0].mxu0
      %v559 = vpop.f32.mrb[0].mxu0
      %560 = vdwg.mxu0
      %v561 = vpack.c.bf16 %v556, %v556
      %vm562 = vcmask 60416
      %563 = vst.msk [vmem:[%s440] sm:$0xf] %vm562, %v561
      %p564 = scmp.lt.s32.totalorder %s27, 2
      %s565 = scalar_select %p564, %s27, 2
      %p566 = scmp.lt.s32.totalorder %s25, 1
      %s567 = scalar_select %p566, %s25, 1
      %p568 = scmp.lt.s32.totalorder %s28, 3
      %s569 = scalar_select %p568, %s28, 3
      %p570 = scmp.lt.s32.totalorder %s26, 0
      %s571 = scalar_select %p570, %s26, 0
      %s572 = sadd.s32 %s571, %s569
      %s573 = smul.addr %s567, 4
      %s574 = sadd.s32 %s572, %s573
      %s575 = smul.addr %s565, 8
      %s576 = sadd.s32 %s574, %s575
      %s577 = smul.addr %s576, 4
      %s578 = scalar_lea.vmem %s6, %s577
      %p579 = scmp.lt.s32.totalorder %s25, 1
      %s580 = scalar_select %p579, %s25, 1
      %p581 = scmp.lt.s32.totalorder %s26, 0
      %s582 = scalar_select %p581, %s26, 0
      %s583 = sadd.s32 %s582, %s580
      %s584 = smul.addr %s583, 8
      %s585 = scalar_lea.vmem %s7, %s584
      // Predicated region
      $region49: #{lm_backbone_forward.10} parent=43 // pred_check
        %p586 = pneg %p223
      $region50: #{lm_backbone_forward.10} parent=43 // pred_check_branch
        %588 = sbr.rel (%p586) target = $region52
      $region51: #{lm_backbone_forward.10} parent=43 // pred_region
        _
      $region52: #{lm_backbone_forward.10} parent=43 // pred_fallthru
        _
      // Predicated region
      $region53: #{lm_backbone_forward.10} parent=43 // pred_check
        %p589 = pneg %p251
      $region54: #{lm_backbone_forward.10} parent=43 // pred_check_branch
        %591 = sbr.rel (%p589) target = $region56
      $region55: #{lm_backbone_forward.10} parent=43 // pred_region
        _
      $region56: #{lm_backbone_forward.10} parent=43 // pred_fallthru
        _
    $region44: #{lm_backbone_forward.10} parent=5 // pred_fallthru
      _
    %p592 = scmp.le.s32.totalorder 2, %s14
    // Predicated region
    $region57: #{lm_backbone_forward.10} parent=5 // pred_check
      %p593 = pneg %p592
    $region58: #{lm_backbone_forward.10} parent=5 // pred_check_branch
      %595 = sbr.rel (%p593) target = $region60
    $region59: #{lm_backbone_forward.10} parent=5 // pred_region
      %s596 = ssub.s32 %s14, 2
      // Predicated region
      $region61: #{lm_backbone_forward.10} parent=59 // pred_check
        %p597 = pneg %p229
      $region62: #{lm_backbone_forward.10} parent=59 // pred_check_branch
        %599 = sbr.rel (%p597) target = $region64
      $region63: #{lm_backbone_forward.10} parent=59 // pred_region
        %p600 = scmp.lt.s32.totalorder %s31, 2
        %s601 = scalar_select %p600, %s31, 2
        %p602 = scmp.lt.s32.totalorder %s29, 1
        %s603 = scalar_select %p602, %s29, 1
        %p604 = scmp.lt.s32.totalorder %s32, 3
        %s605 = scalar_select %p604, %s32, 3
        %p606 = scmp.lt.s32.totalorder %s30, 0
        %s607 = scalar_select %p606, %s30, 0
        %s608 = sadd.s32 %s607, %s605
        %s609 = smul.addr %s603, 4
        %s610 = sadd.s32 %s608, %s609
        %s611 = smul.addr %s601, 8
        %s612 = sadd.s32 %s610, %s611
        %s613 = smul.addr %s612, 4
        %s614 = scalar_lea.vmem %s6, %s613
      $region64: #{lm_backbone_forward.10} parent=59 // pred_fallthru
        _
      // Predicated region
      $region65: #{lm_backbone_forward.10} parent=59 // pred_check
        %p615 = pneg %p257
      $region66: #{lm_backbone_forward.10} parent=59 // pred_check_branch
        %617 = sbr.rel (%p615) target = $region68
      $region67: #{lm_backbone_forward.10} parent=59 // pred_region
        %p618 = scmp.lt.s32.totalorder %s29, 1
        %s619 = scalar_select %p618, %s29, 1
        %p620 = scmp.lt.s32.totalorder %s30, 0
        %s621 = scalar_select %p620, %s30, 0
        %s622 = sadd.s32 %s621, %s619
        %s623 = smul.addr %s622, 8
        %s624 = scalar_lea.vmem %s7, %s623
      $region68: #{lm_backbone_forward.10} parent=59 // pred_fallthru
        _
    $region60: #{lm_backbone_forward.10} parent=5 // pred_fallthru
      _
  $region6: #{lm_backbone_forward.10} parent=0 // loop_footer
    %s18 = sadd.s32 1, %s14
  $region7: #{lm_backbone_forward.10} parent=0 // loop_footer_branch
    %13 = sbr.rel target = $region3
  $region8: #{lm_backbone_forward.10} parent=0 // loop_exit
    _

// kernel: lm_backbone_forward.8
$region0: #{lm_backbone_forward.8}
  #allocation0 [shape = 'u32[]', space=smem, size = 0x4, offset = 0x4, fixed_abs, tag = 'smem constant byte address 0x4 - core index']
  #allocation1 [shape = 'u32[144,128]{1,0:T(1,128)}', space=vmem, size = 0x12000, scoped, tag = 'internal scratch']
  #allocation2 [shape = 'f32[8,1]{1,0:T(8,128)}', space=vmem, size = 0x1000, scoped, tag = 'scratch operand']
  #allocation3 [shape = 'f32[8,1]{1,0:T(8,128)}', space=vmem, size = 0x1000, scoped, tag = 'scratch operand']
  #allocation4 [shape = 'f32[8,8]{1,0:T(8,128)}', space=vmem, size = 0x1000, scoped, tag = 'scratch operand']
  #allocation5 [shape = 'f32[8,32]{1,0:T(8,128)}', space=vmem, size = 0x1000, scoped, tag = 'scratch operand']
  %s0 = inlined_call_operand.vmem [shape: bf16[3,2,4,8,8], index: 0, kind: input, shape index: {}, may-alias: {0,1,2}]
  %s1 = inlined_call_operand.vmem [shape: bf16[3,2,4,8,8], index: 1, kind: input, shape index: {}, may-alias: {0,1,2}]
  %s2 = inlined_call_operand.vmem [shape: bf16[3,2,4,8,8], index: 2, kind: input, shape index: {}, may-alias: {0,1,2}]
  %s3 = inlined_call_operand.vmem [shape: f32[2,8,32], index: 3, kind: input, shape index: {}, may-alias: {3,9}]
  %s4 = inlined_call_operand.vmem [shape: bf16[4,8,32], index: 4, kind: input, shape index: {}]
  %s5 = inlined_call_operand.vmem [shape: f32[1,32], index: 5, kind: input, shape index: {}]
  %s6 = inlined_call_operand.vmem [shape: f32[1,32], index: 6, kind: input, shape index: {}]
  %s7 = inlined_call_operand.vmem [shape: f32[1,32], index: 7, kind: input, shape index: {}]
  %s8 = inlined_call_operand.vmem [shape: bf16[2,8,32], index: 8, kind: output, shape index: {0}]
  %s9 = inlined_call_operand.vmem [shape: f32[2,8,32], index: 9, kind: output, shape index: {1}, may-alias: {3,9}]
  %10 = xla_tuple %s8, %s9
  %s11 = sld [smem:[#allocation0]]
  $region93: #{lm_backbone_forward.8} parent=0
    _
  %s13 = ssub.s32 1, %s11
  %s14 = scalar_select 0, %s13, %s11
  loop: start=0, step=1, limit=10
  $region2: #{lm_backbone_forward.8} parent=0 // loop_pre_header
    _
  $region3: #{lm_backbone_forward.8} parent=0 // loop_header
    %s16 = sphi 0, %s20
    %p17 = scmp.ge.s32.totalorder %s16, 10
    %s23 = sphi 0, %s49
    %s24 = sphi 0, %s45
    %s25 = sphi 0, %s41
    %s26 = sphi 0, %s37
    %s27 = sphi 0, %s23
    %s28 = sphi 0, %s24
    %s29 = sphi 0, %s25
    %s30 = sphi 0, %s26
    %s31 = sphi 0, %s27
    %s32 = sphi 0, %s28
    %s33 = sphi 0, %s29
    %s34 = sphi 0, %s30
    %s56 = sphi 0, %s58
    %s59 = sphi 0, %s56
    %s60 = sphi 0, %s59
    %s76 = sphi 0, %s60
    %s90 = sphi 0, %s92
    %s93 = sphi 0, %s90
    %s94 = sphi 0, %s93
    %s110 = sphi 0, %s94
    %s124 = sphi 0, %s126
    %s127 = sphi 0, %s124
    %s128 = sphi 0, %s127
    %s144 = sphi 0, %s128
    %s152 = sphi 0, %s154
    %s155 = sphi 0, %s152
    %s156 = sphi 0, %s155
    %s172 = sphi 0, %s156
    %s178 = sphi 0, %s180
    %s181 = sphi 0, %s178
    %s182 = sphi 0, %s181
    %s198 = sphi 0, %s182
    %s202 = sphi 0, %s202
    %s204 = sphi 0, %s202
    %s205 = sphi 0, %s204
    %s219 = sphi 0, %s205
    %s223 = sphi 0, %s223
    %s225 = sphi 0, %s223
    %s226 = sphi 0, %s225
    %s240 = sphi 0, %s226
    %s244 = sphi 0, %s244
    %s246 = sphi 0, %s244
    %s247 = sphi 0, %s246
    %s261 = sphi 0, %s247
    %s269 = sphi 0, %s271
    %s272 = sphi 0, %s269
    %s273 = sphi 0, %s272
    %s289 = sphi 0, %s273
    %s297 = sphi 0, %s299
    %s300 = sphi 0, %s297
    %s301 = sphi 0, %s300
    %s317 = sphi 0, %s301
  $region4: #{lm_backbone_forward.8} parent=0 // loop_header_branch
    %19 = sbr.rel (%p17) target = $region8
  $region5: #{lm_backbone_forward.8} parent=0 // loop_body
    %s21 = ssub.s32 %s16, 1
    %s22 = ssub.s32 %s16, 2
    %s35 = sadd.s32 1, %s26
    %p36 = scmp.ge.s32.totalorder %s35, 1
    %s37 = scalar_select %p36, 0, %s35
    %s38 = sadd.s32 1, %s25
    %s39 = scalar_select %p36, %s38, %s25
    %p40 = scmp.ge.s32.totalorder %s39, 4
    %s41 = scalar_select %p40, 0, %s39
    %s42 = sadd.s32 1, %s24
    %s43 = scalar_select %p40, %s42, %s24
    %p44 = scmp.ge.s32.totalorder %s43, 1
    %s45 = scalar_select %p44, 0, %s43
    %s46 = sadd.s32 1, %s23
    %s47 = scalar_select %p44, %s46, %s23
    %p48 = scmp.ge.s32.totalorder %s47, 2
    %s49 = scalar_select %p48, 0, %s47
    %s50 = ssub.s32 %s23, %s49
    %s51 = ssub.s32 %s25, %s41
    %s52 = sor.u32 %s50, %s51
    %s53 = ssub.s32 %s24, %s45
    %s54 = sor.u32 %s52, %s53
    %p55 = scmp.eq.s32.totalorder %s54, 0
    %s57 = sadd.s32 %s56, 1
    %s58 = scalar_select %p55, %s56, %s57
    %p61 = pneg %p55
    %p62 = scmp.eq.s32.totalorder %s16, 7
    %p63 = por %p61, %p62
    %p64 = scmp.ne.s32.totalorder %s56, %s59
    %p65 = scmp.eq.s32.totalorder %s16, 0
    %p66 = por %p64, %p65
    %p67 = scmp.ne.s32.totalorder %s56, %s59
    %p68 = scmp.eq.s32.totalorder %s21, 7
    %p69 = por %p67, %p68
    %p70 = scmp.ne.s32.totalorder %s59, %s60
    %p71 = scmp.eq.s32.totalorder %s21, 0
    %p72 = por %p70, %p71
    %p73 = scmp.ne.s32.totalorder %s59, %s60
    %p74 = scmp.eq.s32.totalorder %s22, 7
    %p75 = por %p73, %p74
    %p77 = scmp.ne.s32.totalorder %s60, %s76
    %p78 = scmp.eq.s32.totalorder %s22, 0
    %p79 = por %p77, %p78
    %p80 = scmp.lt.s32.totalorder %s26, %s24
    %s81 = scalar_select %p80, %s26, %s24
    %p82 = scmp.lt.s32.totalorder %s37, %s45
    %s83 = scalar_select %p82, %s37, %s45
    %s84 = ssub.s32 %s23, %s49
    %s85 = ssub.s32 %s25, %s41
    %s86 = sor.u32 %s84, %s85
    %s87 = ssub.s32 %s81, %s83
    %s88 = sor.u32 %s86, %s87
    %p89 = scmp.eq.s32.totalorder %s88, 0
    %s91 = sadd.s32 %s90, 1
    %s92 = scalar_select %p89, %s90, %s91
    %p95 = pneg %p89
    %p96 = scmp.eq.s32.totalorder %s16, 7
    %p97 = por %p95, %p96
    %p98 = scmp.ne.s32.totalorder %s90, %s93
    %p99 = scmp.eq.s32.totalorder %s16, 0
    %p100 = por %p98, %p99
    %p101 = scmp.ne.s32.totalorder %s90, %s93
    %p102 = scmp.eq.s32.totalorder %s21, 7
    %p103 = por %p101, %p102
    %p104 = scmp.ne.s32.totalorder %s93, %s94
    %p105 = scmp.eq.s32.totalorder %s21, 0
    %p106 = por %p104, %p105
    %p107 = scmp.ne.s32.totalorder %s93, %s94
    %p108 = scmp.eq.s32.totalorder %s22, 7
    %p109 = por %p107, %p108
    %p111 = scmp.ne.s32.totalorder %s94, %s110
    %p112 = scmp.eq.s32.totalorder %s22, 0
    %p113 = por %p111, %p112
    %p114 = scmp.lt.s32.totalorder %s26, %s24
    %s115 = scalar_select %p114, %s26, %s24
    %p116 = scmp.lt.s32.totalorder %s37, %s45
    %s117 = scalar_select %p116, %s37, %s45
    %s118 = ssub.s32 %s23, %s49
    %s119 = ssub.s32 %s25, %s41
    %s120 = sor.u32 %s118, %s119
    %s121 = ssub.s32 %s115, %s117
    %s122 = sor.u32 %s120, %s121
    %p123 = scmp.eq.s32.totalorder %s122, 0
    %s125 = sadd.s32 %s124, 1
    %s126 = scalar_select %p123, %s124, %s125
    %p129 = pneg %p123
    %p130 = scmp.eq.s32.totalorder %s16, 7
    %p131 = por %p129, %p130
    %p132 = scmp.ne.s32.totalorder %s124, %s127
    %p133 = scmp.eq.s32.totalorder %s16, 0
    %p134 = por %p132, %p133
    %p135 = scmp.ne.s32.totalorder %s124, %s127
    %p136 = scmp.eq.s32.totalorder %s21, 7
    %p137 = por %p135, %p136
    %p138 = scmp.ne.s32.totalorder %s127, %s128
    %p139 = scmp.eq.s32.totalorder %s21, 0
    %p140 = por %p138, %p139
    %p141 = scmp.ne.s32.totalorder %s127, %s128
    %p142 = scmp.eq.s32.totalorder %s22, 7
    %p143 = por %p141, %p142
    %p145 = scmp.ne.s32.totalorder %s128, %s144
    %p146 = scmp.eq.s32.totalorder %s22, 0
    %p147 = por %p145, %p146
    %s148 = ssub.s32 %s23, %s49
    %s149 = ssub.s32 %s24, %s45
    %s150 = sor.u32 %s148, %s149
    %p151 = scmp.eq.s32.totalorder %s150, 0
    %s153 = sadd.s32 %s152, 1
    %s154 = scalar_select %p151, %s152, %s153
    %p157 = pneg %p151
    %p158 = scmp.eq.s32.totalorder %s16, 7
    %p159 = por %p157, %p158
    %p160 = scmp.ne.s32.totalorder %s152, %s155
    %p161 = scmp.eq.s32.totalorder %s16, 0
    %p162 = por %p160, %p161
    %p163 = scmp.ne.s32.totalorder %s152, %s155
    %p164 = scmp.eq.s32.totalorder %s21, 7
    %p165 = por %p163, %p164
    %p166 = scmp.ne.s32.totalorder %s155, %s156
    %p167 = scmp.eq.s32.totalorder %s21, 0
    %p168 = por %p166, %p167
    %p169 = scmp.ne.s32.totalorder %s155, %s156
    %p170 = scmp.eq.s32.totalorder %s22, 7
    %p171 = por %p169, %p170
    %p173 = scmp.ne.s32.totalorder %s156, %s172
    %p174 = scmp.eq.s32.totalorder %s22, 0
    %p175 = por %p173, %p174
    %s176 = ssub.s32 %s25, %s41
    %p177 = scmp.eq.s32.totalorder %s176, 0
    %s179 = sadd.s32 %s178, 1
    %s180 = scalar_select %p177, %s178, %s179
    %p183 = pneg %p177
    %p184 = scmp.eq.s32.totalorder %s16, 7
    %p185 = por %p183, %p184
    %p186 = scmp.ne.s32.totalorder %s178, %s181
    %p187 = scmp.eq.s32.totalorder %s16, 0
    %p188 = por %p186, %p187
    %p189 = scmp.ne.s32.totalorder %s178, %s181
    %p190 = scmp.eq.s32.totalorder %s21, 7
    %p191 = por %p189, %p190
    %p192 = scmp.ne.s32.totalorder %s181, %s182
    %p193 = scmp.eq.s32.totalorder %s21, 0
    %p194 = por %p192, %p193
    %p195 = scmp.ne.s32.totalorder %s181, %s182
    %p196 = scmp.eq.s32.totalorder %s22, 7
    %p197 = por %p195, %p196
    %p199 = scmp.ne.s32.totalorder %s182, %s198
    %p200 = scmp.eq.s32.totalorder %s22, 0
    %p201 = por %p199, %p200
    %s203 = sadd.s32 %s202, 1
    %p206 = scmp.eq.s32.totalorder %s16, 7
    %p207 = scmp.ne.s32.totalorder %s202, %s204
    %p208 = scmp.eq.s32.totalorder %s16, 0
    %p209 = por %p207, %p208
    %p210 = scmp.ne.s32.totalorder %s202, %s204
    %p211 = scmp.eq.s32.totalorder %s21, 7
    %p212 = por %p210, %p211
    %p213 = scmp.ne.s32.totalorder %s204, %s205
    %p214 = scmp.eq.s32.totalorder %s21, 0
    %p215 = por %p213, %p214
    %p216 = scmp.ne.s32.totalorder %s204, %s205
    %p217 = scmp.eq.s32.totalorder %s22, 7
    %p218 = por %p216, %p217
    %p220 = scmp.ne.s32.totalorder %s205, %s219
    %p221 = scmp.eq.s32.totalorder %s22, 0
    %p222 = por %p220, %p221
    %s224 = sadd.s32 %s223, 1
    %p227 = scmp.eq.s32.totalorder %s16, 7
    %p228 = scmp.ne.s32.totalorder %s223, %s225
    %p229 = scmp.eq.s32.totalorder %s16, 0
    %p230 = por %p228, %p229
    %p231 = scmp.ne.s32.totalorder %s223, %s225
    %p232 = scmp.eq.s32.totalorder %s21, 7
    %p233 = por %p231, %p232
    %p234 = scmp.ne.s32.totalorder %s225, %s226
    %p235 = scmp.eq.s32.totalorder %s21, 0
    %p236 = por %p234, %p235
    %p237 = scmp.ne.s32.totalorder %s225, %s226
    %p238 = scmp.eq.s32.totalorder %s22, 7
    %p239 = por %p237, %p238
    %p241 = scmp.ne.s32.totalorder %s226, %s240
    %p242 = scmp.eq.s32.totalorder %s22, 0
    %p243 = por %p241, %p242
    %s245 = sadd.s32 %s244, 1
    %p248 = scmp.eq.s32.totalorder %s16, 7
    %p249 = scmp.ne.s32.totalorder %s244, %s246
    %p250 = scmp.eq.s32.totalorder %s16, 0
    %p251 = por %p249, %p250
    %p252 = scmp.ne.s32.totalorder %s244, %s246
    %p253 = scmp.eq.s32.totalorder %s21, 7
    %p254 = por %p252, %p253
    %p255 = scmp.ne.s32.totalorder %s246, %s247
    %p256 = scmp.eq.s32.totalorder %s21, 0
    %p257 = por %p255, %p256
    %p258 = scmp.ne.s32.totalorder %s246, %s247
    %p259 = scmp.eq.s32.totalorder %s22, 7
    %p260 = por %p258, %p259
    %p262 = scmp.ne.s32.totalorder %s247, %s261
    %p263 = scmp.eq.s32.totalorder %s22, 0
    %p264 = por %p262, %p263
    %s265 = ssub.s32 %s23, %s49
    %s266 = ssub.s32 %s24, %s45
    %s267 = sor.u32 %s265, %s266
    %p268 = scmp.eq.s32.totalorder %s267, 0
    %s270 = sadd.s32 %s269, 1
    %s271 = scalar_select %p268, %s269, %s270
    %p274 = pneg %p268
    %p275 = scmp.eq.s32.totalorder %s16, 7
    %p276 = por %p274, %p275
    %p277 = scmp.ne.s32.totalorder %s269, %s272
    %p278 = scmp.eq.s32.totalorder %s16, 0
    %p279 = por %p277, %p278
    %p280 = scmp.ne.s32.totalorder %s269, %s272
    %p281 = scmp.eq.s32.totalorder %s21, 7
    %p282 = por %p280, %p281
    %p283 = scmp.ne.s32.totalorder %s272, %s273
    %p284 = scmp.eq.s32.totalorder %s21, 0
    %p285 = por %p283, %p284
    %p286 = scmp.ne.s32.totalorder %s272, %s273
    %p287 = scmp.eq.s32.totalorder %s22, 7
    %p288 = por %p286, %p287
    %p290 = scmp.ne.s32.totalorder %s273, %s289
    %p291 = scmp.eq.s32.totalorder %s22, 0
    %p292 = por %p290, %p291
    %s293 = ssub.s32 %s23, %s49
    %s294 = ssub.s32 %s24, %s45
    %s295 = sor.u32 %s293, %s294
    %p296 = scmp.eq.s32.totalorder %s295, 0
    %s298 = sadd.s32 %s297, 1
    %s299 = scalar_select %p296, %s297, %s298
    %p302 = pneg %p296
    %p303 = scmp.eq.s32.totalorder %s16, 7
    %p304 = por %p302, %p303
    %p305 = scmp.ne.s32.totalorder %s297, %s300
    %p306 = scmp.eq.s32.totalorder %s16, 0
    %p307 = por %p305, %p306
    %p308 = scmp.ne.s32.totalorder %s297, %s300
    %p309 = scmp.eq.s32.totalorder %s21, 7
    %p310 = por %p308, %p309
    %p311 = scmp.ne.s32.totalorder %s300, %s301
    %p312 = scmp.eq.s32.totalorder %s21, 0
    %p313 = por %p311, %p312
    %p314 = scmp.ne.s32.totalorder %s300, %s301
    %p315 = scmp.eq.s32.totalorder %s22, 7
    %p316 = por %p314, %p315
    %p318 = scmp.ne.s32.totalorder %s301, %s317
    %p319 = scmp.eq.s32.totalorder %s22, 0
    %p320 = por %p318, %p319
    %p321 = scmp.le.s32.totalorder 1, %s16
    %p322 = scmp.lt.s32.totalorder %s16, 9
    %p323 = pnand %p321, %p322
    %p324 = pneg %p323
    // Predicated region
    $region9: #{lm_backbone_forward.8} parent=5 // pred_check
      _
    $region10: #{lm_backbone_forward.8} parent=5 // pred_check_branch
      %326 = sbr.rel (%p323) target = $region12
    $region11: #{lm_backbone_forward.8} parent=5 // pred_region
      %s327 = ssub.s32 %s16, 1
      // Predicated region
      $region13: #{lm_backbone_forward.8} parent=11 // pred_check
        %p328 = pneg %p215
      $region14: #{lm_backbone_forward.8} parent=11 // pred_check_branch
        %330 = sbr.rel (%p328) target = $region16
      $region15: #{lm_backbone_forward.8} parent=11 // pred_region
        _
      $region16: #{lm_backbone_forward.8} parent=11 // pred_fallthru
        _
      // Predicated region
      $region17: #{lm_backbone_forward.8} parent=11 // pred_check
        %p331 = pneg %p236
      $region18: #{lm_backbone_forward.8} parent=11 // pred_check_branch
        %333 = sbr.rel (%p331) target = $region20
      $region19: #{lm_backbone_forward.8} parent=11 // pred_region
        _
      $region20: #{lm_backbone_forward.8} parent=11 // pred_fallthru
        _
      // Predicated region
      $region21: #{lm_backbone_forward.8} parent=11 // pred_check
        %p334 = pneg %p257
      $region22: #{lm_backbone_forward.8} parent=11 // pred_check_branch
        %336 = sbr.rel (%p334) target = $region24
      $region23: #{lm_backbone_forward.8} parent=11 // pred_region
        _
      $region24: #{lm_backbone_forward.8} parent=11 // pred_fallthru
        _
    $region12: #{lm_backbone_forward.8} parent=5 // pred_fallthru
      _
    %p337 = scmp.lt.s32.totalorder %s16, 8
    // Predicated region
    $region25: #{lm_backbone_forward.8} parent=5 // pred_check
      %p338 = pneg %p337
    $region26: #{lm_backbone_forward.8} parent=5 // pred_check_branch
      %340 = sbr.rel (%p338) target = $region28
    $region27: #{lm_backbone_forward.8} parent=5 // pred_region
      // Predicated region
      $region29: #{lm_backbone_forward.8} parent=27 // pred_check
        %p341 = pneg %p66
      $region30: #{lm_backbone_forward.8} parent=27 // pred_check_branch
        %343 = sbr.rel (%p341) target = $region32
      $region31: #{lm_backbone_forward.8} parent=27 // pred_region
        %p344 = scmp.lt.s32.totalorder %s23, 1
        %s345 = scalar_select %p344, %s23, 1
        %p346 = scmp.lt.s32.totalorder %s25, 3
        %s347 = scalar_select %p346, %s25, 3
        %p348 = scmp.lt.s32.totalorder %s24, 0
        %s349 = scalar_select %p348, %s24, 0
        %s350 = sadd.s32 %s349, %s347
        %s351 = smul.addr %s345, 4
        %s352 = sadd.s32 %s350, %s351
        %s353 = smul.addr %s352, 4
        %s354 = scalar_lea.vmem %s0, %s353
      $region32: #{lm_backbone_forward.8} parent=27 // pred_fallthru
        _
      // Predicated region
      $region33: #{lm_backbone_forward.8} parent=27 // pred_check
        %p355 = pneg %p100
      $region34: #{lm_backbone_forward.8} parent=27 // pred_check_branch
        %357 = sbr.rel (%p355) target = $region36
      $region35: #{lm_backbone_forward.8} parent=27 // pred_region
        %p358 = scmp.lt.s32.totalorder %s26, %s24
        %s359 = scalar_select %p358, %s26, %s24
        %p360 = scmp.lt.s32.totalorder %s23, 1
        %s361 = scalar_select %p360, %s23, 1
        %p362 = scmp.lt.s32.totalorder %s25, 3
        %s363 = scalar_select %p362, %s25, 3
        %p364 = scmp.lt.s32.totalorder %s359, 0
        %s365 = scalar_select %p364, %s359, 0
        %s366 = sadd.s32 %s365, %s363
        %s367 = smul.addr %s361, 4
        %s368 = sadd.s32 %s366, %s367
        %s369 = sadd.s32 %s368, 8
        %s370 = smul.addr %s369, 4
        %s371 = scalar_lea.vmem %s1, %s370
        %p372 = scmp.lt.s32.totalorder %s26, %s24
        %s373 = scalar_select %p372, %s26, %s24
      $region36: #{lm_backbone_forward.8} parent=27 // pred_fallthru
        _
      // Predicated region
      $region37: #{lm_backbone_forward.8} parent=27 // pred_check
        %p374 = pneg %p134
      $region38: #{lm_backbone_forward.8} parent=27 // pred_check_branch
        %376 = sbr.rel (%p374) target = $region40
      $region39: #{lm_backbone_forward.8} parent=27 // pred_region
        %p377 = scmp.lt.s32.totalorder %s26, %s24
        %s378 = scalar_select %p377, %s26, %s24
        %p379 = scmp.lt.s32.totalorder %s23, 1
        %s380 = scalar_select %p379, %s23, 1
        %p381 = scmp.lt.s32.totalorder %s25, 3
        %s382 = scalar_select %p381, %s25, 3
        %p383 = scmp.lt.s32.totalorder %s378, 0
        %s384 = scalar_select %p383, %s378, 0
        %s385 = sadd.s32 %s384, %s382
        %s386 = smul.addr %s380, 4
        %s387 = sadd.s32 %s385, %s386
        %s388 = sadd.s32 %s387, 16
        %s389 = smul.addr %s388, 4
        %s390 = scalar_lea.vmem %s2, %s389
        %p391 = scmp.lt.s32.totalorder %s26, %s24
        %s392 = scalar_select %p391, %s26, %s24
      $region40: #{lm_backbone_forward.8} parent=27 // pred_fallthru
        _
      // Predicated region
      $region41: #{lm_backbone_forward.8} parent=27 // pred_check
        %p393 = pneg %p162
      $region42: #{lm_backbone_forward.8} parent=27 // pred_check_branch
        %395 = sbr.rel (%p393) target = $region44
      $region43: #{lm_backbone_forward.8} parent=27 // pred_region
        %p396 = scmp.lt.s32.totalorder %s23, 1
        %s397 = scalar_select %p396, %s23, 1
        %p398 = scmp.lt.s32.totalorder %s24, 0
        %s399 = scalar_select %p398, %s24, 0
        %s400 = sadd.s32 %s399, %s397
        %s401 = smul.addr %s400, 8
        %s402 = scalar_lea.vmem %s3, %s401
      $region44: #{lm_backbone_forward.8} parent=27 // pred_fallthru
        _
      // Predicated region
      $region45: #{lm_backbone_forward.8} parent=27 // pred_check
        %p403 = pneg %p188
      $region46: #{lm_backbone_forward.8} parent=27 // pred_check_branch
        %405 = sbr.rel (%p403) target = $region48
      $region47: #{lm_backbone_forward.8} parent=27 // pred_region
        %p406 = scmp.lt.s32.totalorder %s25, 3
        %s407 = scalar_select %p406, %s25, 3
        %s408 = smul.addr %s407, 4
        %s409 = scalar_lea.vmem %s4, %s408
      $region48: #{lm_backbone_forward.8} parent=27 // pred_fallthru
        _
    $region28: #{lm_backbone_forward.8} parent=5 // pred_fallthru
      _
    %p410 = scmp.le.s32.totalorder 1, %s16
    %p411 = scmp.lt.s32.totalorder %s16, 9
    %p412 = pnand %p410, %p411
    %p413 = pneg %p412
    // Predicated region
    $region49: #{lm_backbone_forward.8} parent=5 // pred_check
      _
    $region50: #{lm_backbone_forward.8} parent=5 // pred_check_branch
      %415 = sbr.rel (%p412) target = $region52
    $region51: #{lm_backbone_forward.8} parent=5 // pred_region
      %s416 = ssub.s32 %s16, 1
      %p417 = scmp.lt.s32.totalorder %s27, 1
      %s418 = scalar_select %p417, %s27, 1
      %p419 = scmp.lt.s32.totalorder %s29, 3
      %s420 = scalar_select %p419, %s29, 3
      %p421 = scmp.lt.s32.totalorder %s28, 0
      %s422 = scalar_select %p421, %s28, 0
      %s423 = sadd.s32 %s422, %s420
      %s424 = smul.addr %s418, 4
      %s425 = sadd.s32 %s423, %s424
      %s426 = smul.addr %s425, 4
      %s427 = scalar_lea.vmem %s0, %s426
      %p428 = pneg %p72
      %p429 = pneg %p69
      %p430 = scmp.lt.s32.totalorder %s30, %s28
      %s431 = scalar_select %p430, %s30, %s28
      %p432 = scmp.lt.s32.totalorder %s27, 1
      %s433 = scalar_select %p432, %s27, 1
      %p434 = scmp.lt.s32.totalorder %s29, 3
      %s435 = scalar_select %p434, %s29, 3
      %p436 = scmp.lt.s32.totalorder %s431, 0
      %s437 = scalar_select %p436, %s431, 0
      %s438 = sadd.s32 %s437, %s435
      %s439 = smul.addr %s433, 4
      %s440 = sadd.s32 %s438, %s439
      %s441 = sadd.s32 %s440, 8
      %s442 = smul.addr %s441, 4
      %s443 = scalar_lea.vmem %s1, %s442
      %p444 = pneg %p106
      %p445 = pneg %p103
      %p446 = scmp.lt.s32.totalorder %s30, %s28
      %s447 = scalar_select %p446, %s30, %s28
      %p448 = scmp.lt.s32.totalorder %s27, 1
      %s449 = scalar_select %p448, %s27, 1
      %p450 = scmp.lt.s32.totalorder %s29, 3
      %s451 = scalar_select %p450, %s29, 3
      %p452 = scmp.lt.s32.totalorder %s447, 0
      %s453 = scalar_select %p452, %s447, 0
      %s454 = sadd.s32 %s453, %s451
      %s455 = smul.addr %s449, 4
      %s456 = sadd.s32 %s454, %s455
      %s457 = sadd.s32 %s456, 16
      %s458 = smul.addr %s457, 4
      %s459 = scalar_lea.vmem %s2, %s458
      %p460 = pneg %p140
      %p461 = pneg %p137
      %p462 = scmp.lt.s32.totalorder %s27, 1
      %s463 = scalar_select %p462, %s27, 1
      %p464 = scmp.lt.s32.totalorder %s28, 0
      %s465 = scalar_select %p464, %s28, 0
      %s466 = sadd.s32 %s465, %s463
      %s467 = smul.addr %s466, 8
      %s468 = scalar_lea.vmem %s3, %s467
      %p469 = pneg %p168
      %p470 = pneg %p165
      %p471 = scmp.lt.s32.totalorder %s29, 3
      %s472 = scalar_select %p471, %s29, 3
      %s473 = smul.addr %s472, 4
      %s474 = scalar_lea.vmem %s4, %s473
      %p475 = pneg %p194
      %p476 = pneg %p191
      %p477 = pneg %p215
      %p478 = pneg %p212
      %p479 = pneg %p236
      %p480 = pneg %p233
      %p481 = pneg %p257
      %p482 = pneg %p254
      %p483 = pneg %p285
      %p484 = pneg %p282
      %p485 = scmp.lt.s32.totalorder %s27, 1
      %s486 = scalar_select %p485, %s27, 1
      %p487 = scmp.lt.s32.totalorder %s28, 0
      %s488 = scalar_select %p487, %s28, 0
      %s489 = sadd.s32 %s488, %s486
      %s490 = smul.addr %s489, 4
      %s491 = scalar_lea.vmem %s8, %s490
      %p492 = pneg %p313
      %p493 = pneg %p310
      %p494 = scmp.lt.s32.totalorder %s27, 1
      %s495 = scalar_select %p494, %s27, 1
      %p496 = scmp.lt.s32.totalorder %s28, 0
      %s497 = scalar_select %p496, %s28, 0
      %s498 = sadd.s32 %s497, %s495
      %s499 = smul.addr %s498, 8
      %s500 = scalar_lea.vmem %s9, %s499
      %p501 = scmp.lt.s32.totalorder %s27, 1
      %s502 = scalar_select %p501, %s27, 1
      %p503 = scmp.lt.s32.totalorder %s29, 3
      %s504 = scalar_select %p503, %s29, 3
      %p505 = scmp.lt.s32.totalorder %s28, 0
      %s506 = scalar_select %p505, %s28, 0
      %s507 = sadd.s32 %s506, %s504
      %s508 = smul.addr %s502, 4
      %s509 = sadd.s32 %s507, %s508
      %s510 = smul.addr %s509, 4
      %s511 = scalar_lea.vmem %s0, %s510
      %p512 = scmp.lt.s32.totalorder %s30, %s28
      %s513 = scalar_select %p512, %s30, %s28
      %p514 = scmp.lt.s32.totalorder %s27, 1
      %s515 = scalar_select %p514, %s27, 1
      %p516 = scmp.lt.s32.totalorder %s29, 3
      %s517 = scalar_select %p516, %s29, 3
      %p518 = scmp.lt.s32.totalorder %s513, 0
      %s519 = scalar_select %p518, %s513, 0
      %s520 = sadd.s32 %s519, %s517
      %s521 = smul.addr %s515, 4
      %s522 = sadd.s32 %s520, %s521
      %s523 = sadd.s32 %s522, 8
      %s524 = smul.addr %s523, 4
      %s525 = scalar_lea.vmem %s1, %s524
      %p526 = scmp.lt.s32.totalorder %s30, %s28
      %s527 = scalar_select %p526, %s30, %s28
      %p528 = scmp.lt.s32.totalorder %s30, %s28
      %s529 = scalar_select %p528, %s30, %s28
      %p530 = scmp.lt.s32.totalorder %s27, 1
      %s531 = scalar_select %p530, %s27, 1
      %p532 = scmp.lt.s32.totalorder %s29, 3
      %s533 = scalar_select %p532, %s29, 3
      %p534 = scmp.lt.s32.totalorder %s529, 0
      %s535 = scalar_select %p534, %s529, 0
      %s536 = sadd.s32 %s535, %s533
      %s537 = smul.addr %s531, 4
      %s538 = sadd.s32 %s536, %s537
      %s539 = sadd.s32 %s538, 16
      %s540 = smul.addr %s539, 4
      %s541 = scalar_lea.vmem %s2, %s540
      %p542 = scmp.lt.s32.totalorder %s30, %s28
      %s543 = scalar_select %p542, %s30, %s28
      %p544 = scmp.lt.s32.totalorder %s27, 1
      %s545 = scalar_select %p544, %s27, 1
      %p546 = scmp.lt.s32.totalorder %s28, 0
      %s547 = scalar_select %p546, %s28, 0
      %s548 = sadd.s32 %s547, %s545
      %s549 = smul.addr %s548, 8
      %s550 = scalar_lea.vmem %s3, %s549
      %p551 = scmp.lt.s32.totalorder %s29, 3
      %s552 = scalar_select %p551, %s29, 3
      %s553 = smul.addr %s552, 4
      %s554 = scalar_lea.vmem %s4, %s553
      %p555 = scmp.lt.s32.totalorder %s27, 1
      %s556 = scalar_select %p555, %s27, 1
      %p557 = scmp.lt.s32.totalorder %s28, 0
      %s558 = scalar_select %p557, %s28, 0
      %s559 = sadd.s32 %s558, %s556
      %s560 = smul.addr %s559, 4
      %s561 = scalar_lea.vmem %s8, %s560
      %p562 = scmp.lt.s32.totalorder %s27, 1
      %s563 = scalar_select %p562, %s27, 1
      %p564 = scmp.lt.s32.totalorder %s28, 0
      %s565 = scalar_select %p564, %s28, 0
      %s566 = sadd.s32 %s565, %s563
      %s567 = smul.addr %s566, 8
      %s568 = scalar_lea.vmem %s9, %s567
      %p570 = scmp.eq.s32.totalorder %s29, 0
      %p571 = scmp.eq.s32.totalorder %s30, 0
      %p572 = pnand %p570, %p571
      %p573 = pneg %p572
      // Predicated region
      $region53: #{lm_backbone_forward.8} parent=51 // pred_check
        _
      $region54: #{lm_backbone_forward.8} parent=51 // pred_check_branch
        %575 = sbr.rel (%p572) target = $region56
      $region55: #{lm_backbone_forward.8} parent=51 // pred_region
        %vm576 = vcmask 261120
        %577 = vst.msk [vmem:[#allocation5] sm:$0xff] %vm576, 0.0
      $region56: #{lm_backbone_forward.8} parent=51 // pred_fallthru
        _
      // Predicated region
      $region57: #{lm_backbone_forward.8} parent=51 // pred_check
        %p578 = pneg %p571
      $region58: #{lm_backbone_forward.8} parent=51 // pred_check_branch
        %580 = sbr.rel (%p578) target = $region60
      $region59: #{lm_backbone_forward.8} parent=51 // pred_region
        %vm581 = vcmask 7168
        %582 = vst.msk [vmem:[#allocation2] sm:$0xff] %vm581, -1e+30
        %583 = vst.msk [vmem:[#allocation3] sm:$0xff] %vm581, 0.0
        %vm584 = vcmask 64512
        %585 = vst.msk [vmem:[#allocation4] sm:$0xff] %vm584, 0.0
      $region60: #{lm_backbone_forward.8} parent=51 // pred_fallthru
        _
      %s586 = smul.u32 %s30, 8
      %s587 = smul.u32 %s28, 8
      %s588 = sadd.s32 %s587, 7
      %p589 = scmp.le.s32.totalorder %s586, %s588
      // Predicated region
      $region61: #{lm_backbone_forward.8} parent=51 // pred_check
        %p590 = pneg %p589
      $region62: #{lm_backbone_forward.8} parent=51 // pred_check_branch
        %592 = sbr.rel (%p590) target = $region64
      $region63: #{lm_backbone_forward.8} parent=51 // pred_region
        %v593 = vld [vmem:[%s511] sm:$0xf]
        %v594 = vld [vmem:[%s525] sm:$0xf]
        %v595 = vld [vmem:[%s541] sm:$0xf]
        %vm596 = vcmask 64512
        %v598 = vsel %vm596, %v593, 0
        %v601 = vsel %vm596, %v594, 0
        %603 = vmatprep.subr.bf16.mxu0 0
        %604 = vmatpush1.bf16.xpose.msra.mxu0 %v601
        %605 = vmatprep.subr.bf16.mxu0 0
        %606 = vmatpush1.bf16.xpose.msra.mxu0 0
        %607 = vmatprep.subr.bf16.mxu0 0
        %608 = vmatpush1.bf16.xpose.msra.mxu0 0
        %609 = vmatprep.subr.bf16.mxu0 0
        %610 = vmatpush1.bf16.xpose.msra.mxu0 0
        %611 = vmatprep.subr.bf16.mxu0 0
        %612 = vmatpush1.bf16.xpose.msra.mxu0 0
        %613 = vmatprep.subr.bf16.mxu0 0
        %614 = vmatpush1.bf16.xpose.msra.mxu0 0
        %615 = vmatprep.subr.bf16.mxu0 0
        %616 = vmatpush1.bf16.xpose.msra.mxu0 0
        %617 = vmatprep.subr.bf16.mxu0 0
        %618 = vmatpush1.bf16.xpose.msra.mxu0 0
        %619 = vmatprep.subr.bf16.mxu0 0
        %620 = vmatpush1.bf16.xpose.msra.mxu0 0
        %621 = vmatprep.subr.bf16.mxu0 0
        %622 = vmatpush1.bf16.xpose.msra.mxu0 0
        %623 = vmatprep.subr.bf16.mxu0 0
        %624 = vmatpush1.bf16.xpose.msra.mxu0 0
        %625 = vmatprep.subr.bf16.mxu0 0
        %626 = vmatpush1.bf16.xpose.msra.mxu0 0
        %627 = vmatprep.subr.bf16.mxu0 0
        %628 = vmatpush1.bf16.xpose.msra.mxu0 0
        %629 = vmatprep.subr.bf16.mxu0 0
        %630 = vmatpush1.bf16.xpose.msra.mxu0 0
        %631 = vmatprep.subr.bf16.mxu0 0
        %632 = vmatpush1.bf16.xpose.msra.mxu0 0
        %633 = vmatprep.subr.bf16.mxu0 0
        %634 = vmatpush1.bf16.xpose.msra.mxu0 0
        %635 = vmatprep.mubr.bf16.mxu0 0
        %636 = vmatmul.mubr.bf16.gmra.mrb[0].mxu0 %v598
        %v637 = vpop.f32.mrb[0].mxu0
        %v638 = vadd.f32 0.0, %v637
        %v639 = vpop.f32.mrb[0].mxu0
        %v640 = vpop.f32.mrb[0].mxu0
        %v641 = vpop.f32.mrb[0].mxu0
        %642 = vdwg.mxu0
        %v643 = vmul.f32 %v638, 0.35355338
        %v644 = vlaneseq
        %v645 = vshrl.u32 %v644, 7
        %v646 = vstv %s587
        %v647 = vadd.s32 %v646, %v645
        %v648 = vlaneseq
        %v649 = vand.u32 %v648, 127
        %v650 = vstv %s586
        %v651 = vadd.s32 %v650, %v649
        %vm652 = vcmp.le.s32.totalorder %v651, %v647
        %v653 = vsel %vm652, %v643, -1e+30
        %v654 = vld [vmem:[#allocation2] sm:$0xff]
        %v655 = vsel %vm596, %v653, -inf
        %656 = vmax.xlane.f32.xlu0 %v655
        %v657 = vpop.xlane.xlu0 %656
        %v658 = vmax.f32 %v654, %v657
        %v659 = vsub.f32 %v654, %v658
        %v660 = vmul.f32 %v659, 1.442695
        %v661 = vpow.pop %v660
        %663 = vset.pattern.permute.xlu0 0
        %664 = vperm.xlu0 %663, %v658
        %v665 = vpop.permute.xlu0 %664
        %v667 = vsub.f32 %v653, %v665
        %v668 = vmul.f32 %v667, 1.442695
        %v669 = vpow.pop %v668
        %v670 = vld [vmem:[#allocation3] sm:$0xff]
        %v671 = vmul.f32 %v661, %v670
        %v672 = vsel %vm596, %v669, 0.0
        %673 = vadd.xlane.f32.xlu0 %v672
        %v674 = vpop.xlane.xlu0 %673
        %v675 = vadd.f32 %v671, %v674
        %vm676 = vcmask 7168
        %677 = vst.msk [vmem:[#allocation3] sm:$0xff] %vm676, %v675
        %v678 = vld [vmem:[#allocation4] sm:$0xff]
        %680 = vset.pattern.permute.xlu0 0
        %681 = vperm.xlu0 %680, %v661
        %v682 = vpop.permute.xlu0 %681
        %v684 = vmul.f32 %v682, %v678
        %v685 = vpack.c.bf16 %v669, %v669
        %v687 = vsel %vm596, %v685, 0
        %vm689 = vcmask 1043456
        %v691 = vsel %vm689, %v595, 0
        %693 = vmatprep.subr.bf16.mxu0 0
        %694 = vmatpush1.bf16.msra.mxu0 %v691
        %695 = vmatprep.subr.bf16.mxu0 0
        %696 = vmatpush1.bf16.msra.mxu0 0
        %697 = vmatprep.subr.bf16.mxu0 0
        %698 = vmatpush1.bf16.msra.mxu0 0
        %699 = vmatprep.subr.bf16.mxu0 0
        %700 = vmatpush1.bf16.msra.mxu0 0
        %701 = vmatprep.subr.bf16.mxu0 0
        %702 = vmatpush1.bf16.msra.mxu0 0
        %703 = vmatprep.subr.bf16.mxu0 0
        %704 = vmatpush1.bf16.msra.mxu0 0
        %705 = vmatprep.subr.bf16.mxu0 0
        %706 = vmatpush1.bf16.msra.mxu0 0
        %707 = vmatprep.subr.bf16.mxu0 0
        %708 = vmatpush1.bf16.msra.mxu0 0
        %709 = vmatprep.subr.bf16.mxu0 0
        %710 = vmatpush1.bf16.msra.mxu0 0
        %711 = vmatprep.subr.bf16.mxu0 0
        %712 = vmatpush1.bf16.msra.mxu0 0
        %713 = vmatprep.subr.bf16.mxu0 0
        %714 = vmatpush1.bf16.msra.mxu0 0
        %715 = vmatprep.subr.bf16.mxu0 0
        %716 = vmatpush1.bf16.msra.mxu0 0
        %717 = vmatprep.subr.bf16.mxu0 0
        %718 = vmatpush1.bf16.msra.mxu0 0
        %719 = vmatprep.subr.bf16.mxu0 0
        %720 = vmatpush1.bf16.msra.mxu0 0
        %721 = vmatprep.subr.bf16.mxu0 0
        %722 = vmatpush1.bf16.msra.mxu0 0
        %723 = vmatprep.subr.bf16.mxu0 0
        %724 = vmatpush1.bf16.msra.mxu0 0
        %725 = vmatprep.mubr.bf16.mxu0 0
        %726 = vmatmul.mubr.bf16.gmra.mrb[0].mxu0 %v687
        %v727 = vpop.f32.mrb[0].mxu0
        %v728 = vadd.f32 0.0, %v727
        %v729 = vpop.f32.mrb[0].mxu0
        %v730 = vpop.f32.mrb[0].mxu0
        %v731 = vpop.f32.mrb[0].mxu0
        %732 = vdwg.mxu0
        %v733 = vadd.f32 %v684, %v728
        %734 = vst.msk [vmem:[#allocation4] sm:$0xff] %vm596, %v733
        %735 = vst.msk [vmem:[#allocation2] sm:$0xff] %vm676, %v658
      $region64: #{lm_backbone_forward.8} parent=51 // pred_fallthru
        _
      // Predicated region
      $region65: #{lm_backbone_forward.8} parent=51 // pred_check
        %p736 = pneg %p571
      $region66: #{lm_backbone_forward.8} parent=51 // pred_check_branch
        %738 = sbr.rel (%p736) target = $region68
      $region67: #{lm_backbone_forward.8} parent=51 // pred_region
        %v739 = vld [vmem:[#allocation3] sm:$0xff]
        %v740 = vrcp.pop %v739
        %v741 = vld [vmem:[#allocation4] sm:$0xff]
        %743 = vset.pattern.permute.xlu0 0
        %744 = vperm.xlu0 %743, %v740
        %v745 = vpop.permute.xlu0 %744
        %v747 = vmul.f32 %v741, %v745
        %v748 = vpack.c.bf16 %v747, %v747
        %v749 = vld [vmem:[#allocation5] sm:$0xff]
        %v750 = vld [vmem:[%s554] sm:$0xf]
        %vm751 = vcmask 64512
        %v753 = vsel %vm751, %v748, 0
        %vm755 = vcmask 1043456
        %v757 = vsel %vm755, %v750, 0
        %759 = vmatprep.subr.bf16.mxu0 0
        %760 = vmatpush1.bf16.msra.mxu0 %v757
        %761 = vmatprep.subr.bf16.mxu0 0
        %762 = vmatpush1.bf16.msra.mxu0 0
        %763 = vmatprep.subr.bf16.mxu0 0
        %764 = vmatpush1.bf16.msra.mxu0 0
        %765 = vmatprep.subr.bf16.mxu0 0
        %766 = vmatpush1.bf16.msra.mxu0 0
        %767 = vmatprep.subr.bf16.mxu0 0
        %768 = vmatpush1.bf16.msra.mxu0 0
        %769 = vmatprep.subr.bf16.mxu0 0
        %770 = vmatpush1.bf16.msra.mxu0 0
        %771 = vmatprep.subr.bf16.mxu0 0
        %772 = vmatpush1.bf16.msra.mxu0 0
        %773 = vmatprep.subr.bf16.mxu0 0
        %774 = vmatpush1.bf16.msra.mxu0 0
        %775 = vmatprep.subr.bf16.mxu0 0
        %776 = vmatpush1.bf16.msra.mxu0 0
        %777 = vmatprep.subr.bf16.mxu0 0
        %778 = vmatpush1.bf16.msra.mxu0 0
        %779 = vmatprep.subr.bf16.mxu0 0
        %780 = vmatpush1.bf16.msra.mxu0 0
        %781 = vmatprep.subr.bf16.mxu0 0
        %782 = vmatpush1.bf16.msra.mxu0 0
        %783 = vmatprep.subr.bf16.mxu0 0
        %784 = vmatpush1.bf16.msra.mxu0 0
        %785 = vmatprep.subr.bf16.mxu0 0
        %786 = vmatpush1.bf16.msra.mxu0 0
        %787 = vmatprep.subr.bf16.mxu0 0
        %788 = vmatpush1.bf16.msra.mxu0 0
        %789 = vmatprep.subr.bf16.mxu0 0
        %790 = vmatpush1.bf16.msra.mxu0 0
        %791 = vmatprep.mubr.bf16.mxu0 0
        %792 = vmatmul.mubr.bf16.gmra.mrb[0].mxu0 %v753
        %v793 = vpop.f32.mrb[0].mxu0
        %v794 = vadd.f32 0.0, %v793
        %v795 = vpop.f32.mrb[0].mxu0
        %v796 = vpop.f32.mrb[0].mxu0
        %v797 = vpop.f32.mrb[0].mxu0
        %798 = vdwg.mxu0
        %v799 = vadd.f32 %v749, %v794
        %vm800 = vcmask 261120
        %801 = vst.msk [vmem:[#allocation5] sm:$0xff] %vm800, %v799
      $region68: #{lm_backbone_forward.8} parent=51 // pred_fallthru
        _
      %p802 = scmp.eq.s32.totalorder %s29, 3
      %p803 = pnand %p802, %p571
      %p804 = pneg %p803
      // Predicated region
      $region69: #{lm_backbone_forward.8} parent=51 // pred_check
        _
      $region70: #{lm_backbone_forward.8} parent=51 // pred_check_branch
        %806 = sbr.rel (%p803) target = $region72
      $region71: #{lm_backbone_forward.8} parent=51 // pred_region
        %v807 = vld [vmem:[#allocation5] sm:$0xff]
        %v808 = vld [vmem:[%s5] sm:$0x1]
        %v810 = vlaneseq
        %v811 = vshrl.u32 %v810, 7
        %v812 = vsub.s32 0, %v811
        %v813 = vrot.slane %v808, %v812
        %v815 = vadd.f32 %v807, %v813
        %v816 = vld [vmem:[%s550] sm:$0xff]
        %v817 = vadd.f32 %v815, %v816
        %vm818 = vcmask 261120
        %819 = vst.msk [vmem:[%s568] sm:$0xff] %vm818, %v817
        %v820 = vld [vmem:[%s6] sm:$0x1]
        %v821 = vld [vmem:[%s7] sm:$0x1]
        %v822 = vsel %vm818, %v817, 0.0
        %823 = vadd.xlane.f32.xlu0 %v822
        %v824 = vpop.xlane.xlu0 %823
        %v825 = vrcp.pop 32.0
        %v826 = vmul.f32 %v824, %v825
        %v827 = vsub.f32 %v817, %v826
        %v828 = vmul.f32 %v827, %v827
        %v829 = vsel %vm818, %v828, 0.0
        %830 = vadd.xlane.f32.xlu0 %v829
        %v831 = vpop.xlane.xlu0 %830
        %v832 = vmul.f32 %v831, %v825
        %v833 = vadd.f32 %v832, 1e-05
        %v834 = vrsqrt.pop %v833
        %v835 = vmul.f32 %v827, %v834
        %v837 = vlaneseq
        %v838 = vshrl.u32 %v837, 7
        %v839 = vsub.s32 0, %v838
        %v840 = vrot.slane %v820, %v839
        %v842 = vmul.f32 %v835, %v840
        %v844 = vlaneseq
        %v845 = vshrl.u32 %v844, 7
        %v846 = vsub.s32 0, %v845
        %v847 = vrot.slane %v821, %v846
        %v849 = vadd.f32 %v842, %v847
        %v850 = vpack.c.bf16 %v849, %v849
        %vm851 = vcmask 257024
        %852 = vst.msk [vmem:[%s561] sm:$0xf] %vm851, %v850
      $region72: #{lm_backbone_forward.8} parent=51 // pred_fallthru
        _
      %p853 = scmp.lt.s32.totalorder %s27, 1
      %s854 = scalar_select %p853, %s27, 1
      %p855 = scmp.lt.s32.totalorder %s28, 0
      %s856 = scalar_select %p855, %s28, 0
      %s857 = sadd.s32 %s856, %s854
      %s858 = smul.addr %s857, 4
      %s859 = scalar_lea.vmem %s8, %s858
      %p860 = scmp.lt.s32.totalorder %s27, 1
      %s861 = scalar_select %p860, %s27, 1
      %p862 = scmp.lt.s32.totalorder %s28, 0
      %s863 = scalar_select %p862, %s28, 0
      %s864 = sadd.s32 %s863, %s861
      %s865 = smul.addr %s864, 8
      %s866 = scalar_lea.vmem %s9, %s865
      // Predicated region
      $region73: #{lm_backbone_forward.8} parent=51 // pred_check
        %p867 = pneg %p282
      $region74: #{lm_backbone_forward.8} parent=51 // pred_check_branch
        %869 = sbr.rel (%p867) target = $region76
      $region75: #{lm_backbone_forward.8} parent=51 // pred_region
        _
      $region76: #{lm_backbone_forward.8} parent=51 // pred_fallthru
        _
      // Predicated region
      $region77: #{lm_backbone_forward.8} parent=51 // pred_check
        %p870 = pneg %p310
      $region78: #{lm_backbone_forward.8} parent=51 // pred_check_branch
        %872 = sbr.rel (%p870) target = $region80
      $region79: #{lm_backbone_forward.8} parent=51 // pred_region
        _
      $region80: #{lm_backbone_forward.8} parent=51 // pred_fallthru
        _
    $region52: #{lm_backbone_forward.8} parent=5 // pred_fallthru
      _
    %p873 = scmp.le.s32.totalorder 2, %s16
    // Predicated region
    $region81: #{lm_backbone_forward.8} parent=5 // pred_check
      %p874 = pneg %p873
    $region82: #{lm_backbone_forward.8} parent=5 // pred_check_branch
      %876 = sbr.rel (%p874) target = $region84
    $region83: #{lm_backbone_forward.8} parent=5 // pred_region
      %s877 = ssub.s32 %s16, 2
      // Predicated region
      $region85: #{lm_backbone_forward.8} parent=83 // pred_check
        %p878 = pneg %p288
      $region86: #{lm_backbone_forward.8} parent=83 // pred_check_branch
        %880 = sbr.rel (%p878) target = $region88
      $region87: #{lm_backbone_forward.8} parent=83 // pred_region
        %p881 = scmp.lt.s32.totalorder %s31, 1
        %s882 = scalar_select %p881, %s31, 1
        %p883 = scmp.lt.s32.totalorder %s32, 0
        %s884 = scalar_select %p883, %s32, 0
        %s885 = sadd.s32 %s884, %s882
        %s886 = smul.addr %s885, 4
        %s887 = scalar_lea.vmem %s8, %s886
      $region88: #{lm_backbone_forward.8} parent=83 // pred_fallthru
        _
      // Predicated region
      $region89: #{lm_backbone_forward.8} parent=83 // pred_check
        %p888 = pneg %p316
      $region90: #{lm_backbone_forward.8} parent=83 // pred_check_branch
        %890 = sbr.rel (%p888) target = $region92
      $region91: #{lm_backbone_forward.8} parent=83 // pred_region
        %p891 = scmp.lt.s32.totalorder %s31, 1
        %s892 = scalar_select %p891, %s31, 1
        %p893 = scmp.lt.s32.totalorder %s32, 0
        %s894 = scalar_select %p893, %s32, 0
        %s895 = sadd.s32 %s894, %s892
        %s896 = smul.addr %s895, 8
        %s897 = scalar_lea.vmem %s9, %s896
      $region92: #{lm_backbone_forward.8} parent=83 // pred_fallthru
        _
    $region84: #{lm_backbone_forward.8} parent=5 // pred_fallthru
      _
  $region6: #{lm_backbone_forward.8} parent=0 // loop_footer
    %s20 = sadd.s32 1, %s16
  $region7: #{lm_backbone_forward.8} parent=0 // loop_footer_branch
    %15 = sbr.rel target = $region3
  $region8: #{lm_backbone_forward.8} parent=0 // loop_exit
    _

// kernel: lm_backbone_forward.9
$region0: #{lm_backbone_forward.9}
  #allocation0 [shape = 'u32[]', space=smem, size = 0x4, offset = 0x4, fixed_abs, tag = 'smem constant byte address 0x4 - core index']
  #allocation1 [shape = 'u32[144,128]{1,0:T(1,128)}', space=vmem, size = 0x12000, scoped, tag = 'internal scratch']
  #allocation2 [shape = 'f32[16,32]{1,0:T(8,128)}', space=vmem, size = 0x2000, scoped, tag = 'scratch operand']
  %s0 = inlined_call_operand.vmem [shape: bf16[16,32], index: 0, kind: input, shape index: {}]
  %s1 = inlined_call_operand.vmem [shape: bf16[32,64], index: 1, kind: input, shape index: {}]
  %s2 = inlined_call_operand.vmem [shape: f32[1,64], index: 2, kind: input, shape index: {}]
  %s3 = inlined_call_operand.vmem [shape: bf16[64,32], index: 3, kind: input, shape index: {}]
  %s4 = inlined_call_operand.vmem [shape: f32[1,32], index: 4, kind: input, shape index: {}]
  %s5 = inlined_call_operand.vmem [shape: f32[16,32], index: 5, kind: output, shape index: {}]
  %s6 = sld [smem:[#allocation0]]
  $region38: #{lm_backbone_forward.9} parent=0
    _
  %s8 = ssub.s32 1, %s6
  %s9 = scalar_select 0, %s8, %s6
  // Predicated region
  $region2: #{lm_backbone_forward.9} parent=0 // pred_check
    _
  $region3: #{lm_backbone_forward.9} parent=0 // pred_check_branch
    %11 = sbr.rel (0) target = $region5
  $region4: #{lm_backbone_forward.9} parent=0 // pred_region
    _
  $region5: #{lm_backbone_forward.9} parent=0 // pred_fallthru
    _
  // Predicated region
  $region6: #{lm_backbone_forward.9} parent=0 // pred_check
    _
  $region7: #{lm_backbone_forward.9} parent=0 // pred_check_branch
    %13 = sbr.rel (0) target = $region9
  $region8: #{lm_backbone_forward.9} parent=0 // pred_region
    _
  $region9: #{lm_backbone_forward.9} parent=0 // pred_fallthru
    _
  // Predicated region
  $region10: #{lm_backbone_forward.9} parent=0 // pred_check
    _
  $region11: #{lm_backbone_forward.9} parent=0 // pred_check_branch
    %15 = sbr.rel (0) target = $region13
  $region12: #{lm_backbone_forward.9} parent=0 // pred_region
    _
  $region13: #{lm_backbone_forward.9} parent=0 // pred_fallthru
    _
  // Predicated region
  $region14: #{lm_backbone_forward.9} parent=0 // pred_check
    _
  $region15: #{lm_backbone_forward.9} parent=0 // pred_check_branch
    %17 = sbr.rel (0) target = $region17
  $region16: #{lm_backbone_forward.9} parent=0 // pred_region
    _
  $region17: #{lm_backbone_forward.9} parent=0 // pred_fallthru
    _
  // Predicated region
  $region18: #{lm_backbone_forward.9} parent=0 // pred_check
    _
  $region19: #{lm_backbone_forward.9} parent=0 // pred_check_branch
    %19 = sbr.rel (0) target = $region21
  $region20: #{lm_backbone_forward.9} parent=0 // pred_region
    _
  $region21: #{lm_backbone_forward.9} parent=0 // pred_fallthru
    _
  %p21 = scmp.eq.s32.totalorder 0, 0
  // Predicated region
  $region22: #{lm_backbone_forward.9} parent=0 // pred_check
    %p22 = pneg %p21
  $region23: #{lm_backbone_forward.9} parent=0 // pred_check_branch
    %24 = sbr.rel (%p22) target = $region25
  $region24: #{lm_backbone_forward.9} parent=0 // pred_region
    %vm25 = vcmask 261120
    %26 = vst.msk [vmem:[#allocation2] sm:$0xff] %vm25, 0.0
    %27 = vst.msk [vmem:[#allocation2 + $0x8] sm:$0xff] %vm25, 0.0
  $region25: #{lm_backbone_forward.9} parent=0 // pred_fallthru
    _
  %v28 = vld [vmem:[%s0] sm:$0xf]
  %v29 = vld [vmem:[%s0 + $0x4] sm:$0xf]
  %v30 = vld [vmem:[%s1] sm:$0xf]
  %v31 = vld [vmem:[%s1 + $0x4] sm:$0xf]
  %v32 = vld [vmem:[%s1 + $0x8] sm:$0xf]
  %v33 = vld [vmem:[%s1 + $0xc] sm:$0xf]
  %v34 = vld [vmem:[%s2] sm:$0x1]
  %v36 = vlaneseq
  %v37 = vshrl.u32 %v36, 7
  %v38 = vsub.s32 0, %v37
  %v39 = vrot.slane %v34, %v38
  %v43 = vunpack.c.l.b16 %v28
  %v44 = vunpack.c.l.b16 %v29
  %v45 = vpack.c.b16 %v44, %v43
  %v50 = vunpack.c.l.b16 %v30
  %v51 = vunpack.c.l.b16 %v31
  %v52 = vunpack.c.l.b16 %v32
  %v53 = vunpack.c.l.b16 %v33
  %v54 = vpack.c.b16 %v51, %v50
  %v55 = vpack.c.b16 %v53, %v52
  %vm58 = vcmask 261120
  %v60 = vsel %vm58, %v45, 0
  %62 = vmatprep.subr.bf16.mxu0 0
  %63 = vmatpush1.bf16.msra.mxu0 %v54
  %64 = vmatprep.subr.bf16.mxu0 0
  %65 = vmatpush1.bf16.msra.mxu0 %v55
  %66 = vmatprep.subr.bf16.mxu0 0
  %67 = vmatpush1.bf16.msra.mxu0 0
  %68 = vmatprep.subr.bf16.mxu0 0
  %69 = vmatpush1.bf16.msra.mxu0 0
  %70 = vmatprep.subr.bf16.mxu0 0
  %71 = vmatpush1.bf16.msra.mxu0 0
  %72 = vmatprep.subr.bf16.mxu0 0
  %73 = vmatpush1.bf16.msra.mxu0 0
  %74 = vmatprep.subr.bf16.mxu0 0
  %75 = vmatpush1.bf16.msra.mxu0 0
  %76 = vmatprep.subr.bf16.mxu0 0
  %77 = vmatpush1.bf16.msra.mxu0 0
  %78 = vmatprep.subr.bf16.mxu0 0
  %79 = vmatpush1.bf16.msra.mxu0 0
  %80 = vmatprep.subr.bf16.mxu0 0
  %81 = vmatpush1.bf16.msra.mxu0 0
  %82 = vmatprep.subr.bf16.mxu0 0
  %83 = vmatpush1.bf16.msra.mxu0 0
  %84 = vmatprep.subr.bf16.mxu0 0
  %85 = vmatpush1.bf16.msra.mxu0 0
  %86 = vmatprep.subr.bf16.mxu0 0
  %87 = vmatpush1.bf16.msra.mxu0 0
  %88 = vmatprep.subr.bf16.mxu0 0
  %89 = vmatpush1.bf16.msra.mxu0 0
  %90 = vmatprep.subr.bf16.mxu0 0
  %91 = vmatpush1.bf16.msra.mxu0 0
  %92 = vmatprep.subr.bf16.mxu0 0
  %93 = vmatpush1.bf16.msra.mxu0 0
  %94 = vmatprep.mubr.bf16.mxu0 0
  %95 = vmatmul.mubr.bf16.gmra.mrb[0].mxu0 %v60
  %v96 = vpop.f32.mrb[0].mxu0
  %v97 = vadd.f32 %v39, %v96
  %v98 = vpop.f32.mrb[0].mxu0
  %v99 = vpop.f32.mrb[0].mxu0
  %v100 = vadd.f32 %v39, %v99
  %v101 = vpop.f32.mrb[0].mxu0
  %102 = vdwg.mxu0
  %v103 = vmul.f32 %v97, 0.5
  %v104 = vmul.f32 %v100, 0.5
  %v105 = vmul.f32 %v97, 0.044715
  %v106 = vmul.f32 %v100, 0.044715
  %v107 = vmul.f32 %v105, %v97
  %v108 = vmul.f32 %v106, %v100
  %v109 = vmul.f32 %v107, %v97
  %v110 = vmul.f32 %v108, %v100
  %v111 = vadd.f32 %v97, %v109
  %v112 = vadd.f32 %v100, %v110
  %v113 = vmul.f32 %v111, 0.7978846
  %v114 = vmul.f32 %v112, 0.7978846
  %v115 = vtanh.pop %v113
  %v116 = vtanh.pop %v114
  %v117 = vadd.f32 %v115, 1.0
  %v118 = vadd.f32 %v116, 1.0
  %v119 = vmul.f32 %v103, %v117
  %v120 = vmul.f32 %v104, %v118
  %v121 = vpack.c.bf16 %v120, %v119
  %v122 = vld [vmem:[#allocation2] sm:$0xff]
  %v123 = vld [vmem:[#allocation2 + $0x8] sm:$0xff]
  %v124 = vld [vmem:[%s3] sm:$0xf]
  %v125 = vld [vmem:[%s3 + $0x4] sm:$0xf]
  %v126 = vld [vmem:[%s3 + $0x8] sm:$0xf]
  %v127 = vld [vmem:[%s3 + $0xc] sm:$0xf]
  %v128 = vld [vmem:[%s3 + $0x10] sm:$0xf]
  %v129 = vld [vmem:[%s3 + $0x14] sm:$0xf]
  %v130 = vld [vmem:[%s3 + $0x18] sm:$0xf]
  %v131 = vld [vmem:[%s3 + $0x1c] sm:$0xf]
  %v140 = vunpack.c.l.b16 %v124
  %v141 = vunpack.c.l.b16 %v125
  %v142 = vunpack.c.l.b16 %v126
  %v143 = vunpack.c.l.b16 %v127
  %v144 = vunpack.c.l.b16 %v128
  %v145 = vunpack.c.l.b16 %v129
  %v146 = vunpack.c.l.b16 %v130
  %v147 = vunpack.c.l.b16 %v131
  %v148 = vpack.c.b16 %v141, %v140
  %v149 = vpack.c.b16 %v143, %v142
  %v150 = vpack.c.b16 %v145, %v144
  %v151 = vpack.c.b16 %v147, %v146
  %vm156 = vcmask 523264
  %v158 = vsel %vm156, %v121, 0
  %160 = vmatprep.subr.bf16.mxu0 0
  %161 = vmatpush1.bf16.msra.mxu0 %v148
  %162 = vmatprep.subr.bf16.mxu0 0
  %163 = vmatpush1.bf16.msra.mxu0 %v149
  %164 = vmatprep.subr.bf16.mxu0 0
  %165 = vmatpush1.bf16.msra.mxu0 %v150
  %166 = vmatprep.subr.bf16.mxu0 0
  %167 = vmatpush1.bf16.msra.mxu0 %v151
  %168 = vmatprep.subr.bf16.mxu0 0
  %169 = vmatpush1.bf16.msra.mxu0 0
  %170 = vmatprep.subr.bf16.mxu0 0
  %171 = vmatpush1.bf16.msra.mxu0 0
  %172 = vmatprep.subr.bf16.mxu0 0
  %173 = vmatpush1.bf16.msra.mxu0 0
  %174 = vmatprep.subr.bf16.mxu0 0
  %175 = vmatpush1.bf16.msra.mxu0 0
  %176 = vmatprep.subr.bf16.mxu0 0
  %177 = vmatpush1.bf16.msra.mxu0 0
  %178 = vmatprep.subr.bf16.mxu0 0
  %179 = vmatpush1.bf16.msra.mxu0 0
  %180 = vmatprep.subr.bf16.mxu0 0
  %181 = vmatpush1.bf16.msra.mxu0 0
  %182 = vmatprep.subr.bf16.mxu0 0
  %183 = vmatpush1.bf16.msra.mxu0 0
  %184 = vmatprep.subr.bf16.mxu0 0
  %185 = vmatpush1.bf16.msra.mxu0 0
  %186 = vmatprep.subr.bf16.mxu0 0
  %187 = vmatpush1.bf16.msra.mxu0 0
  %188 = vmatprep.subr.bf16.mxu0 0
  %189 = vmatpush1.bf16.msra.mxu0 0
  %190 = vmatprep.subr.bf16.mxu0 0
  %191 = vmatpush1.bf16.msra.mxu0 0
  %192 = vmatprep.mubr.bf16.mxu0 0
  %193 = vmatmul.mubr.bf16.gmra.mrb[0].mxu0 %v158
  %v194 = vpop.f32.mrb[0].mxu0
  %v195 = vadd.f32 0.0, %v194
  %v196 = vpop.f32.mrb[0].mxu0
  %v197 = vpop.f32.mrb[0].mxu0
  %v198 = vadd.f32 0.0, %v197
  %v199 = vpop.f32.mrb[0].mxu0
  %200 = vdwg.mxu0
  %v201 = vadd.f32 %v122, %v195
  %v202 = vadd.f32 %v123, %v198
  %203 = vst.msk [vmem:[#allocation2] sm:$0xff] %vm58, %v201
  %204 = vst.msk [vmem:[#allocation2 + $0x8] sm:$0xff] %vm58, %v202
  // Predicated region
  $region26: #{lm_backbone_forward.9} parent=0 // pred_check
    %p205 = pneg %p21
  $region27: #{lm_backbone_forward.9} parent=0 // pred_check_branch
    %207 = sbr.rel (%p205) target = $region29
  $region28: #{lm_backbone_forward.9} parent=0 // pred_region
    %v208 = vld [vmem:[#allocation2] sm:$0xff]
    %v209 = vld [vmem:[#allocation2 + $0x8] sm:$0xff]
    %v210 = vld [vmem:[%s4] sm:$0x1]
    %v212 = vlaneseq
    %v213 = vshrl.u32 %v212, 7
    %v214 = vsub.s32 0, %v213
    %v215 = vrot.slane %v210, %v214
    %v217 = vadd.f32 %v208, %v215
    %v218 = vadd.f32 %v209, %v215
    %219 = vst.msk [vmem:[%s5] sm:$0xff] %vm58, %v217
    %220 = vst.msk [vmem:[%s5 + $0x8] sm:$0xff] %vm58, %v218
  $region29: #{lm_backbone_forward.9} parent=0 // pred_fallthru
    _
  // Predicated region
  $region30: #{lm_backbone_forward.9} parent=0 // pred_check
    _
  $region31: #{lm_backbone_forward.9} parent=0 // pred_check_branch
    %222 = sbr.rel (0) target = $region33
  $region32: #{lm_backbone_forward.9} parent=0 // pred_region
    _
  $region33: #{lm_backbone_forward.9} parent=0 // pred_fallthru
    _
  // Predicated region
  $region34: #{lm_backbone_forward.9} parent=0 // pred_check
    _
  $region35: #{lm_backbone_forward.9} parent=0 // pred_check_branch
    %224 = sbr.rel (0) target = $region37
  $region36: #{lm_backbone_forward.9} parent=0 // pred_region
    _
  $region37: #{lm_backbone_forward.9} parent=0 // pred_fallthru
    _

// kernel: lm_backbone_forward.13
$region0: #{lm_backbone_forward.13}
  #allocation0 [shape = 'u32[]', space=smem, size = 0x4, offset = 0x4, fixed_abs, tag = 'smem constant byte address 0x4 - core index']
  #allocation1 [shape = 'u32[144,128]{1,0:T(1,128)}', space=vmem, size = 0x12000, scoped, tag = 'internal scratch']
  %s0 = inlined_call_operand.vmem [shape: f32[16,32], index: 0, kind: input, shape index: {}]
  %s1 = inlined_call_operand.vmem [shape: f32[16,32], index: 1, kind: input, shape index: {}]
  %s2 = inlined_call_operand.vmem [shape: f32[1,32], index: 2, kind: input, shape index: {}]
  %s3 = inlined_call_operand.vmem [shape: f32[1,32], index: 3, kind: input, shape index: {}]
  %s4 = inlined_call_operand.hbm [shape: f32[16,32], index: 4, kind: output, shape index: {}]
  %s5 = sld [smem:[#allocation0]]
  $region26: #{lm_backbone_forward.13} parent=0
    _
  %s7 = ssub.s32 1, %s5
  %s8 = scalar_select 0, %s7, %s5
  $region1: #{lm_backbone_forward.13} parent=0
    #allocation2 [shape = 'u8[8192]{0}', space=vmem, size = 0x2000, scoped, tag = 'output window, operand 0, single buffered']
    #allocation3 [shape = 's32[1]{0}', space=sflag, size = 0x4, scoped, tag = 'scoped memory for lm_backbone_forward.13']
    %9 = vsyncpa [#allocation3], 0
    // Predicated region
    $region2: #{lm_backbone_forward.13} parent=1 // pred_check
      _
    $region3: #{lm_backbone_forward.13} parent=1 // pred_check_branch
      %11 = sbr.rel (0) target = $region5
    $region4: #{lm_backbone_forward.13} parent=1 // pred_region
      _
    $region5: #{lm_backbone_forward.13} parent=1 // pred_fallthru
      _
    // Predicated region
    $region6: #{lm_backbone_forward.13} parent=1 // pred_check
      _
    $region7: #{lm_backbone_forward.13} parent=1 // pred_check_branch
      %13 = sbr.rel (0) target = $region9
    $region8: #{lm_backbone_forward.13} parent=1 // pred_region
      _
    $region9: #{lm_backbone_forward.13} parent=1 // pred_fallthru
      _
    // Predicated region
    $region10: #{lm_backbone_forward.13} parent=1 // pred_check
      _
    $region11: #{lm_backbone_forward.13} parent=1 // pred_check_branch
      %15 = sbr.rel (0) target = $region13
    $region12: #{lm_backbone_forward.13} parent=1 // pred_region
      _
    $region13: #{lm_backbone_forward.13} parent=1 // pred_fallthru
      _
    // Predicated region
    $region14: #{lm_backbone_forward.13} parent=1 // pred_check
      _
    $region15: #{lm_backbone_forward.13} parent=1 // pred_check_branch
      %17 = sbr.rel (0) target = $region17
    $region16: #{lm_backbone_forward.13} parent=1 // pred_region
      _
    $region17: #{lm_backbone_forward.13} parent=1 // pred_fallthru
      _
    %v18 = vld [vmem:[%s0] sm:$0xff]
    %v19 = vld [vmem:[%s0 + $0x8] sm:$0xff]
    %v20 = vld [vmem:[%s1] sm:$0xff]
    %v21 = vld [vmem:[%s1 + $0x8] sm:$0xff]
    %v22 = vadd.f32 %v18, %v20
    %v23 = vadd.f32 %v19, %v21
    %v24 = vld [vmem:[%s2] sm:$0x1]
    %v25 = vld [vmem:[%s3] sm:$0x1]
    %vm26 = vcmask 261120
    %v27 = vsel %vm26, %v22, 0.0
    %28 = vadd.xlane.f32.xlu0 %v27
    %v29 = vpop.xlane.xlu0 %28
    %v30 = vsel %vm26, %v23, 0.0
    %31 = vadd.xlane.f32.xlu0 %v30
    %v32 = vpop.xlane.xlu0 %31
    %v33 = vrcp.pop 32.0
    %v34 = vmul.f32 %v29, %v33
    %v35 = vmul.f32 %v32, %v33
    %v36 = vsub.f32 %v22, %v34
    %v37 = vsub.f32 %v23, %v35
    %v38 = vmul.f32 %v36, %v36
    %v39 = vmul.f32 %v37, %v37
    %v40 = vsel %vm26, %v38, 0.0
    %41 = vadd.xlane.f32.xlu0 %v40
    %v42 = vpop.xlane.xlu0 %41
    %v43 = vsel %vm26, %v39, 0.0
    %44 = vadd.xlane.f32.xlu0 %v43
    %v45 = vpop.xlane.xlu0 %44
    %v46 = vmul.f32 %v42, %v33
    %v47 = vmul.f32 %v45, %v33
    %v48 = vadd.f32 %v46, 1e-05
    %v49 = vadd.f32 %v47, 1e-05
    %v50 = vrsqrt.pop %v48
    %v51 = vrsqrt.pop %v49
    %v52 = vmul.f32 %v36, %v50
    %v53 = vmul.f32 %v37, %v51
    %v55 = vlaneseq
    %v56 = vshrl.u32 %v55, 7
    %v57 = vsub.s32 0, %v56
    %v58 = vrot.slane %v24, %v57
    %v60 = vmul.f32 %v52, %v58
    %v61 = vmul.f32 %v53, %v58
    %v63 = vlaneseq
    %v64 = vshrl.u32 %v63, 7
    %v65 = vsub.s32 0, %v64
    %v66 = vrot.slane %v25, %v65
    %v68 = vadd.f32 %v60, %v66
    %v69 = vadd.f32 %v61, %v66
    %70 = vst.msk [vmem:[#allocation2] sm:$0xff] %vm26, %v68
    %71 = vst.msk [vmem:[#allocation2 + $0x8] sm:$0xff] %vm26, %v69
    // Predicated region
    $region18: #{lm_backbone_forward.13} parent=1 // pred_check
      _
    $region19: #{lm_backbone_forward.13} parent=1 // pred_check_branch
      %73 = sbr.rel (0) target = $region21
    $region20: #{lm_backbone_forward.13} parent=1 // pred_region
      %s75 = ssub.s32 256, 256
      %76 = vsyncadd [#allocation3], %s75
      %s77 = sshll.u32 [#allocation2], 4
      %s78 = int_to_ptr.vmem [resolvable:$true] %s77
      %83 = dma.vmem_to_hbm [thread:$0]  %s78, 256, %s4, [#allocation3], 128, 128, 8
    $region21: #{lm_backbone_forward.13} parent=1 // pred_fallthru
      _
    // Predicated region
    $region22: #{lm_backbone_forward.13} parent=1 // pred_check
      _
    $region23: #{lm_backbone_forward.13} parent=1 // pred_check_branch
      %85 = sbr.rel (0) target = $region25
    $region24: #{lm_backbone_forward.13} parent=1 // pred_region
      %86 = dma.done [#allocation3], 256
    $region25: #{lm_backbone_forward.13} parent=1 // pred_fallthru
      _
    %87 = vsyncpa [#allocation3], 1

</llo_original>
